<compile_context>
chip_gen: v6e
topology: v6e:2x2x1
jax: 0.10.0
libtpu: 0.0.40
codegen_flags: <defaults>
</compile_context>

<pallas_src>
import functools
import math

import jax
import jax.numpy as jnp
from jax.experimental import pallas as pl
from jax.experimental.pallas import tpu as pltpu


# ----------------------------- configuration -------------------------------
DIM = 32          # embedding dim
HEADS = 2         # number of attention heads
DIM_HEAD = 16     # per-head dim
INNER = HEADS * DIM_HEAD          # 32
SEQ_LS = [4, 4]                   # per-modality sequence lengths
N = sum(SEQ_LS)                   # total sequence length = 8
SCALE = DIM_HEAD ** (-0.5)
LN_EPS = 1e-5                     # PyTorch nn.LayerNorm default


# ------------------------------- kernel ------------------------------------
def _mask_attn_kernel(x_ref, miss_ref, g_ref, b_ref, wqkv_ref, wout_ref,
                      bout_ref, o_ref, *, n, heads, dim_head):
    """One tile of TB batch elements per grid step.

    x_ref    : (TB*N, D)    flattened input tokens
    miss_ref : (TB, N)      1.0 where the token's modality is missing
    g_ref    : (1, D)       LayerNorm gamma
    b_ref    : (1, D)       LayerNorm beta
    wqkv_ref : (D, 3*inner) QKV projection weight (x @ W layout)
    wout_ref : (inner, D)   output projection weight
    bout_ref : (1, D)       output projection bias
    o_ref    : (TB*N, D)    output tokens
    """
    inner = heads * dim_head
    d = x_ref.shape[-1]
    tb = x_ref.shape[0] // n

    x = x_ref[...]                                            # (TB*N, D)

    # ---- LayerNorm over embedding dim (biased variance, eps=1e-5) ----
    mu = jnp.mean(x, axis=-1, keepdims=True)
    var = jnp.mean((x - mu) ** 2, axis=-1, keepdims=True)
    xn = (x - mu) * jax.lax.rsqrt(var + LN_EPS)
    xn = xn * g_ref[...] + b_ref[...]                         # (TB*N, D)

    # ---- fused QKV projection (no bias), full-height MXU matmul ----
    qkv = jnp.dot(xn, wqkv_ref[...],
                  preferred_element_type=jnp.float32)         # (TB*N, 3*inner)

    # ---- additive attention mask: -inf on rows/cols of missing modalities --
    miss = miss_ref[...]                                      # (TB, N)
    mask_add = jnp.where(miss[:, :, None] + miss[:, None, :] > 0.0,
                         -jnp.inf, 0.0)                       # (TB, N, N)

    # ---- per-head attention, batched over the TB batch dim ----
    # output projection is folded into the head loop:
    #   (concat_h out_h) @ W_out == sum_h out_h @ W_out[h*dh:(h+1)*dh, :]
    acc = jnp.zeros((tb * n, d), jnp.float32)
    for h in range(heads):
        q = qkv[:, h * dim_head:(h + 1) * dim_head]
        k = qkv[:, inner + h * dim_head:inner + (h + 1) * dim_head]
        v = qkv[:, 2 * inner + h * dim_head:2 * inner + (h + 1) * dim_head]
        q = q.reshape(tb, n, dim_head)                        # (TB, N, dh)
        k = k.reshape(tb, n, dim_head)
        v = v.reshape(tb, n, dim_head)

        dots = jnp.einsum("bqd,bkd->bqk", q, k,
                          preferred_element_type=jnp.float32)  # (TB, N, N)
        dots = dots * SCALE + mask_add

        # softmax over keys (matches torch semantics; fully-masked rows stay
        # NaN in both the kernel and the reference)
        dmax = jnp.max(dots, axis=-1, keepdims=True)
        p = jnp.exp(dots - dmax)
        denom = jnp.sum(p, axis=-1, keepdims=True)
        attn = p * pl.reciprocal(denom, approx=True)

        out_h = jnp.einsum("bqk,bkd->bqd", attn, v,
                           preferred_element_type=jnp.float32)  # (TB, N, dh)
        acc = acc + jnp.dot(out_h.reshape(tb * n, dim_head),
                            wout_ref[h * dim_head:(h + 1) * dim_head, :],
                            preferred_element_type=jnp.float32)

    o_ref[...] = acc + bout_ref[...]


# ------------------------------- wrapper ------------------------------------
def mask_attention(x, m_labels, params, *, seqLs=SEQ_LS, heads=HEADS,
                   dim_head=DIM_HEAD, block_b=256):
    """x: (B, N, D) float32; m_labels: (B, num_modalities) int32 (0 = missing)."""
    B, n, d = x.shape
    inner = heads * dim_head
    assert n == sum(seqLs) and d == params["w_out"].shape[1]

    # per-token "modality missing" flags (glue, plain JAX)
    seg_ids = jnp.concatenate(
        [jnp.full((L,), i, dtype=jnp.int32) for i, L in enumerate(seqLs)])
    miss = (m_labels[:, seg_ids] == 0).astype(jnp.float32)        # (B, N)

    # batch tiling: TB elements per grid step; pad B up to a multiple of TB.
    tb = min(block_b, B)
    num_blocks = math.ceil(B / tb)
    Bp = num_blocks * tb
    if Bp != B:
        x = jnp.pad(x, ((0, Bp - B), (0, 0), (0, 0)))
        miss = jnp.pad(miss, ((0, Bp - B), (0, 0)))   # padded rows: all present

    x_flat = x.reshape(Bp * n, d)                     # free reshape in XLA

    kernel = functools.partial(_mask_attn_kernel, n=n, heads=heads,
                               dim_head=dim_head)

    out_flat = pl.pallas_call(
        kernel,
        out_shape=jax.ShapeDtypeStruct((Bp * n, d), jnp.float32),
        grid=(num_blocks,),
        in_specs=[
            pl.BlockSpec((tb * n, d), lambda i: (i, 0)),           # x (flat)
            pl.BlockSpec((tb, n), lambda i: (i, 0)),               # miss flags
            pl.BlockSpec((1, d), lambda i: (0, 0)),                # gamma
            pl.BlockSpec((1, d), lambda i: (0, 0)),                # beta
            pl.BlockSpec((d, 3 * inner), lambda i: (0, 0)),        # W_qkv
            pl.BlockSpec((inner, d), lambda i: (0, 0)),            # W_out
            pl.BlockSpec((1, d), lambda i: (0, 0)),                # b_out
        ],
        out_specs=pl.BlockSpec((tb * n, d), lambda i: (i, 0)),
        compiler_params=pltpu.CompilerParams(
            dimension_semantics=("parallel",)),
    )(x_flat, miss, params["gamma"], params["beta"],
      params["w_qkv"], params["w_out"], params["b_out"])

    return out_flat.reshape(Bp, n, d)[:B]


# --------------------------- pure-JAX reference ------------------------------
def mask_attention_ref(x, m_labels, params, *, seqLs=SEQ_LS, heads=HEADS,
                       dim_head=DIM_HEAD):
    B, n, d = x.shape
    inner = heads * dim_head
    mu = jnp.mean(x, axis=-1, keepdims=True)
    var = jnp.mean((x - mu) ** 2, axis=-1, keepdims=True)
    xn = (x - mu) / jnp.sqrt(var + LN_EPS) * params["gamma"][0] + params["beta"][0]
    qkv = xn @ params["w_qkv"]
    q, k, v = jnp.split(qkv, 3, axis=-1)
    def to_heads(t):
        return t.reshape(B, n, heads, dim_head).transpose(0, 2, 1, 3)
    q, k, v = map(to_heads, (q, k, v))
    dots = jnp.einsum("bhid,bhjd->bhij", q, k) * SCALE
    seg_ids = jnp.concatenate(
        [jnp.full((L,), i, dtype=jnp.int32) for i, L in enumerate(seqLs)])
    miss = (m_labels[:, seg_ids] == 0)
    mask = jnp.where(miss[:, :, None] | miss[:, None, :], -jnp.inf, 0.0)
    dots = dots + mask[:, None, :, :]
    attn = jax.nn.softmax(dots, axis=-1)
    out = jnp.einsum("bhij,bhjd->bhid", attn, v)
    out = out.transpose(0, 2, 1, 3).reshape(B, n, inner)
    return out @ params["w_out"] + params["b_out"][0]


# --------------------------------- main --------------------------------------
if __name__ == "__main__":
    key = jax.random.PRNGKey(0)
    kx, kq, ko, kb = jax.random.split(key, 4)

    B = 16
    x = jax.random.normal(kx, (B, N, DIM), dtype=jnp.float32)
    # mix of fully-present / partially-missing modality patterns
    m_labels = jnp.array([[1, 1], [1, 0], [0, 1], [1, 1]] * (B // 4),
                         dtype=jnp.int32)

    params = {
        "gamma": jnp.ones((1, DIM), jnp.float32),
        "beta": jnp.zeros((1, DIM), jnp.float32),
        "w_qkv": 0.02 * jax.random.normal(kq, (DIM, 3 * INNER), jnp.float32),
        "w_out": 0.02 * jax.random.normal(ko, (INNER, DIM), jnp.float32),
        "b_out": 0.02 * jax.random.normal(kb, (1, DIM), jnp.float32),
    }

    # block_b=8 -> grid=(2,) so the batch-tiled pipeline path is exercised
    # even at this small demo batch size (production default is block_b=256).
    out = mask_attention(x, m_labels, params, block_b=8)
    out = jax.block_until_ready(out)

    ref = mask_attention_ref(x, m_labels, params)
    assert out.shape == (B, N, DIM)
    # rows belonging to a missing modality are NaN in both (matches torch)
    assert bool(jnp.allclose(out, ref, atol=2e-4, rtol=1e-3, equal_nan=True))

    print("KERNEL_OK")
</pallas_src>

<mosaic_0001>
module attributes {stable_mosaic.version = 11 : i64} {
  func.func @_mask_attn_kernel(%arg0: i32, %arg1: memref<64x32xf32, #tpu.memory_space<vmem>>, %arg2: memref<8x8xf32, #tpu.memory_space<vmem>>, %arg3: memref<1x32xf32, #tpu.memory_space<vmem>>, %arg4: memref<1x32xf32, #tpu.memory_space<vmem>>, %arg5: memref<32x96xf32, #tpu.memory_space<vmem>>, %arg6: memref<32x32xf32, #tpu.memory_space<vmem>>, %arg7: memref<1x32xf32, #tpu.memory_space<vmem>>, %arg8: memref<64x32xf32, #tpu.memory_space<vmem>>) attributes {dimension_semantics = [#tpu.dimension_semantics<parallel>], iteration_bounds = array<i64: 2>, scalar_prefetch = 0 : i64, scratch_operands = 0 : i64, tpu.core_type = #tpu.core_type<tc>, window_params = [{transform_indices = @transform_0, window_bounds = array<i64: 64, 32>}, {transform_indices = @transform_1, window_bounds = array<i64: 8, 8>}, {pipeline_mode = #tpu.pipeline_mode<synchronous>, transform_indices = @transform_2, window_bounds = array<i64: 1, 32>}, {pipeline_mode = #tpu.pipeline_mode<synchronous>, transform_indices = @transform_3, window_bounds = array<i64: 1, 32>}, {pipeline_mode = #tpu.pipeline_mode<synchronous>, transform_indices = @transform_4, window_bounds = array<i64: 32, 96>}, {pipeline_mode = #tpu.pipeline_mode<synchronous>, transform_indices = @transform_5, window_bounds = array<i64: 32, 32>}, {pipeline_mode = #tpu.pipeline_mode<synchronous>, transform_indices = @transform_6, window_bounds = array<i64: 1, 32>}, {transform_indices = @transform_7, window_bounds = array<i64: 64, 32>}]} {
    %c0 = arith.constant 0 : index
    %c0_0 = arith.constant 0 : index
    %0 = vector.load %arg1[%c0, %c0_0] : memref<64x32xf32, #tpu.memory_space<vmem>>, vector<64x32xf32>
    %cst = arith.constant dense<0.000000e+00> : vector<64xf32>
    %1 = vector.multi_reduction <add>, %0, %cst [1] : vector<64x32xf32> to vector<64xf32>
    %2 = vector.shape_cast %1 : vector<64xf32> to vector<64x1xf32>
    %cst_1 = arith.constant 3.200000e+01 : f32
    %3 = vector.broadcast %cst_1 : f32 to vector<64x1xf32>
    %4 = arith.divf %2, %3 : vector<64x1xf32>
    %5 = vector.broadcast %4 : vector<64x1xf32> to vector<64x32xf32>
    %6 = arith.subf %0, %5 : vector<64x32xf32>
    %7 = arith.mulf %6, %6 : vector<64x32xf32>
    %cst_2 = arith.constant dense<0.000000e+00> : vector<64xf32>
    %8 = vector.multi_reduction <add>, %7, %cst_2 [1] : vector<64x32xf32> to vector<64xf32>
    %9 = vector.shape_cast %8 : vector<64xf32> to vector<64x1xf32>
    %cst_3 = arith.constant 3.200000e+01 : f32
    %10 = vector.broadcast %cst_3 : f32 to vector<64x1xf32>
    %11 = arith.divf %9, %10 : vector<64x1xf32>
    %12 = vector.broadcast %4 : vector<64x1xf32> to vector<64x32xf32>
    %13 = arith.subf %0, %12 : vector<64x32xf32>
    %cst_4 = arith.constant 9.99999974E-6 : f32
    %14 = vector.broadcast %cst_4 : f32 to vector<64x1xf32>
    %15 = arith.addf %11, %14 : vector<64x1xf32>
    %16 = math.rsqrt %15 : vector<64x1xf32>
    %17 = vector.broadcast %16 : vector<64x1xf32> to vector<64x32xf32>
    %18 = arith.mulf %13, %17 : vector<64x32xf32>
    %c0_5 = arith.constant 0 : index
    %c0_6 = arith.constant 0 : index
    %19 = vector.load %arg3[%c0_5, %c0_6] : memref<1x32xf32, #tpu.memory_space<vmem>>, vector<1x32xf32>
    %20 = vector.broadcast %19 : vector<1x32xf32> to vector<64x32xf32>
    %21 = arith.mulf %18, %20 : vector<64x32xf32>
    %c0_7 = arith.constant 0 : index
    %c0_8 = arith.constant 0 : index
    %22 = vector.load %arg4[%c0_7, %c0_8] : memref<1x32xf32, #tpu.memory_space<vmem>>, vector<1x32xf32>
    %23 = vector.broadcast %22 : vector<1x32xf32> to vector<64x32xf32>
    %24 = arith.addf %21, %23 : vector<64x32xf32>
    %c0_9 = arith.constant 0 : index
    %c0_10 = arith.constant 0 : index
    %25 = vector.load %arg5[%c0_9, %c0_10] : memref<32x96xf32, #tpu.memory_space<vmem>>, vector<32x96xf32>
    %cst_11 = arith.constant dense<0.000000e+00> : vector<64x96xf32>
    %26 = tpu.matmul %24, %25, %cst_11 {dimension_numbers = #tpu.dot_dimension_numbers<[1], [0], [0], [1], [0, 0, 1, 1], [], []>} : vector<64x32xf32>, vector<32x96xf32>, vector<64x96xf32> -> vector<64x96xf32>
    %c0_12 = arith.constant 0 : index
    %c0_13 = arith.constant 0 : index
    %27 = vector.load %arg2[%c0_12, %c0_13] : memref<8x8xf32, #tpu.memory_space<vmem>>, vector<8x8xf32>
    %28 = vector.shape_cast %27 : vector<8x8xf32> to vector<8x8x1xf32>
    %29 = vector.shape_cast %27 : vector<8x8xf32> to vector<8x1x8xf32>
    %30 = vector.broadcast %28 : vector<8x8x1xf32> to vector<8x8x8xf32>
    %31 = vector.broadcast %29 : vector<8x1x8xf32> to vector<8x8x8xf32>
    %32 = arith.addf %30, %31 : vector<8x8x8xf32>
    %cst_14 = arith.constant 0.000000e+00 : f32
    %33 = vector.broadcast %cst_14 : f32 to vector<8x8x8xf32>
    %34 = arith.cmpf ogt, %32, %33 : vector<8x8x8xf32>
    %cst_15 = arith.constant 0xFF800000 : f32
    %cst_16 = arith.constant 0.000000e+00 : f32
    %35 = vector.broadcast %cst_15 : f32 to vector<8x8x8xf32>
    %36 = vector.broadcast %cst_16 : f32 to vector<8x8x8xf32>
    %37 = arith.select %34, %35, %36 : vector<8x8x8xi1>, vector<8x8x8xf32>
    %cst_17 = arith.constant 0.000000e+00 : f32
    %38 = vector.broadcast %cst_17 : f32 to vector<64x32xf32>
    %39 = vector.extract_strided_slice %26 {offsets = [0, 0], sizes = [64, 16], strides = [1, 1]} : vector<64x96xf32> to vector<64x16xf32>
    %40 = vector.extract_strided_slice %26 {offsets = [0, 32], sizes = [64, 16], strides = [1, 1]} : vector<64x96xf32> to vector<64x16xf32>
    %41 = vector.extract_strided_slice %26 {offsets = [0, 64], sizes = [64, 16], strides = [1, 1]} : vector<64x96xf32> to vector<64x16xf32>
    %42 = vector.shape_cast %39 : vector<64x16xf32> to vector<8x8x16xf32>
    %43 = vector.shape_cast %40 : vector<64x16xf32> to vector<8x8x16xf32>
    %44 = vector.shape_cast %41 : vector<64x16xf32> to vector<8x8x16xf32>
    "tpu.trace_start"() <{level = 10 : i32, message = "bqd,bkd->bqk"}> : () -> ()
    %cst_18 = arith.constant dense<0.000000e+00> : vector<8x8x8xf32>
    %45 = tpu.matmul %42, %43, %cst_18 {dimension_numbers = #tpu.dot_dimension_numbers<[2], [2], [1], [1], [0, 0, 0, 1, 1, 1], [0], [0]>} : vector<8x8x16xf32>, vector<8x8x16xf32>, vector<8x8x8xf32> -> vector<8x8x8xf32>
    "tpu.trace_stop"() : () -> ()
    %cst_19 = arith.constant 2.500000e-01 : f32
    %46 = vector.broadcast %cst_19 : f32 to vector<8x8x8xf32>
    %47 = arith.mulf %45, %46 : vector<8x8x8xf32>
    %48 = arith.addf %47, %37 : vector<8x8x8xf32>
    %cst_20 = arith.constant dense<0xFF800000> : vector<8x8xf32>
    %49 = vector.multi_reduction <maximumf>, %48, %cst_20 [2] : vector<8x8x8xf32> to vector<8x8xf32>
    %50 = vector.shape_cast %49 : vector<8x8xf32> to vector<8x8x1xf32>
    %51 = vector.broadcast %50 : vector<8x8x1xf32> to vector<8x8x8xf32>
    %52 = arith.subf %48, %51 : vector<8x8x8xf32>
    %53 = math.exp %52 : vector<8x8x8xf32>
    %cst_21 = arith.constant dense<0.000000e+00> : vector<8x8xf32>
    %54 = vector.multi_reduction <add>, %53, %cst_21 [2] : vector<8x8x8xf32> to vector<8x8xf32>
    %55 = vector.shape_cast %54 : vector<8x8xf32> to vector<8x8x1xf32>
    %56 = tpu.reciprocal %55 {approx = true} : vector<8x8x1xf32> -> vector<8x8x1xf32>
    %57 = vector.broadcast %56 : vector<8x8x1xf32> to vector<8x8x8xf32>
    %58 = arith.mulf %53, %57 : vector<8x8x8xf32>
    "tpu.trace_start"() <{level = 10 : i32, message = "bqk,bkd->bqd"}> : () -> ()
    %cst_22 = arith.constant dense<0.000000e+00> : vector<8x8x16xf32>
    %59 = tpu.matmul %58, %44, %cst_22 {dimension_numbers = #tpu.dot_dimension_numbers<[2], [1], [1], [2], [0, 0, 0, 1, 1, 2], [0], [0]>} : vector<8x8x8xf32>, vector<8x8x16xf32>, vector<8x8x16xf32> -> vector<8x8x16xf32>
    "tpu.trace_stop"() : () -> ()
    %60 = vector.shape_cast %59 : vector<8x8x16xf32> to vector<64x16xf32>
    %c0_23 = arith.constant 0 : index
    %c0_24 = arith.constant 0 : index
    %61 = vector.load %arg6[%c0_23, %c0_24] : memref<32x32xf32, #tpu.memory_space<vmem>>, vector<16x32xf32>
    %cst_25 = arith.constant dense<0.000000e+00> : vector<64x32xf32>
    %62 = tpu.matmul %60, %61, %cst_25 {dimension_numbers = #tpu.dot_dimension_numbers<[1], [0], [0], [1], [0, 0, 1, 1], [], []>} : vector<64x16xf32>, vector<16x32xf32>, vector<64x32xf32> -> vector<64x32xf32>
    %63 = arith.addf %38, %62 : vector<64x32xf32>
    %64 = vector.extract_strided_slice %26 {offsets = [0, 16], sizes = [64, 16], strides = [1, 1]} : vector<64x96xf32> to vector<64x16xf32>
    %65 = vector.extract_strided_slice %26 {offsets = [0, 48], sizes = [64, 16], strides = [1, 1]} : vector<64x96xf32> to vector<64x16xf32>
    %66 = vector.extract_strided_slice %26 {offsets = [0, 80], sizes = [64, 16], strides = [1, 1]} : vector<64x96xf32> to vector<64x16xf32>
    %67 = vector.shape_cast %64 : vector<64x16xf32> to vector<8x8x16xf32>
    %68 = vector.shape_cast %65 : vector<64x16xf32> to vector<8x8x16xf32>
    %69 = vector.shape_cast %66 : vector<64x16xf32> to vector<8x8x16xf32>
    "tpu.trace_start"() <{level = 10 : i32, message = "bqd,bkd->bqk"}> : () -> ()
    %cst_26 = arith.constant dense<0.000000e+00> : vector<8x8x8xf32>
    %70 = tpu.matmul %67, %68, %cst_26 {dimension_numbers = #tpu.dot_dimension_numbers<[2], [2], [1], [1], [0, 0, 0, 1, 1, 1], [0], [0]>} : vector<8x8x16xf32>, vector<8x8x16xf32>, vector<8x8x8xf32> -> vector<8x8x8xf32>
    "tpu.trace_stop"() : () -> ()
    %cst_27 = arith.constant 2.500000e-01 : f32
    %71 = vector.broadcast %cst_27 : f32 to vector<8x8x8xf32>
    %72 = arith.mulf %70, %71 : vector<8x8x8xf32>
    %73 = arith.addf %72, %37 : vector<8x8x8xf32>
    %cst_28 = arith.constant dense<0xFF800000> : vector<8x8xf32>
    %74 = vector.multi_reduction <maximumf>, %73, %cst_28 [2] : vector<8x8x8xf32> to vector<8x8xf32>
    %75 = vector.shape_cast %74 : vector<8x8xf32> to vector<8x8x1xf32>
    %76 = vector.broadcast %75 : vector<8x8x1xf32> to vector<8x8x8xf32>
    %77 = arith.subf %73, %76 : vector<8x8x8xf32>
    %78 = math.exp %77 : vector<8x8x8xf32>
    %cst_29 = arith.constant dense<0.000000e+00> : vector<8x8xf32>
    %79 = vector.multi_reduction <add>, %78, %cst_29 [2] : vector<8x8x8xf32> to vector<8x8xf32>
    %80 = vector.shape_cast %79 : vector<8x8xf32> to vector<8x8x1xf32>
    %81 = tpu.reciprocal %80 {approx = true} : vector<8x8x1xf32> -> vector<8x8x1xf32>
    %82 = vector.broadcast %81 : vector<8x8x1xf32> to vector<8x8x8xf32>
    %83 = arith.mulf %78, %82 : vector<8x8x8xf32>
    "tpu.trace_start"() <{level = 10 : i32, message = "bqk,bkd->bqd"}> : () -> ()
    %cst_30 = arith.constant dense<0.000000e+00> : vector<8x8x16xf32>
    %84 = tpu.matmul %83, %69, %cst_30 {dimension_numbers = #tpu.dot_dimension_numbers<[2], [1], [1], [2], [0, 0, 0, 1, 1, 2], [0], [0]>} : vector<8x8x8xf32>, vector<8x8x16xf32>, vector<8x8x16xf32> -> vector<8x8x16xf32>
    "tpu.trace_stop"() : () -> ()
    %85 = vector.shape_cast %84 : vector<8x8x16xf32> to vector<64x16xf32>
    %c16 = arith.constant 16 : index
    %c0_31 = arith.constant 0 : index
    %86 = vector.load %arg6[%c16, %c0_31] : memref<32x32xf32, #tpu.memory_space<vmem>>, vector<16x32xf32>
    %cst_32 = arith.constant dense<0.000000e+00> : vector<64x32xf32>
    %87 = tpu.matmul %85, %86, %cst_32 {dimension_numbers = #tpu.dot_dimension_numbers<[1], [0], [0], [1], [0, 0, 1, 1], [], []>} : vector<64x16xf32>, vector<16x32xf32>, vector<64x32xf32> -> vector<64x32xf32>
    %88 = arith.addf %63, %87 : vector<64x32xf32>
    %c0_33 = arith.constant 0 : index
    %c0_34 = arith.constant 0 : index
    %89 = vector.load %arg7[%c0_33, %c0_34] : memref<1x32xf32, #tpu.memory_space<vmem>>, vector<1x32xf32>
    %90 = vector.broadcast %89 : vector<1x32xf32> to vector<64x32xf32>
    %91 = arith.addf %88, %90 : vector<64x32xf32>
    %c0_35 = arith.constant 0 : index
    %c0_36 = arith.constant 0 : index
    %92 = vector.load %arg8[%c0_35, %c0_36] : memref<64x32xf32, #tpu.memory_space<vmem>>, vector<64x32xf32>
    tpu.vector_store %arg8[%c0_35, %c0_36], %91 {strides = array<i32>} : memref<64x32xf32, #tpu.memory_space<vmem>>, vector<64x32xf32>,
    return
  }
  func.func @transform_0(%arg0: i32) -> (i32, i32) {
    %c0_i32 = arith.constant 0 : i32
    %c0_i32_0 = arith.constant 0 : i32
    return %arg0, %c0_i32 : i32, i32
  }
  func.func @transform_1(%arg0: i32) -> (i32, i32) {
    %c0_i32 = arith.constant 0 : i32
    %c0_i32_0 = arith.constant 0 : i32
    return %arg0, %c0_i32 : i32, i32
  }
  func.func @transform_2(%arg0: i32) -> (i32, i32) {
    %c0_i32 = arith.constant 0 : i32
    %c0_i32_0 = arith.constant 0 : i32
    %c0_i32_1 = arith.constant 0 : i32
    return %c0_i32, %c0_i32_0 : i32, i32
  }
  func.func @transform_3(%arg0: i32) -> (i32, i32) {
    %c0_i32 = arith.constant 0 : i32
    %c0_i32_0 = arith.constant 0 : i32
    %c0_i32_1 = arith.constant 0 : i32
    return %c0_i32, %c0_i32_0 : i32, i32
  }
  func.func @transform_4(%arg0: i32) -> (i32, i32) {
    %c0_i32 = arith.constant 0 : i32
    %c0_i32_0 = arith.constant 0 : i32
    %c0_i32_1 = arith.constant 0 : i32
    return %c0_i32, %c0_i32_0 : i32, i32
  }
  func.func @transform_5(%arg0: i32) -> (i32, i32) {
    %c0_i32 = arith.constant 0 : i32
    %c0_i32_0 = arith.constant 0 : i32
    %c0_i32_1 = arith.constant 0 : i32
    return %c0_i32, %c0_i32_0 : i32, i32
  }
  func.func @transform_6(%arg0: i32) -> (i32, i32) {
    %c0_i32 = arith.constant 0 : i32
    %c0_i32_0 = arith.constant 0 : i32
    %c0_i32_1 = arith.constant 0 : i32
    return %c0_i32, %c0_i32_0 : i32, i32
  }
  func.func @transform_7(%arg0: i32) -> (i32, i32) {
    %c0_i32 = arith.constant 0 : i32
    %c0_i32_0 = arith.constant 0 : i32
    return %arg0, %c0_i32 : i32, i32
  }
}

</mosaic_0001>

<llo_original>
// kernel: tpu_custom_call.1
$region0: #{tpu_custom_call.1}
  #allocation0 [shape = 'u32[]', space=smem, size = 0x4, offset = 0x4, fixed_abs, tag = 'smem constant byte address 0x4 - core index']
  #allocation1 [shape = 'u32[144,128]{1,0:T(1,128)}', space=vmem, size = 0x12000, scoped, tag = 'internal scratch']
  %s0 = inlined_call_operand.vmem [shape: f32[128,32], index: 0, kind: input, shape index: {}]
  %s1 = inlined_call_operand.vmem [shape: f32[16,8], index: 1, kind: input, shape index: {}]
  %s2 = inlined_call_operand.vmem [shape: f32[1,32], index: 2, kind: input, shape index: {}]
  %s3 = inlined_call_operand.vmem [shape: f32[1,32], index: 3, kind: input, shape index: {}]
  %s4 = inlined_call_operand.vmem [shape: f32[32,96], index: 4, kind: input, shape index: {}]
  %s5 = inlined_call_operand.vmem [shape: f32[32,32], index: 5, kind: input, shape index: {}]
  %s6 = inlined_call_operand.vmem [shape: f32[1,32], index: 6, kind: input, shape index: {}]
  %s7 = inlined_call_operand.vmem [shape: f32[128,32], index: 7, kind: output, shape index: {}]
  %s8 = sld [smem:[#allocation0]]
  $region61: #{tpu_custom_call.1} parent=0
    _
  %s10 = ssub.s32 1, %s8
  %s11 = scalar_select 0, %s10, %s8
  loop: start=0, step=1, limit=4
  $region2: #{tpu_custom_call.1} parent=0 // loop_pre_header
    _
  $region3: #{tpu_custom_call.1} parent=0 // loop_header
    %s13 = sphi 0, %s17
    %p14 = scmp.ge.s32.totalorder %s13, 4
    %s23 = sphi 0, %s25
    %s26 = sphi 0, %s23
    %s27 = sphi 0, %s26
    %s43 = sphi 0, %s27
    %s49 = sphi 0, %s51
    %s52 = sphi 0, %s49
    %s53 = sphi 0, %s52
    %s69 = sphi 0, %s53
    %s73 = sphi 0, %s73
    %s75 = sphi 0, %s73
    %s76 = sphi 0, %s75
    %s90 = sphi 0, %s76
    %s94 = sphi 0, %s94
    %s96 = sphi 0, %s94
    %s97 = sphi 0, %s96
    %s111 = sphi 0, %s97
    %s115 = sphi 0, %s115
    %s117 = sphi 0, %s115
    %s118 = sphi 0, %s117
    %s132 = sphi 0, %s118
    %s136 = sphi 0, %s136
    %s138 = sphi 0, %s136
    %s139 = sphi 0, %s138
    %s153 = sphi 0, %s139
    %s157 = sphi 0, %s157
    %s159 = sphi 0, %s157
    %s160 = sphi 0, %s159
    %s174 = sphi 0, %s160
    %s180 = sphi 0, %s182
    %s183 = sphi 0, %s180
    %s184 = sphi 0, %s183
    %s200 = sphi 0, %s184
  $region4: #{tpu_custom_call.1} parent=0 // loop_header_branch
    %16 = sbr.rel (%p14) target = $region8
  $region5: #{tpu_custom_call.1} parent=0 // loop_body
    %s18 = ssub.s32 %s13, 1
    %s19 = ssub.s32 %s13, 2
    %s20 = sadd.s32 %s13, 1
    %s21 = ssub.s32 %s13, %s20
    %p22 = scmp.eq.s32.totalorder %s21, 0
    %s24 = sadd.s32 %s23, 1
    %s25 = scalar_select %p22, %s23, %s24
    %p28 = pneg %p22
    %p29 = scmp.eq.s32.totalorder %s13, 1
    %p30 = por %p28, %p29
    %p31 = scmp.ne.s32.totalorder %s23, %s26
    %p32 = scmp.eq.s32.totalorder %s13, 0
    %p33 = por %p31, %p32
    %p34 = scmp.ne.s32.totalorder %s23, %s26
    %p35 = scmp.eq.s32.totalorder %s18, 1
    %p36 = por %p34, %p35
    %p37 = scmp.ne.s32.totalorder %s26, %s27
    %p38 = scmp.eq.s32.totalorder %s18, 0
    %p39 = por %p37, %p38
    %p40 = scmp.ne.s32.totalorder %s26, %s27
    %p41 = scmp.eq.s32.totalorder %s19, 1
    %p42 = por %p40, %p41
    %p44 = scmp.ne.s32.totalorder %s27, %s43
    %p45 = scmp.eq.s32.totalorder %s19, 0
    %p46 = por %p44, %p45
    %s47 = ssub.s32 %s13, %s20
    %p48 = scmp.eq.s32.totalorder %s47, 0
    %s50 = sadd.s32 %s49, 1
    %s51 = scalar_select %p48, %s49, %s50
    %p54 = pneg %p48
    %p55 = scmp.eq.s32.totalorder %s13, 1
    %p56 = por %p54, %p55
    %p57 = scmp.ne.s32.totalorder %s49, %s52
    %p58 = scmp.eq.s32.totalorder %s13, 0
    %p59 = por %p57, %p58
    %p60 = scmp.ne.s32.totalorder %s49, %s52
    %p61 = scmp.eq.s32.totalorder %s18, 1
    %p62 = por %p60, %p61
    %p63 = scmp.ne.s32.totalorder %s52, %s53
    %p64 = scmp.eq.s32.totalorder %s18, 0
    %p65 = por %p63, %p64
    %p66 = scmp.ne.s32.totalorder %s52, %s53
    %p67 = scmp.eq.s32.totalorder %s19, 1
    %p68 = por %p66, %p67
    %p70 = scmp.ne.s32.totalorder %s53, %s69
    %p71 = scmp.eq.s32.totalorder %s19, 0
    %p72 = por %p70, %p71
    %s74 = sadd.s32 %s73, 1
    %p77 = scmp.eq.s32.totalorder %s13, 1
    %p78 = scmp.ne.s32.totalorder %s73, %s75
    %p79 = scmp.eq.s32.totalorder %s13, 0
    %p80 = por %p78, %p79
    %p81 = scmp.ne.s32.totalorder %s73, %s75
    %p82 = scmp.eq.s32.totalorder %s18, 1
    %p83 = por %p81, %p82
    %p84 = scmp.ne.s32.totalorder %s75, %s76
    %p85 = scmp.eq.s32.totalorder %s18, 0
    %p86 = por %p84, %p85
    %p87 = scmp.ne.s32.totalorder %s75, %s76
    %p88 = scmp.eq.s32.totalorder %s19, 1
    %p89 = por %p87, %p88
    %p91 = scmp.ne.s32.totalorder %s76, %s90
    %p92 = scmp.eq.s32.totalorder %s19, 0
    %p93 = por %p91, %p92
    %s95 = sadd.s32 %s94, 1
    %p98 = scmp.eq.s32.totalorder %s13, 1
    %p99 = scmp.ne.s32.totalorder %s94, %s96
    %p100 = scmp.eq.s32.totalorder %s13, 0
    %p101 = por %p99, %p100
    %p102 = scmp.ne.s32.totalorder %s94, %s96
    %p103 = scmp.eq.s32.totalorder %s18, 1
    %p104 = por %p102, %p103
    %p105 = scmp.ne.s32.totalorder %s96, %s97
    %p106 = scmp.eq.s32.totalorder %s18, 0
    %p107 = por %p105, %p106
    %p108 = scmp.ne.s32.totalorder %s96, %s97
    %p109 = scmp.eq.s32.totalorder %s19, 1
    %p110 = por %p108, %p109
    %p112 = scmp.ne.s32.totalorder %s97, %s111
    %p113 = scmp.eq.s32.totalorder %s19, 0
    %p114 = por %p112, %p113
    %s116 = sadd.s32 %s115, 1
    %p119 = scmp.eq.s32.totalorder %s13, 1
    %p120 = scmp.ne.s32.totalorder %s115, %s117
    %p121 = scmp.eq.s32.totalorder %s13, 0
    %p122 = por %p120, %p121
    %p123 = scmp.ne.s32.totalorder %s115, %s117
    %p124 = scmp.eq.s32.totalorder %s18, 1
    %p125 = por %p123, %p124
    %p126 = scmp.ne.s32.totalorder %s117, %s118
    %p127 = scmp.eq.s32.totalorder %s18, 0
    %p128 = por %p126, %p127
    %p129 = scmp.ne.s32.totalorder %s117, %s118
    %p130 = scmp.eq.s32.totalorder %s19, 1
    %p131 = por %p129, %p130
    %p133 = scmp.ne.s32.totalorder %s118, %s132
    %p134 = scmp.eq.s32.totalorder %s19, 0
    %p135 = por %p133, %p134
    %s137 = sadd.s32 %s136, 1
    %p140 = scmp.eq.s32.totalorder %s13, 1
    %p141 = scmp.ne.s32.totalorder %s136, %s138
    %p142 = scmp.eq.s32.totalorder %s13, 0
    %p143 = por %p141, %p142
    %p144 = scmp.ne.s32.totalorder %s136, %s138
    %p145 = scmp.eq.s32.totalorder %s18, 1
    %p146 = por %p144, %p145
    %p147 = scmp.ne.s32.totalorder %s138, %s139
    %p148 = scmp.eq.s32.totalorder %s18, 0
    %p149 = por %p147, %p148
    %p150 = scmp.ne.s32.totalorder %s138, %s139
    %p151 = scmp.eq.s32.totalorder %s19, 1
    %p152 = por %p150, %p151
    %p154 = scmp.ne.s32.totalorder %s139, %s153
    %p155 = scmp.eq.s32.totalorder %s19, 0
    %p156 = por %p154, %p155
    %s158 = sadd.s32 %s157, 1
    %p161 = scmp.eq.s32.totalorder %s13, 1
    %p162 = scmp.ne.s32.totalorder %s157, %s159
    %p163 = scmp.eq.s32.totalorder %s13, 0
    %p164 = por %p162, %p163
    %p165 = scmp.ne.s32.totalorder %s157, %s159
    %p166 = scmp.eq.s32.totalorder %s18, 1
    %p167 = por %p165, %p166
    %p168 = scmp.ne.s32.totalorder %s159, %s160
    %p169 = scmp.eq.s32.totalorder %s18, 0
    %p170 = por %p168, %p169
    %p171 = scmp.ne.s32.totalorder %s159, %s160
    %p172 = scmp.eq.s32.totalorder %s19, 1
    %p173 = por %p171, %p172
    %p175 = scmp.ne.s32.totalorder %s160, %s174
    %p176 = scmp.eq.s32.totalorder %s19, 0
    %p177 = por %p175, %p176
    %s178 = ssub.s32 %s13, %s20
    %p179 = scmp.eq.s32.totalorder %s178, 0
    %s181 = sadd.s32 %s180, 1
    %s182 = scalar_select %p179, %s180, %s181
    %p185 = pneg %p179
    %p186 = scmp.eq.s32.totalorder %s13, 1
    %p187 = por %p185, %p186
    %p188 = scmp.ne.s32.totalorder %s180, %s183
    %p189 = scmp.eq.s32.totalorder %s13, 0
    %p190 = por %p188, %p189
    %p191 = scmp.ne.s32.totalorder %s180, %s183
    %p192 = scmp.eq.s32.totalorder %s18, 1
    %p193 = por %p191, %p192
    %p194 = scmp.ne.s32.totalorder %s183, %s184
    %p195 = scmp.eq.s32.totalorder %s18, 0
    %p196 = por %p194, %p195
    %p197 = scmp.ne.s32.totalorder %s183, %s184
    %p198 = scmp.eq.s32.totalorder %s19, 1
    %p199 = por %p197, %p198
    %p201 = scmp.ne.s32.totalorder %s184, %s200
    %p202 = scmp.eq.s32.totalorder %s19, 0
    %p203 = por %p201, %p202
    %p204 = scmp.le.s32.totalorder 1, %s13
    %p205 = scmp.lt.s32.totalorder %s13, 3
    %p206 = pnand %p204, %p205
    %p207 = pneg %p206
    // Predicated region
    $region9: #{tpu_custom_call.1} parent=5 // pred_check
      _
    $region10: #{tpu_custom_call.1} parent=5 // pred_check_branch
      %209 = sbr.rel (%p206) target = $region12
    $region11: #{tpu_custom_call.1} parent=5 // pred_region
      %s210 = ssub.s32 %s13, 1
      // Predicated region
      $region13: #{tpu_custom_call.1} parent=11 // pred_check
        %p211 = pneg %p86
      $region14: #{tpu_custom_call.1} parent=11 // pred_check_branch
        %213 = sbr.rel (%p211) target = $region16
      $region15: #{tpu_custom_call.1} parent=11 // pred_region
        _
      $region16: #{tpu_custom_call.1} parent=11 // pred_fallthru
        _
      // Predicated region
      $region17: #{tpu_custom_call.1} parent=11 // pred_check
        %p214 = pneg %p107
      $region18: #{tpu_custom_call.1} parent=11 // pred_check_branch
        %216 = sbr.rel (%p214) target = $region20
      $region19: #{tpu_custom_call.1} parent=11 // pred_region
        _
      $region20: #{tpu_custom_call.1} parent=11 // pred_fallthru
        _
      // Predicated region
      $region21: #{tpu_custom_call.1} parent=11 // pred_check
        %p217 = pneg %p128
      $region22: #{tpu_custom_call.1} parent=11 // pred_check_branch
        %219 = sbr.rel (%p217) target = $region24
      $region23: #{tpu_custom_call.1} parent=11 // pred_region
        _
      $region24: #{tpu_custom_call.1} parent=11 // pred_fallthru
        _
      // Predicated region
      $region25: #{tpu_custom_call.1} parent=11 // pred_check
        %p220 = pneg %p149
      $region26: #{tpu_custom_call.1} parent=11 // pred_check_branch
        %222 = sbr.rel (%p220) target = $region28
      $region27: #{tpu_custom_call.1} parent=11 // pred_region
        _
      $region28: #{tpu_custom_call.1} parent=11 // pred_fallthru
        _
      // Predicated region
      $region29: #{tpu_custom_call.1} parent=11 // pred_check
        %p223 = pneg %p170
      $region30: #{tpu_custom_call.1} parent=11 // pred_check_branch
        %225 = sbr.rel (%p223) target = $region32
      $region31: #{tpu_custom_call.1} parent=11 // pred_region
        _
      $region32: #{tpu_custom_call.1} parent=11 // pred_fallthru
        _
    $region12: #{tpu_custom_call.1} parent=5 // pred_fallthru
      _
    %p226 = scmp.lt.s32.totalorder %s13, 2
    // Predicated region
    $region33: #{tpu_custom_call.1} parent=5 // pred_check
      %p227 = pneg %p226
    $region34: #{tpu_custom_call.1} parent=5 // pred_check_branch
      %229 = sbr.rel (%p227) target = $region36
    $region35: #{tpu_custom_call.1} parent=5 // pred_region
      // Predicated region
      $region37: #{tpu_custom_call.1} parent=35 // pred_check
        %p230 = pneg %p33
      $region38: #{tpu_custom_call.1} parent=35 // pred_check_branch
        %232 = sbr.rel (%p230) target = $region40
      $region39: #{tpu_custom_call.1} parent=35 // pred_region
        %s233 = smul.u32 8, %s13
        %p234 = scmp.lt.s32.totalorder %s233, 15
        %s235 = scalar_select %p234, %s233, 15
        %s236 = smul.addr %s235, 8
        %s237 = scalar_lea.vmem %s0, %s236
        %s238 = smul.u32 8, %s13
      $region40: #{tpu_custom_call.1} parent=35 // pred_fallthru
        _
      // Predicated region
      $region41: #{tpu_custom_call.1} parent=35 // pred_check
        %p239 = pneg %p59
      $region42: #{tpu_custom_call.1} parent=35 // pred_check_branch
        %241 = sbr.rel (%p239) target = $region44
      $region43: #{tpu_custom_call.1} parent=35 // pred_region
        %p242 = scmp.lt.s32.totalorder %s13, 1
        %s243 = scalar_select %p242, %s13, 1
        %s244 = smul.addr %s243, 8
        %s245 = scalar_lea.vmem %s1, %s244
      $region44: #{tpu_custom_call.1} parent=35 // pred_fallthru
        _
    $region36: #{tpu_custom_call.1} parent=5 // pred_fallthru
      _
    %p246 = scmp.le.s32.totalorder 1, %s13
    %p247 = scmp.lt.s32.totalorder %s13, 3
    %p248 = pnand %p246, %p247
    %p249 = pneg %p248
    // Predicated region
    $region45: #{tpu_custom_call.1} parent=5 // pred_check
      _
    $region46: #{tpu_custom_call.1} parent=5 // pred_check_branch
      %251 = sbr.rel (%p248) target = $region48
    $region47: #{tpu_custom_call.1} parent=5 // pred_region
      %s252 = ssub.s32 %s13, 1
      %s253 = smul.u32 8, %s18
      %p254 = scmp.lt.s32.totalorder %s253, 15
      %s255 = scalar_select %p254, %s253, 15
      %s256 = smul.addr %s255, 8
      %s257 = scalar_lea.vmem %s0, %s256
      %p258 = pneg %p39
      %p259 = pneg %p36
      %p260 = scmp.lt.s32.totalorder %s18, 1
      %s261 = scalar_select %p260, %s18, 1
      %s262 = smul.addr %s261, 8
      %s263 = scalar_lea.vmem %s1, %s262
      %p264 = pneg %p65
      %p265 = pneg %p62
      %p266 = pneg %p86
      %p267 = pneg %p83
      %p268 = pneg %p107
      %p269 = pneg %p104
      %p270 = pneg %p128
      %p271 = pneg %p125
      %p272 = pneg %p149
      %p273 = pneg %p146
      %p274 = pneg %p170
      %p275 = pneg %p167
      %p276 = pneg %p196
      %p277 = pneg %p193
      %s278 = smul.u32 8, %s18
      %p279 = scmp.lt.s32.totalorder %s278, 15
      %s280 = scalar_select %p279, %s278, 15
      %s281 = smul.addr %s280, 8
      %s282 = scalar_lea.vmem %s7, %s281
      %s283 = smul.u32 8, %s18
      %p284 = scmp.lt.s32.totalorder %s283, 15
      %s285 = scalar_select %p284, %s283, 15
      %s286 = smul.addr %s285, 8
      %s287 = scalar_lea.vmem %s0, %s286
      %s288 = smul.u32 8, %s18
      %p289 = scmp.lt.s32.totalorder %s18, 1
      %s290 = scalar_select %p289, %s18, 1
      %s291 = smul.addr %s290, 8
      %s292 = scalar_lea.vmem %s1, %s291
      %s293 = smul.u32 8, %s18
      %p294 = scmp.lt.s32.totalorder %s293, 15
      %s295 = scalar_select %p294, %s293, 15
      %s296 = smul.addr %s295, 8
      %s297 = scalar_lea.vmem %s7, %s296
      %s298 = smul.u32 8, %s18
      %v299 = vld [vmem:[%s287] sm:$0xff]
      %v300 = vld [vmem:[%s287 + $0x8] sm:$0xff]
      %v301 = vld [vmem:[%s287 + $0x10] sm:$0xff]
      %v302 = vld [vmem:[%s287 + $0x18] sm:$0xff]
      %v303 = vld [vmem:[%s287 + $0x20] sm:$0xff]
      %v304 = vld [vmem:[%s287 + $0x28] sm:$0xff]
      %v305 = vld [vmem:[%s287 + $0x30] sm:$0xff]
      %v306 = vld [vmem:[%s287 + $0x38] sm:$0xff]
      %vm307 = vcmask 261120
      %v308 = vsel %vm307, %v299, 0.0
      %309 = vadd.xlane.f32.xlu0 %v308
      %v310 = vpop.xlane.xlu0 %309
      %v311 = vsel %vm307, %v300, 0.0
      %312 = vadd.xlane.f32.xlu0 %v311
      %v313 = vpop.xlane.xlu0 %312
      %v314 = vsel %vm307, %v301, 0.0
      %315 = vadd.xlane.f32.xlu0 %v314
      %v316 = vpop.xlane.xlu0 %315
      %v317 = vsel %vm307, %v302, 0.0
      %318 = vadd.xlane.f32.xlu0 %v317
      %v319 = vpop.xlane.xlu0 %318
      %v320 = vsel %vm307, %v303, 0.0
      %321 = vadd.xlane.f32.xlu0 %v320
      %v322 = vpop.xlane.xlu0 %321
      %v323 = vsel %vm307, %v304, 0.0
      %324 = vadd.xlane.f32.xlu0 %v323
      %v325 = vpop.xlane.xlu0 %324
      %v326 = vsel %vm307, %v305, 0.0
      %327 = vadd.xlane.f32.xlu0 %v326
      %v328 = vpop.xlane.xlu0 %327
      %v329 = vsel %vm307, %v306, 0.0
      %330 = vadd.xlane.f32.xlu0 %v329
      %v331 = vpop.xlane.xlu0 %330
      %v332 = vrcp.pop 32.0
      %v333 = vmul.f32 %v310, %v332
      %v334 = vmul.f32 %v313, %v332
      %v335 = vmul.f32 %v316, %v332
      %v336 = vmul.f32 %v319, %v332
      %v337 = vmul.f32 %v322, %v332
      %v338 = vmul.f32 %v325, %v332
      %v339 = vmul.f32 %v328, %v332
      %v340 = vmul.f32 %v331, %v332
      %v341 = vsub.f32 %v299, %v333
      %v342 = vsub.f32 %v300, %v334
      %v343 = vsub.f32 %v301, %v335
      %v344 = vsub.f32 %v302, %v336
      %v345 = vsub.f32 %v303, %v337
      %v346 = vsub.f32 %v304, %v338
      %v347 = vsub.f32 %v305, %v339
      %v348 = vsub.f32 %v306, %v340
      %v349 = vmul.f32 %v341, %v341
      %v350 = vmul.f32 %v342, %v342
      %v351 = vmul.f32 %v343, %v343
      %v352 = vmul.f32 %v344, %v344
      %v353 = vmul.f32 %v345, %v345
      %v354 = vmul.f32 %v346, %v346
      %v355 = vmul.f32 %v347, %v347
      %v356 = vmul.f32 %v348, %v348
      %v357 = vsel %vm307, %v349, 0.0
      %358 = vadd.xlane.f32.xlu0 %v357
      %v359 = vpop.xlane.xlu0 %358
      %v360 = vsel %vm307, %v350, 0.0
      %361 = vadd.xlane.f32.xlu0 %v360
      %v362 = vpop.xlane.xlu0 %361
      %v363 = vsel %vm307, %v351, 0.0
      %364 = vadd.xlane.f32.xlu0 %v363
      %v365 = vpop.xlane.xlu0 %364
      %v366 = vsel %vm307, %v352, 0.0
      %367 = vadd.xlane.f32.xlu0 %v366
      %v368 = vpop.xlane.xlu0 %367
      %v369 = vsel %vm307, %v353, 0.0
      %370 = vadd.xlane.f32.xlu0 %v369
      %v371 = vpop.xlane.xlu0 %370
      %v372 = vsel %vm307, %v354, 0.0
      %373 = vadd.xlane.f32.xlu0 %v372
      %v374 = vpop.xlane.xlu0 %373
      %v375 = vsel %vm307, %v355, 0.0
      %376 = vadd.xlane.f32.xlu0 %v375
      %v377 = vpop.xlane.xlu0 %376
      %v378 = vsel %vm307, %v356, 0.0
      %379 = vadd.xlane.f32.xlu0 %v378
      %v380 = vpop.xlane.xlu0 %379
      %v381 = vmul.f32 %v359, %v332
      %v382 = vmul.f32 %v362, %v332
      %v383 = vmul.f32 %v365, %v332
      %v384 = vmul.f32 %v368, %v332
      %v385 = vmul.f32 %v371, %v332
      %v386 = vmul.f32 %v374, %v332
      %v387 = vmul.f32 %v377, %v332
      %v388 = vmul.f32 %v380, %v332
      %v389 = vadd.f32 %v381, 1e-05
      %v390 = vadd.f32 %v382, 1e-05
      %v391 = vadd.f32 %v383, 1e-05
      %v392 = vadd.f32 %v384, 1e-05
      %v393 = vadd.f32 %v385, 1e-05
      %v394 = vadd.f32 %v386, 1e-05
      %v395 = vadd.f32 %v387, 1e-05
      %v396 = vadd.f32 %v388, 1e-05
      %v397 = vrsqrt.pop %v389
      %v398 = vrsqrt.pop %v390
      %v399 = vrsqrt.pop %v391
      %v400 = vrsqrt.pop %v392
      %v401 = vrsqrt.pop %v393
      %v402 = vrsqrt.pop %v394
      %v403 = vrsqrt.pop %v395
      %v404 = vrsqrt.pop %v396
      %v405 = vmul.f32 %v341, %v397
      %v406 = vmul.f32 %v342, %v398
      %v407 = vmul.f32 %v343, %v399
      %v408 = vmul.f32 %v344, %v400
      %v409 = vmul.f32 %v345, %v401
      %v410 = vmul.f32 %v346, %v402
      %v411 = vmul.f32 %v347, %v403
      %v412 = vmul.f32 %v348, %v404
      %v413 = vld [vmem:[%s2] sm:$0x1]
      %v415 = vlaneseq
      %v416 = vshrl.u32 %v415, 7
      %v417 = vsub.s32 0, %v416
      %v418 = vrot.slane %v413, %v417
      %v420 = vmul.f32 %v405, %v418
      %v421 = vmul.f32 %v406, %v418
      %v422 = vmul.f32 %v407, %v418
      %v423 = vmul.f32 %v408, %v418
      %v424 = vmul.f32 %v409, %v418
      %v425 = vmul.f32 %v410, %v418
      %v426 = vmul.f32 %v411, %v418
      %v427 = vmul.f32 %v412, %v418
      %v428 = vld [vmem:[%s3] sm:$0x1]
      %v430 = vlaneseq
      %v431 = vshrl.u32 %v430, 7
      %v432 = vsub.s32 0, %v431
      %v433 = vrot.slane %v428, %v432
      %v435 = vadd.f32 %v420, %v433
      %v436 = vadd.f32 %v421, %v433
      %v437 = vadd.f32 %v422, %v433
      %v438 = vadd.f32 %v423, %v433
      %v439 = vadd.f32 %v424, %v433
      %v440 = vadd.f32 %v425, %v433
      %v441 = vadd.f32 %v426, %v433
      %v442 = vadd.f32 %v427, %v433
      %v443 = vld [vmem:[%s4] sm:$0xff]
      %v444 = vld [vmem:[%s4 + $0x8] sm:$0xff]
      %v445 = vld [vmem:[%s4 + $0x10] sm:$0xff]
      %v446 = vld [vmem:[%s4 + $0x18] sm:$0xff]
      %v448 = vsel %vm307, %v435, 0
      %v451 = vsel %vm307, %v436, 0
      %v454 = vsel %vm307, %v437, 0
      %v457 = vsel %vm307, %v438, 0
      %v460 = vsel %vm307, %v439, 0
      %v463 = vsel %vm307, %v440, 0
      %v466 = vsel %vm307, %v441, 0
      %v469 = vsel %vm307, %v442, 0
      %471 = vmatprep.subr.mxu0 0.0
      %472 = vmatpush1.msra.mxu0 0.0
      %473 = vmatprep.subr.mxu0 0.0
      %474 = vmatpush1.msra.mxu0 0.0
      %475 = vmatprep.subr.mxu0 0.0
      %476 = vmatpush1.msra.mxu0 0.0
      %477 = vmatprep.subr.mxu0 0.0
      %478 = vmatpush1.msra.mxu0 0.0
      %479 = vmatprep.subr.mxu0 0.0
      %480 = vmatpush1.msra.mxu0 0.0
      %481 = vmatprep.subr.mxu0 0.0
      %482 = vmatpush1.msra.mxu0 0.0
      %483 = vmatprep.subr.mxu0 0.0
      %484 = vmatpush1.msra.mxu0 0.0
      %485 = vmatprep.subr.mxu0 0.0
      %486 = vmatpush1.msra.mxu0 0.0
      %487 = vmatprep.subr.mxu0 0.0
      %488 = vmatpush1.msra.mxu0 0.0
      %489 = vmatprep.subr.mxu0 0.0
      %490 = vmatpush1.msra.mxu0 0.0
      %491 = vmatprep.subr.mxu0 0.0
      %492 = vmatpush1.msra.mxu0 0.0
      %493 = vmatprep.subr.mxu0 0.0
      %494 = vmatpush1.msra.mxu0 0.0
      %495 = vmatprep.subr.mxu0 0.0
      %496 = vmatpush1.msra.mxu0 %v446
      %497 = vmatprep.subr.mxu0 0.0
      %498 = vmatpush1.msra.mxu0 %v445
      %499 = vmatprep.subr.mxu0 0.0
      %500 = vmatpush1.msra.mxu0 %v444
      %501 = vmatprep.subr.mxu0 0.0
      %502 = vmatpush1.msra.mxu0 %v443
      %503 = vmatprep.subr.mxu0 0.0
      %504 = vmatpush2.msra.mxu0 0.0
      %505 = vmatprep.subr.mxu0 0.0
      %506 = vmatpush2.msra.mxu0 0.0
      %507 = vmatprep.subr.mxu0 0.0
      %508 = vmatpush2.msra.mxu0 0.0
      %509 = vmatprep.subr.mxu0 0.0
      %510 = vmatpush2.msra.mxu0 0.0
      %511 = vmatprep.subr.mxu0 0.0
      %512 = vmatpush2.msra.mxu0 0.0
      %513 = vmatprep.subr.mxu0 0.0
      %514 = vmatpush2.msra.mxu0 0.0
      %515 = vmatprep.subr.mxu0 0.0
      %516 = vmatpush2.msra.mxu0 0.0
      %517 = vmatprep.subr.mxu0 0.0
      %518 = vmatpush2.msra.mxu0 0.0
      %519 = vmatprep.subr.mxu0 0.0
      %520 = vmatpush2.msra.mxu0 0.0
      %521 = vmatprep.subr.mxu0 0.0
      %522 = vmatpush2.msra.mxu0 0.0
      %523 = vmatprep.subr.mxu0 0.0
      %524 = vmatpush2.msra.mxu0 0.0
      %525 = vmatprep.subr.mxu0 0.0
      %526 = vmatpush2.msra.mxu0 0.0
      %527 = vmatprep.subr.mxu0 0.0
      %528 = vmatpush2.msra.mxu0 0.0
      %529 = vmatprep.subr.mxu0 0.0
      %530 = vmatpush2.msra.mxu0 0.0
      %531 = vmatprep.subr.mxu0 0.0
      %532 = vmatpush2.msra.mxu0 0.0
      %533 = vmatprep.subr.mxu0 0.0
      %534 = vmatpush2.msra.mxu0 0.0
      %535 = vmatprep.mubr.f32.mxu0 0.0
      %536 = vmatmul.mubr.f32.gmra.mxu0 %v448
      %v537 = vpop.f32.mrf.mxu0
      %v538 = vadd.f32 0.0, %v537
      %v539 = vpop.f32.mrf.mxu0
      %540 = vmatprep.mubr.f32.mxu0 0.0
      %541 = vmatmul.mubr.f32.gmra.mxu0 %v451
      %v542 = vpop.f32.mrf.mxu0
      %v543 = vadd.f32 0.0, %v542
      %v544 = vpop.f32.mrf.mxu0
      %545 = vmatprep.mubr.f32.mxu0 0.0
      %546 = vmatmul.mubr.f32.gmra.mxu0 %v454
      %v547 = vpop.f32.mrf.mxu0
      %v548 = vadd.f32 0.0, %v547
      %v549 = vpop.f32.mrf.mxu0
      %550 = vmatprep.mubr.f32.mxu0 0.0
      %551 = vmatmul.mubr.f32.gmra.mxu0 %v457
      %v552 = vpop.f32.mrf.mxu0
      %v553 = vadd.f32 0.0, %v552
      %v554 = vpop.f32.mrf.mxu0
      %555 = vmatprep.mubr.f32.mxu0 0.0
      %556 = vmatmul.mubr.f32.gmra.mxu0 %v460
      %v557 = vpop.f32.mrf.mxu0
      %v558 = vadd.f32 0.0, %v557
      %v559 = vpop.f32.mrf.mxu0
      %560 = vmatprep.mubr.f32.mxu0 0.0
      %561 = vmatmul.mubr.f32.gmra.mxu0 %v463
      %v562 = vpop.f32.mrf.mxu0
      %v563 = vadd.f32 0.0, %v562
      %v564 = vpop.f32.mrf.mxu0
      %565 = vmatprep.mubr.f32.mxu0 0.0
      %566 = vmatmul.mubr.f32.gmra.mxu0 %v466
      %v567 = vpop.f32.mrf.mxu0
      %v568 = vadd.f32 0.0, %v567
      %v569 = vpop.f32.mrf.mxu0
      %570 = vmatprep.mubr.f32.mxu0 0.0
      %571 = vmatmul.mubr.f32.gmra.mxu0 %v469
      %v572 = vpop.f32.mrf.mxu0
      %v573 = vadd.f32 0.0, %v572
      %v574 = vpop.f32.mrf.mxu0
      %575 = vdwg.mxu0
      %v576 = vld [vmem:[%s292] sm:$0xff]
      %v577 = vlaneseq
      %v578 = vshrl.u32 %v577, 7
      %v579 = vsub.s32 0, %v578
      %v580 = vrot.slane %v576, %v579
      %582 = vbcast.lane.b32.xlu0 %v580, 256
      %v583 = vpop.permute.xlu0 %582
      %v584 = vlaneseq
      %v585 = vshrl.u32 %v584, 7
      %v586 = vsub.s32 1, %v585
      %v587 = vrot.slane %v576, %v586
      %589 = vbcast.lane.b32.xlu0 %v587, 256
      %v590 = vpop.permute.xlu0 %589
      %v591 = vlaneseq
      %v592 = vshrl.u32 %v591, 7
      %v593 = vsub.s32 2, %v592
      %v594 = vrot.slane %v576, %v593
      %596 = vbcast.lane.b32.xlu0 %v594, 256
      %v597 = vpop.permute.xlu0 %596
      %v598 = vlaneseq
      %v599 = vshrl.u32 %v598, 7
      %v600 = vsub.s32 3, %v599
      %v601 = vrot.slane %v576, %v600
      %603 = vbcast.lane.b32.xlu0 %v601, 256
      %v604 = vpop.permute.xlu0 %603
      %v605 = vlaneseq
      %v606 = vshrl.u32 %v605, 7
      %v607 = vsub.s32 4, %v606
      %v608 = vrot.slane %v576, %v607
      %610 = vbcast.lane.b32.xlu0 %v608, 256
      %v611 = vpop.permute.xlu0 %610
      %v612 = vlaneseq
      %v613 = vshrl.u32 %v612, 7
      %v614 = vsub.s32 5, %v613
      %v615 = vrot.slane %v576, %v614
      %617 = vbcast.lane.b32.xlu0 %v615, 256
      %v618 = vpop.permute.xlu0 %617
      %v619 = vlaneseq
      %v620 = vshrl.u32 %v619, 7
      %v621 = vsub.s32 6, %v620
      %v622 = vrot.slane %v576, %v621
      %624 = vbcast.lane.b32.xlu0 %v622, 256
      %v625 = vpop.permute.xlu0 %624
      %v626 = vlaneseq
      %v627 = vshrl.u32 %v626, 7
      %v628 = vsub.s32 7, %v627
      %v629 = vrot.slane %v576, %v628
      %631 = vbcast.lane.b32.xlu0 %v629, 256
      %v632 = vpop.permute.xlu0 %631
      %v634 = vcombine.high %v576, %v576
      %v636 = vunpack.c.l.s4 1966171168
      %v637 = vunpack.c.0.s8 %v636
      %v638 = vlaneseq
      %v639 = vshrl.u32 %v638, 7
      %v640 = vsub.s32 %v637, %v639
      %v641 = vrot.slane %v576, %v640
      %v643 = vunpack.c.l.s4 1966171168
      %v644 = vunpack.c.0.s8 %v643
      %v645 = vlaneseq
      %v646 = vshrl.u32 %v645, 7
      %v647 = vsub.s32 %v644, %v646
      %v648 = vrot.slane %v634, %v647
      %v649 = vcombine.high %v641, %v641
      %v650 = vcombine.high %v648, %v648
      %v652 = vunpack.c.l.s4 1966171168
      %v653 = vunpack.c.0.s8 %v652
      %v654 = vlaneseq
      %v655 = vshrl.u32 %v654, 7
      %v656 = vsub.s32 %v653, %v655
      %v657 = vrot.slane %v641, %v656
      %v659 = vunpack.c.l.s4 1966171168
      %v660 = vunpack.c.0.s8 %v659
      %v661 = vlaneseq
      %v662 = vshrl.u32 %v661, 7
      %v663 = vsub.s32 %v660, %v662
      %v664 = vrot.slane %v648, %v663
      %v666 = vunpack.c.l.s4 1966171168
      %v667 = vunpack.c.0.s8 %v666
      %v668 = vlaneseq
      %v669 = vshrl.u32 %v668, 7
      %v670 = vsub.s32 %v667, %v669
      %v671 = vrot.slane %v649, %v670
      %v673 = vunpack.c.l.s4 1966171168
      %v674 = vunpack.c.0.s8 %v673
      %v675 = vlaneseq
      %v676 = vshrl.u32 %v675, 7
      %v677 = vsub.s32 %v674, %v676
      %v678 = vrot.slane %v650, %v677
      %v679 = vcombine.high %v657, %v657
      %v680 = vcombine.high %v664, %v664
      %v681 = vcombine.high %v671, %v671
      %v682 = vcombine.high %v678, %v678
      %v683 = vlaneseq
      %v684 = vshrl.u32 %v683, 7
      %v685 = vsub.s32 0, %v684
      %v686 = vrot.slane %v657, %v685
      %v687 = vlaneseq
      %v688 = vshrl.u32 %v687, 7
      %v689 = vsub.s32 0, %v688
      %v690 = vrot.slane %v671, %v689
      %v691 = vlaneseq
      %v692 = vshrl.u32 %v691, 7
      %v693 = vsub.s32 0, %v692
      %v694 = vrot.slane %v679, %v693
      %v695 = vlaneseq
      %v696 = vshrl.u32 %v695, 7
      %v697 = vsub.s32 0, %v696
      %v698 = vrot.slane %v681, %v697
      %v699 = vlaneseq
      %v700 = vshrl.u32 %v699, 7
      %v701 = vsub.s32 0, %v700
      %v702 = vrot.slane %v664, %v701
      %v703 = vlaneseq
      %v704 = vshrl.u32 %v703, 7
      %v705 = vsub.s32 0, %v704
      %v706 = vrot.slane %v678, %v705
      %v707 = vlaneseq
      %v708 = vshrl.u32 %v707, 7
      %v709 = vsub.s32 0, %v708
      %v710 = vrot.slane %v680, %v709
      %v711 = vlaneseq
      %v712 = vshrl.u32 %v711, 7
      %v713 = vsub.s32 0, %v712
      %v714 = vrot.slane %v682, %v713
      %v723 = vadd.f32 %v583, %v686
      %v724 = vadd.f32 %v590, %v690
      %v725 = vadd.f32 %v597, %v694
      %v726 = vadd.f32 %v604, %v698
      %v727 = vadd.f32 %v611, %v702
      %v728 = vadd.f32 %v618, %v706
      %v729 = vadd.f32 %v625, %v710
      %v730 = vadd.f32 %v632, %v714
      %vm731 = vcmp.gt.f32.partialorder %v723, 0.0
      %vm732 = vcmp.gt.f32.partialorder %v724, 0.0
      %vm733 = vcmp.gt.f32.partialorder %v725, 0.0
      %vm734 = vcmp.gt.f32.partialorder %v726, 0.0
      %vm735 = vcmp.gt.f32.partialorder %v727, 0.0
      %vm736 = vcmp.gt.f32.partialorder %v728, 0.0
      %vm737 = vcmp.gt.f32.partialorder %v729, 0.0
      %vm738 = vcmp.gt.f32.partialorder %v730, 0.0
      %v739 = vsel %vm731, -inf, 0.0
      %v740 = vsel %vm732, -inf, 0.0
      %v741 = vsel %vm733, -inf, 0.0
      %v742 = vsel %vm734, -inf, 0.0
      %v743 = vsel %vm735, -inf, 0.0
      %v744 = vsel %vm736, -inf, 0.0
      %v745 = vsel %vm737, -inf, 0.0
      %v746 = vsel %vm738, -inf, 0.0
      %748 = vrot.lane.b32.xlu0 %v538, 96
      %v749 = vpop.permute.xlu0 %748
      %vm750 = vcmask 130048
      %v751 = vsel %vm750, %v538, 0
      %v753 = vsel %vm750, %v749, 0
      %755 = vmatprep.subr.mxu0 0.0
      %756 = vmatpush1.xpose.msra.mxu0 0.0
      %757 = vmatprep.subr.mxu0 0.0
      %758 = vmatpush1.xpose.msra.mxu0 0.0
      %759 = vmatprep.subr.mxu0 0.0
      %760 = vmatpush1.xpose.msra.mxu0 0.0
      %761 = vmatprep.subr.mxu0 0.0
      %762 = vmatpush1.xpose.msra.mxu0 0.0
      %763 = vmatprep.subr.mxu0 0.0
      %764 = vmatpush1.xpose.msra.mxu0 0.0
      %765 = vmatprep.subr.mxu0 0.0
      %766 = vmatpush1.xpose.msra.mxu0 0.0
      %767 = vmatprep.subr.mxu0 0.0
      %768 = vmatpush1.xpose.msra.mxu0 0.0
      %769 = vmatprep.subr.mxu0 0.0
      %770 = vmatpush1.xpose.msra.mxu0 0.0
      %771 = vmatprep.subr.mxu0 0.0
      %772 = vmatpush1.xpose.msra.mxu0 0.0
      %773 = vmatprep.subr.mxu0 0.0
      %774 = vmatpush1.xpose.msra.mxu0 0.0
      %775 = vmatprep.subr.mxu0 0.0
      %776 = vmatpush1.xpose.msra.mxu0 0.0
      %777 = vmatprep.subr.mxu0 0.0
      %778 = vmatpush1.xpose.msra.mxu0 0.0
      %779 = vmatprep.subr.mxu0 0.0
      %780 = vmatpush1.xpose.msra.mxu0 0.0
      %781 = vmatprep.subr.mxu0 0.0
      %782 = vmatpush1.xpose.msra.mxu0 0.0
      %783 = vmatprep.subr.mxu0 0.0
      %784 = vmatpush1.xpose.msra.mxu0 0.0
      %785 = vmatprep.subr.mxu0 0.0
      %786 = vmatpush1.xpose.msra.mxu0 %v753
      %787 = vmatprep.subr.mxu0 0.0
      %788 = vmatpush2.xpose.msra.mxu0 0.0
      %789 = vmatprep.subr.mxu0 0.0
      %790 = vmatpush2.xpose.msra.mxu0 0.0
      %791 = vmatprep.subr.mxu0 0.0
      %792 = vmatpush2.xpose.msra.mxu0 0.0
      %793 = vmatprep.subr.mxu0 0.0
      %794 = vmatpush2.xpose.msra.mxu0 0.0
      %795 = vmatprep.subr.mxu0 0.0
      %796 = vmatpush2.xpose.msra.mxu0 0.0
      %797 = vmatprep.subr.mxu0 0.0
      %798 = vmatpush2.xpose.msra.mxu0 0.0
      %799 = vmatprep.subr.mxu0 0.0
      %800 = vmatpush2.xpose.msra.mxu0 0.0
      %801 = vmatprep.subr.mxu0 0.0
      %802 = vmatpush2.xpose.msra.mxu0 0.0
      %803 = vmatprep.subr.mxu0 0.0
      %804 = vmatpush2.xpose.msra.mxu0 0.0
      %805 = vmatprep.subr.mxu0 0.0
      %806 = vmatpush2.xpose.msra.mxu0 0.0
      %807 = vmatprep.subr.mxu0 0.0
      %808 = vmatpush2.xpose.msra.mxu0 0.0
      %809 = vmatprep.subr.mxu0 0.0
      %810 = vmatpush2.xpose.msra.mxu0 0.0
      %811 = vmatprep.subr.mxu0 0.0
      %812 = vmatpush2.xpose.msra.mxu0 0.0
      %813 = vmatprep.subr.mxu0 0.0
      %814 = vmatpush2.xpose.msra.mxu0 0.0
      %815 = vmatprep.subr.mxu0 0.0
      %816 = vmatpush2.xpose.msra.mxu0 0.0
      %817 = vmatprep.subr.mxu0 0.0
      %818 = vmatpush2.xpose.msra.mxu0 0.0
      %819 = vmatprep.mubr.f32.mxu0 0.0
      %820 = vmatmul.mubr.f32.gmra.mxu0 %v751
      %v821 = vpop.f32.mrf.mxu0
      %v822 = vadd.f32 0.0, %v821
      %v823 = vpop.f32.mrf.mxu0
      %824 = vdwg.mxu0
      %826 = vrot.lane.b32.xlu0 %v543, 96
      %v827 = vpop.permute.xlu0 %826
      %v828 = vsel %vm750, %v543, 0
      %v830 = vsel %vm750, %v827, 0
      %832 = vmatprep.subr.mxu0 0.0
      %833 = vmatpush1.xpose.msra.mxu0 0.0
      %834 = vmatprep.subr.mxu0 0.0
      %835 = vmatpush1.xpose.msra.mxu0 0.0
      %836 = vmatprep.subr.mxu0 0.0
      %837 = vmatpush1.xpose.msra.mxu0 0.0
      %838 = vmatprep.subr.mxu0 0.0
      %839 = vmatpush1.xpose.msra.mxu0 0.0
      %840 = vmatprep.subr.mxu0 0.0
      %841 = vmatpush1.xpose.msra.mxu0 0.0
      %842 = vmatprep.subr.mxu0 0.0
      %843 = vmatpush1.xpose.msra.mxu0 0.0
      %844 = vmatprep.subr.mxu0 0.0
      %845 = vmatpush1.xpose.msra.mxu0 0.0
      %846 = vmatprep.subr.mxu0 0.0
      %847 = vmatpush1.xpose.msra.mxu0 0.0
      %848 = vmatprep.subr.mxu0 0.0
      %849 = vmatpush1.xpose.msra.mxu0 0.0
      %850 = vmatprep.subr.mxu0 0.0
      %851 = vmatpush1.xpose.msra.mxu0 0.0
      %852 = vmatprep.subr.mxu0 0.0
      %853 = vmatpush1.xpose.msra.mxu0 0.0
      %854 = vmatprep.subr.mxu0 0.0
      %855 = vmatpush1.xpose.msra.mxu0 0.0
      %856 = vmatprep.subr.mxu0 0.0
      %857 = vmatpush1.xpose.msra.mxu0 0.0
      %858 = vmatprep.subr.mxu0 0.0
      %859 = vmatpush1.xpose.msra.mxu0 0.0
      %860 = vmatprep.subr.mxu0 0.0
      %861 = vmatpush1.xpose.msra.mxu0 0.0
      %862 = vmatprep.subr.mxu0 0.0
      %863 = vmatpush1.xpose.msra.mxu0 %v830
      %864 = vmatprep.subr.mxu0 0.0
      %865 = vmatpush2.xpose.msra.mxu0 0.0
      %866 = vmatprep.subr.mxu0 0.0
      %867 = vmatpush2.xpose.msra.mxu0 0.0
      %868 = vmatprep.subr.mxu0 0.0
      %869 = vmatpush2.xpose.msra.mxu0 0.0
      %870 = vmatprep.subr.mxu0 0.0
      %871 = vmatpush2.xpose.msra.mxu0 0.0
      %872 = vmatprep.subr.mxu0 0.0
      %873 = vmatpush2.xpose.msra.mxu0 0.0
      %874 = vmatprep.subr.mxu0 0.0
      %875 = vmatpush2.xpose.msra.mxu0 0.0
      %876 = vmatprep.subr.mxu0 0.0
      %877 = vmatpush2.xpose.msra.mxu0 0.0
      %878 = vmatprep.subr.mxu0 0.0
      %879 = vmatpush2.xpose.msra.mxu0 0.0
      %880 = vmatprep.subr.mxu0 0.0
      %881 = vmatpush2.xpose.msra.mxu0 0.0
      %882 = vmatprep.subr.mxu0 0.0
      %883 = vmatpush2.xpose.msra.mxu0 0.0
      %884 = vmatprep.subr.mxu0 0.0
      %885 = vmatpush2.xpose.msra.mxu0 0.0
      %886 = vmatprep.subr.mxu0 0.0
      %887 = vmatpush2.xpose.msra.mxu0 0.0
      %888 = vmatprep.subr.mxu0 0.0
      %889 = vmatpush2.xpose.msra.mxu0 0.0
      %890 = vmatprep.subr.mxu0 0.0
      %891 = vmatpush2.xpose.msra.mxu0 0.0
      %892 = vmatprep.subr.mxu0 0.0
      %893 = vmatpush2.xpose.msra.mxu0 0.0
      %894 = vmatprep.subr.mxu0 0.0
      %895 = vmatpush2.xpose.msra.mxu0 0.0
      %896 = vmatprep.mubr.f32.mxu0 0.0
      %897 = vmatmul.mubr.f32.gmra.mxu0 %v828
      %v898 = vpop.f32.mrf.mxu0
      %v899 = vadd.f32 0.0, %v898
      %v900 = vpop.f32.mrf.mxu0
      %901 = vdwg.mxu0
      %903 = vrot.lane.b32.xlu0 %v548, 96
      %v904 = vpop.permute.xlu0 %903
      %v905 = vsel %vm750, %v548, 0
      %v907 = vsel %vm750, %v904, 0
      %909 = vmatprep.subr.mxu0 0.0
      %910 = vmatpush1.xpose.msra.mxu0 0.0
      %911 = vmatprep.subr.mxu0 0.0
      %912 = vmatpush1.xpose.msra.mxu0 0.0
      %913 = vmatprep.subr.mxu0 0.0
      %914 = vmatpush1.xpose.msra.mxu0 0.0
      %915 = vmatprep.subr.mxu0 0.0
      %916 = vmatpush1.xpose.msra.mxu0 0.0
      %917 = vmatprep.subr.mxu0 0.0
      %918 = vmatpush1.xpose.msra.mxu0 0.0
      %919 = vmatprep.subr.mxu0 0.0
      %920 = vmatpush1.xpose.msra.mxu0 0.0
      %921 = vmatprep.subr.mxu0 0.0
      %922 = vmatpush1.xpose.msra.mxu0 0.0
      %923 = vmatprep.subr.mxu0 0.0
      %924 = vmatpush1.xpose.msra.mxu0 0.0
      %925 = vmatprep.subr.mxu0 0.0
      %926 = vmatpush1.xpose.msra.mxu0 0.0
      %927 = vmatprep.subr.mxu0 0.0
      %928 = vmatpush1.xpose.msra.mxu0 0.0
      %929 = vmatprep.subr.mxu0 0.0
      %930 = vmatpush1.xpose.msra.mxu0 0.0
      %931 = vmatprep.subr.mxu0 0.0
      %932 = vmatpush1.xpose.msra.mxu0 0.0
      %933 = vmatprep.subr.mxu0 0.0
      %934 = vmatpush1.xpose.msra.mxu0 0.0
      %935 = vmatprep.subr.mxu0 0.0
      %936 = vmatpush1.xpose.msra.mxu0 0.0
      %937 = vmatprep.subr.mxu0 0.0
      %938 = vmatpush1.xpose.msra.mxu0 0.0
      %939 = vmatprep.subr.mxu0 0.0
      %940 = vmatpush1.xpose.msra.mxu0 %v907
      %941 = vmatprep.subr.mxu0 0.0
      %942 = vmatpush2.xpose.msra.mxu0 0.0
      %943 = vmatprep.subr.mxu0 0.0
      %944 = vmatpush2.xpose.msra.mxu0 0.0
      %945 = vmatprep.subr.mxu0 0.0
      %946 = vmatpush2.xpose.msra.mxu0 0.0
      %947 = vmatprep.subr.mxu0 0.0
      %948 = vmatpush2.xpose.msra.mxu0 0.0
      %949 = vmatprep.subr.mxu0 0.0
      %950 = vmatpush2.xpose.msra.mxu0 0.0
      %951 = vmatprep.subr.mxu0 0.0
      %952 = vmatpush2.xpose.msra.mxu0 0.0
      %953 = vmatprep.subr.mxu0 0.0
      %954 = vmatpush2.xpose.msra.mxu0 0.0
      %955 = vmatprep.subr.mxu0 0.0
      %956 = vmatpush2.xpose.msra.mxu0 0.0
      %957 = vmatprep.subr.mxu0 0.0
      %958 = vmatpush2.xpose.msra.mxu0 0.0
      %959 = vmatprep.subr.mxu0 0.0
      %960 = vmatpush2.xpose.msra.mxu0 0.0
      %961 = vmatprep.subr.mxu0 0.0
      %962 = vmatpush2.xpose.msra.mxu0 0.0
      %963 = vmatprep.subr.mxu0 0.0
      %964 = vmatpush2.xpose.msra.mxu0 0.0
      %965 = vmatprep.subr.mxu0 0.0
      %966 = vmatpush2.xpose.msra.mxu0 0.0
      %967 = vmatprep.subr.mxu0 0.0
      %968 = vmatpush2.xpose.msra.mxu0 0.0
      %969 = vmatprep.subr.mxu0 0.0
      %970 = vmatpush2.xpose.msra.mxu0 0.0
      %971 = vmatprep.subr.mxu0 0.0
      %972 = vmatpush2.xpose.msra.mxu0 0.0
      %973 = vmatprep.mubr.f32.mxu0 0.0
      %974 = vmatmul.mubr.f32.gmra.mxu0 %v905
      %v975 = vpop.f32.mrf.mxu0
      %v976 = vadd.f32 0.0, %v975
      %v977 = vpop.f32.mrf.mxu0
      %978 = vdwg.mxu0
      %980 = vrot.lane.b32.xlu0 %v553, 96
      %v981 = vpop.permute.xlu0 %980
      %v982 = vsel %vm750, %v553, 0
      %v984 = vsel %vm750, %v981, 0
      %986 = vmatprep.subr.mxu0 0.0
      %987 = vmatpush1.xpose.msra.mxu0 0.0
      %988 = vmatprep.subr.mxu0 0.0
      %989 = vmatpush1.xpose.msra.mxu0 0.0
      %990 = vmatprep.subr.mxu0 0.0
      %991 = vmatpush1.xpose.msra.mxu0 0.0
      %992 = vmatprep.subr.mxu0 0.0
      %993 = vmatpush1.xpose.msra.mxu0 0.0
      %994 = vmatprep.subr.mxu0 0.0
      %995 = vmatpush1.xpose.msra.mxu0 0.0
      %996 = vmatprep.subr.mxu0 0.0
      %997 = vmatpush1.xpose.msra.mxu0 0.0
      %998 = vmatprep.subr.mxu0 0.0
      %999 = vmatpush1.xpose.msra.mxu0 0.0
      %1000 = vmatprep.subr.mxu0 0.0
      %1001 = vmatpush1.xpose.msra.mxu0 0.0
      %1002 = vmatprep.subr.mxu0 0.0
      %1003 = vmatpush1.xpose.msra.mxu0 0.0
      %1004 = vmatprep.subr.mxu0 0.0
      %1005 = vmatpush1.xpose.msra.mxu0 0.0
      %1006 = vmatprep.subr.mxu0 0.0
      %1007 = vmatpush1.xpose.msra.mxu0 0.0
      %1008 = vmatprep.subr.mxu0 0.0
      %1009 = vmatpush1.xpose.msra.mxu0 0.0
      %1010 = vmatprep.subr.mxu0 0.0
      %1011 = vmatpush1.xpose.msra.mxu0 0.0
      %1012 = vmatprep.subr.mxu0 0.0
      %1013 = vmatpush1.xpose.msra.mxu0 0.0
      %1014 = vmatprep.subr.mxu0 0.0
      %1015 = vmatpush1.xpose.msra.mxu0 0.0
      %1016 = vmatprep.subr.mxu0 0.0
      %1017 = vmatpush1.xpose.msra.mxu0 %v984
      %1018 = vmatprep.subr.mxu0 0.0
      %1019 = vmatpush2.xpose.msra.mxu0 0.0
      %1020 = vmatprep.subr.mxu0 0.0
      %1021 = vmatpush2.xpose.msra.mxu0 0.0
      %1022 = vmatprep.subr.mxu0 0.0
      %1023 = vmatpush2.xpose.msra.mxu0 0.0
      %1024 = vmatprep.subr.mxu0 0.0
      %1025 = vmatpush2.xpose.msra.mxu0 0.0
      %1026 = vmatprep.subr.mxu0 0.0
      %1027 = vmatpush2.xpose.msra.mxu0 0.0
      %1028 = vmatprep.subr.mxu0 0.0
      %1029 = vmatpush2.xpose.msra.mxu0 0.0
      %1030 = vmatprep.subr.mxu0 0.0
      %1031 = vmatpush2.xpose.msra.mxu0 0.0
      %1032 = vmatprep.subr.mxu0 0.0
      %1033 = vmatpush2.xpose.msra.mxu0 0.0
      %1034 = vmatprep.subr.mxu0 0.0
      %1035 = vmatpush2.xpose.msra.mxu0 0.0
      %1036 = vmatprep.subr.mxu0 0.0
      %1037 = vmatpush2.xpose.msra.mxu0 0.0
      %1038 = vmatprep.subr.mxu0 0.0
      %1039 = vmatpush2.xpose.msra.mxu0 0.0
      %1040 = vmatprep.subr.mxu0 0.0
      %1041 = vmatpush2.xpose.msra.mxu0 0.0
      %1042 = vmatprep.subr.mxu0 0.0
      %1043 = vmatpush2.xpose.msra.mxu0 0.0
      %1044 = vmatprep.subr.mxu0 0.0
      %1045 = vmatpush2.xpose.msra.mxu0 0.0
      %1046 = vmatprep.subr.mxu0 0.0
      %1047 = vmatpush2.xpose.msra.mxu0 0.0
      %1048 = vmatprep.subr.mxu0 0.0
      %1049 = vmatpush2.xpose.msra.mxu0 0.0
      %1050 = vmatprep.mubr.f32.mxu0 0.0
      %1051 = vmatmul.mubr.f32.gmra.mxu0 %v982
      %v1052 = vpop.f32.mrf.mxu0
      %v1053 = vadd.f32 0.0, %v1052
      %v1054 = vpop.f32.mrf.mxu0
      %1055 = vdwg.mxu0
      %1057 = vrot.lane.b32.xlu0 %v558, 96
      %v1058 = vpop.permute.xlu0 %1057
      %v1059 = vsel %vm750, %v558, 0
      %v1061 = vsel %vm750, %v1058, 0
      %1063 = vmatprep.subr.mxu0 0.0
      %1064 = vmatpush1.xpose.msra.mxu0 0.0
      %1065 = vmatprep.subr.mxu0 0.0
      %1066 = vmatpush1.xpose.msra.mxu0 0.0
      %1067 = vmatprep.subr.mxu0 0.0
      %1068 = vmatpush1.xpose.msra.mxu0 0.0
      %1069 = vmatprep.subr.mxu0 0.0
      %1070 = vmatpush1.xpose.msra.mxu0 0.0
      %1071 = vmatprep.subr.mxu0 0.0
      %1072 = vmatpush1.xpose.msra.mxu0 0.0
      %1073 = vmatprep.subr.mxu0 0.0
      %1074 = vmatpush1.xpose.msra.mxu0 0.0
      %1075 = vmatprep.subr.mxu0 0.0
      %1076 = vmatpush1.xpose.msra.mxu0 0.0
      %1077 = vmatprep.subr.mxu0 0.0
      %1078 = vmatpush1.xpose.msra.mxu0 0.0
      %1079 = vmatprep.subr.mxu0 0.0
      %1080 = vmatpush1.xpose.msra.mxu0 0.0
      %1081 = vmatprep.subr.mxu0 0.0
      %1082 = vmatpush1.xpose.msra.mxu0 0.0
      %1083 = vmatprep.subr.mxu0 0.0
      %1084 = vmatpush1.xpose.msra.mxu0 0.0
      %1085 = vmatprep.subr.mxu0 0.0
      %1086 = vmatpush1.xpose.msra.mxu0 0.0
      %1087 = vmatprep.subr.mxu0 0.0
      %1088 = vmatpush1.xpose.msra.mxu0 0.0
      %1089 = vmatprep.subr.mxu0 0.0
      %1090 = vmatpush1.xpose.msra.mxu0 0.0
      %1091 = vmatprep.subr.mxu0 0.0
      %1092 = vmatpush1.xpose.msra.mxu0 0.0
      %1093 = vmatprep.subr.mxu0 0.0
      %1094 = vmatpush1.xpose.msra.mxu0 %v1061
      %1095 = vmatprep.subr.mxu0 0.0
      %1096 = vmatpush2.xpose.msra.mxu0 0.0
      %1097 = vmatprep.subr.mxu0 0.0
      %1098 = vmatpush2.xpose.msra.mxu0 0.0
      %1099 = vmatprep.subr.mxu0 0.0
      %1100 = vmatpush2.xpose.msra.mxu0 0.0
      %1101 = vmatprep.subr.mxu0 0.0
      %1102 = vmatpush2.xpose.msra.mxu0 0.0
      %1103 = vmatprep.subr.mxu0 0.0
      %1104 = vmatpush2.xpose.msra.mxu0 0.0
      %1105 = vmatprep.subr.mxu0 0.0
      %1106 = vmatpush2.xpose.msra.mxu0 0.0
      %1107 = vmatprep.subr.mxu0 0.0
      %1108 = vmatpush2.xpose.msra.mxu0 0.0
      %1109 = vmatprep.subr.mxu0 0.0
      %1110 = vmatpush2.xpose.msra.mxu0 0.0
      %1111 = vmatprep.subr.mxu0 0.0
      %1112 = vmatpush2.xpose.msra.mxu0 0.0
      %1113 = vmatprep.subr.mxu0 0.0
      %1114 = vmatpush2.xpose.msra.mxu0 0.0
      %1115 = vmatprep.subr.mxu0 0.0
      %1116 = vmatpush2.xpose.msra.mxu0 0.0
      %1117 = vmatprep.subr.mxu0 0.0
      %1118 = vmatpush2.xpose.msra.mxu0 0.0
      %1119 = vmatprep.subr.mxu0 0.0
      %1120 = vmatpush2.xpose.msra.mxu0 0.0
      %1121 = vmatprep.subr.mxu0 0.0
      %1122 = vmatpush2.xpose.msra.mxu0 0.0
      %1123 = vmatprep.subr.mxu0 0.0
      %1124 = vmatpush2.xpose.msra.mxu0 0.0
      %1125 = vmatprep.subr.mxu0 0.0
      %1126 = vmatpush2.xpose.msra.mxu0 0.0
      %1127 = vmatprep.mubr.f32.mxu0 0.0
      %1128 = vmatmul.mubr.f32.gmra.mxu0 %v1059
      %v1129 = vpop.f32.mrf.mxu0
      %v1130 = vadd.f32 0.0, %v1129
      %v1131 = vpop.f32.mrf.mxu0
      %1132 = vdwg.mxu0
      %1134 = vrot.lane.b32.xlu0 %v563, 96
      %v1135 = vpop.permute.xlu0 %1134
      %v1136 = vsel %vm750, %v563, 0
      %v1138 = vsel %vm750, %v1135, 0
      %1140 = vmatprep.subr.mxu0 0.0
      %1141 = vmatpush1.xpose.msra.mxu0 0.0
      %1142 = vmatprep.subr.mxu0 0.0
      %1143 = vmatpush1.xpose.msra.mxu0 0.0
      %1144 = vmatprep.subr.mxu0 0.0
      %1145 = vmatpush1.xpose.msra.mxu0 0.0
      %1146 = vmatprep.subr.mxu0 0.0
      %1147 = vmatpush1.xpose.msra.mxu0 0.0
      %1148 = vmatprep.subr.mxu0 0.0
      %1149 = vmatpush1.xpose.msra.mxu0 0.0
      %1150 = vmatprep.subr.mxu0 0.0
      %1151 = vmatpush1.xpose.msra.mxu0 0.0
      %1152 = vmatprep.subr.mxu0 0.0
      %1153 = vmatpush1.xpose.msra.mxu0 0.0
      %1154 = vmatprep.subr.mxu0 0.0
      %1155 = vmatpush1.xpose.msra.mxu0 0.0
      %1156 = vmatprep.subr.mxu0 0.0
      %1157 = vmatpush1.xpose.msra.mxu0 0.0
      %1158 = vmatprep.subr.mxu0 0.0
      %1159 = vmatpush1.xpose.msra.mxu0 0.0
      %1160 = vmatprep.subr.mxu0 0.0
      %1161 = vmatpush1.xpose.msra.mxu0 0.0
      %1162 = vmatprep.subr.mxu0 0.0
      %1163 = vmatpush1.xpose.msra.mxu0 0.0
      %1164 = vmatprep.subr.mxu0 0.0
      %1165 = vmatpush1.xpose.msra.mxu0 0.0
      %1166 = vmatprep.subr.mxu0 0.0
      %1167 = vmatpush1.xpose.msra.mxu0 0.0
      %1168 = vmatprep.subr.mxu0 0.0
      %1169 = vmatpush1.xpose.msra.mxu0 0.0
      %1170 = vmatprep.subr.mxu0 0.0
      %1171 = vmatpush1.xpose.msra.mxu0 %v1138
      %1172 = vmatprep.subr.mxu0 0.0
      %1173 = vmatpush2.xpose.msra.mxu0 0.0
      %1174 = vmatprep.subr.mxu0 0.0
      %1175 = vmatpush2.xpose.msra.mxu0 0.0
      %1176 = vmatprep.subr.mxu0 0.0
      %1177 = vmatpush2.xpose.msra.mxu0 0.0
      %1178 = vmatprep.subr.mxu0 0.0
      %1179 = vmatpush2.xpose.msra.mxu0 0.0
      %1180 = vmatprep.subr.mxu0 0.0
      %1181 = vmatpush2.xpose.msra.mxu0 0.0
      %1182 = vmatprep.subr.mxu0 0.0
      %1183 = vmatpush2.xpose.msra.mxu0 0.0
      %1184 = vmatprep.subr.mxu0 0.0
      %1185 = vmatpush2.xpose.msra.mxu0 0.0
      %1186 = vmatprep.subr.mxu0 0.0
      %1187 = vmatpush2.xpose.msra.mxu0 0.0
      %1188 = vmatprep.subr.mxu0 0.0
      %1189 = vmatpush2.xpose.msra.mxu0 0.0
      %1190 = vmatprep.subr.mxu0 0.0
      %1191 = vmatpush2.xpose.msra.mxu0 0.0
      %1192 = vmatprep.subr.mxu0 0.0
      %1193 = vmatpush2.xpose.msra.mxu0 0.0
      %1194 = vmatprep.subr.mxu0 0.0
      %1195 = vmatpush2.xpose.msra.mxu0 0.0
      %1196 = vmatprep.subr.mxu0 0.0
      %1197 = vmatpush2.xpose.msra.mxu0 0.0
      %1198 = vmatprep.subr.mxu0 0.0
      %1199 = vmatpush2.xpose.msra.mxu0 0.0
      %1200 = vmatprep.subr.mxu0 0.0
      %1201 = vmatpush2.xpose.msra.mxu0 0.0
      %1202 = vmatprep.subr.mxu0 0.0
      %1203 = vmatpush2.xpose.msra.mxu0 0.0
      %1204 = vmatprep.mubr.f32.mxu0 0.0
      %1205 = vmatmul.mubr.f32.gmra.mxu0 %v1136
      %v1206 = vpop.f32.mrf.mxu0
      %v1207 = vadd.f32 0.0, %v1206
      %v1208 = vpop.f32.mrf.mxu0
      %1209 = vdwg.mxu0
      %1211 = vrot.lane.b32.xlu0 %v568, 96
      %v1212 = vpop.permute.xlu0 %1211
      %v1213 = vsel %vm750, %v568, 0
      %v1215 = vsel %vm750, %v1212, 0
      %1217 = vmatprep.subr.mxu0 0.0
      %1218 = vmatpush1.xpose.msra.mxu0 0.0
      %1219 = vmatprep.subr.mxu0 0.0
      %1220 = vmatpush1.xpose.msra.mxu0 0.0
      %1221 = vmatprep.subr.mxu0 0.0
      %1222 = vmatpush1.xpose.msra.mxu0 0.0
      %1223 = vmatprep.subr.mxu0 0.0
      %1224 = vmatpush1.xpose.msra.mxu0 0.0
      %1225 = vmatprep.subr.mxu0 0.0
      %1226 = vmatpush1.xpose.msra.mxu0 0.0
      %1227 = vmatprep.subr.mxu0 0.0
      %1228 = vmatpush1.xpose.msra.mxu0 0.0
      %1229 = vmatprep.subr.mxu0 0.0
      %1230 = vmatpush1.xpose.msra.mxu0 0.0
      %1231 = vmatprep.subr.mxu0 0.0
      %1232 = vmatpush1.xpose.msra.mxu0 0.0
      %1233 = vmatprep.subr.mxu0 0.0
      %1234 = vmatpush1.xpose.msra.mxu0 0.0
      %1235 = vmatprep.subr.mxu0 0.0
      %1236 = vmatpush1.xpose.msra.mxu0 0.0
      %1237 = vmatprep.subr.mxu0 0.0
      %1238 = vmatpush1.xpose.msra.mxu0 0.0
      %1239 = vmatprep.subr.mxu0 0.0
      %1240 = vmatpush1.xpose.msra.mxu0 0.0
      %1241 = vmatprep.subr.mxu0 0.0
      %1242 = vmatpush1.xpose.msra.mxu0 0.0
      %1243 = vmatprep.subr.mxu0 0.0
      %1244 = vmatpush1.xpose.msra.mxu0 0.0
      %1245 = vmatprep.subr.mxu0 0.0
      %1246 = vmatpush1.xpose.msra.mxu0 0.0
      %1247 = vmatprep.subr.mxu0 0.0
      %1248 = vmatpush1.xpose.msra.mxu0 %v1215
      %1249 = vmatprep.subr.mxu0 0.0
      %1250 = vmatpush2.xpose.msra.mxu0 0.0
      %1251 = vmatprep.subr.mxu0 0.0
      %1252 = vmatpush2.xpose.msra.mxu0 0.0
      %1253 = vmatprep.subr.mxu0 0.0
      %1254 = vmatpush2.xpose.msra.mxu0 0.0
      %1255 = vmatprep.subr.mxu0 0.0
      %1256 = vmatpush2.xpose.msra.mxu0 0.0
      %1257 = vmatprep.subr.mxu0 0.0
      %1258 = vmatpush2.xpose.msra.mxu0 0.0
      %1259 = vmatprep.subr.mxu0 0.0
      %1260 = vmatpush2.xpose.msra.mxu0 0.0
      %1261 = vmatprep.subr.mxu0 0.0
      %1262 = vmatpush2.xpose.msra.mxu0 0.0
      %1263 = vmatprep.subr.mxu0 0.0
      %1264 = vmatpush2.xpose.msra.mxu0 0.0
      %1265 = vmatprep.subr.mxu0 0.0
      %1266 = vmatpush2.xpose.msra.mxu0 0.0
      %1267 = vmatprep.subr.mxu0 0.0
      %1268 = vmatpush2.xpose.msra.mxu0 0.0
      %1269 = vmatprep.subr.mxu0 0.0
      %1270 = vmatpush2.xpose.msra.mxu0 0.0
      %1271 = vmatprep.subr.mxu0 0.0
      %1272 = vmatpush2.xpose.msra.mxu0 0.0
      %1273 = vmatprep.subr.mxu0 0.0
      %1274 = vmatpush2.xpose.msra.mxu0 0.0
      %1275 = vmatprep.subr.mxu0 0.0
      %1276 = vmatpush2.xpose.msra.mxu0 0.0
      %1277 = vmatprep.subr.mxu0 0.0
      %1278 = vmatpush2.xpose.msra.mxu0 0.0
      %1279 = vmatprep.subr.mxu0 0.0
      %1280 = vmatpush2.xpose.msra.mxu0 0.0
      %1281 = vmatprep.mubr.f32.mxu0 0.0
      %1282 = vmatmul.mubr.f32.gmra.mxu0 %v1213
      %v1283 = vpop.f32.mrf.mxu0
      %v1284 = vadd.f32 0.0, %v1283
      %v1285 = vpop.f32.mrf.mxu0
      %1286 = vdwg.mxu0
      %1288 = vrot.lane.b32.xlu0 %v573, 96
      %v1289 = vpop.permute.xlu0 %1288
      %v1290 = vsel %vm750, %v573, 0
      %v1292 = vsel %vm750, %v1289, 0
      %1294 = vmatprep.subr.mxu0 0.0
      %1295 = vmatpush1.xpose.msra.mxu0 0.0
      %1296 = vmatprep.subr.mxu0 0.0
      %1297 = vmatpush1.xpose.msra.mxu0 0.0
      %1298 = vmatprep.subr.mxu0 0.0
      %1299 = vmatpush1.xpose.msra.mxu0 0.0
      %1300 = vmatprep.subr.mxu0 0.0
      %1301 = vmatpush1.xpose.msra.mxu0 0.0
      %1302 = vmatprep.subr.mxu0 0.0
      %1303 = vmatpush1.xpose.msra.mxu0 0.0
      %1304 = vmatprep.subr.mxu0 0.0
      %1305 = vmatpush1.xpose.msra.mxu0 0.0
      %1306 = vmatprep.subr.mxu0 0.0
      %1307 = vmatpush1.xpose.msra.mxu0 0.0
      %1308 = vmatprep.subr.mxu0 0.0
      %1309 = vmatpush1.xpose.msra.mxu0 0.0
      %1310 = vmatprep.subr.mxu0 0.0
      %1311 = vmatpush1.xpose.msra.mxu0 0.0
      %1312 = vmatprep.subr.mxu0 0.0
      %1313 = vmatpush1.xpose.msra.mxu0 0.0
      %1314 = vmatprep.subr.mxu0 0.0
      %1315 = vmatpush1.xpose.msra.mxu0 0.0
      %1316 = vmatprep.subr.mxu0 0.0
      %1317 = vmatpush1.xpose.msra.mxu0 0.0
      %1318 = vmatprep.subr.mxu0 0.0
      %1319 = vmatpush1.xpose.msra.mxu0 0.0
      %1320 = vmatprep.subr.mxu0 0.0
      %1321 = vmatpush1.xpose.msra.mxu0 0.0
      %1322 = vmatprep.subr.mxu0 0.0
      %1323 = vmatpush1.xpose.msra.mxu0 0.0
      %1324 = vmatprep.subr.mxu0 0.0
      %1325 = vmatpush1.xpose.msra.mxu0 %v1292
      %1326 = vmatprep.subr.mxu0 0.0
      %1327 = vmatpush2.xpose.msra.mxu0 0.0
      %1328 = vmatprep.subr.mxu0 0.0
      %1329 = vmatpush2.xpose.msra.mxu0 0.0
      %1330 = vmatprep.subr.mxu0 0.0
      %1331 = vmatpush2.xpose.msra.mxu0 0.0
      %1332 = vmatprep.subr.mxu0 0.0
      %1333 = vmatpush2.xpose.msra.mxu0 0.0
      %1334 = vmatprep.subr.mxu0 0.0
      %1335 = vmatpush2.xpose.msra.mxu0 0.0
      %1336 = vmatprep.subr.mxu0 0.0
      %1337 = vmatpush2.xpose.msra.mxu0 0.0
      %1338 = vmatprep.subr.mxu0 0.0
      %1339 = vmatpush2.xpose.msra.mxu0 0.0
      %1340 = vmatprep.subr.mxu0 0.0
      %1341 = vmatpush2.xpose.msra.mxu0 0.0
      %1342 = vmatprep.subr.mxu0 0.0
      %1343 = vmatpush2.xpose.msra.mxu0 0.0
      %1344 = vmatprep.subr.mxu0 0.0
      %1345 = vmatpush2.xpose.msra.mxu0 0.0
      %1346 = vmatprep.subr.mxu0 0.0
      %1347 = vmatpush2.xpose.msra.mxu0 0.0
      %1348 = vmatprep.subr.mxu0 0.0
      %1349 = vmatpush2.xpose.msra.mxu0 0.0
      %1350 = vmatprep.subr.mxu0 0.0
      %1351 = vmatpush2.xpose.msra.mxu0 0.0
      %1352 = vmatprep.subr.mxu0 0.0
      %1353 = vmatpush2.xpose.msra.mxu0 0.0
      %1354 = vmatprep.subr.mxu0 0.0
      %1355 = vmatpush2.xpose.msra.mxu0 0.0
      %1356 = vmatprep.subr.mxu0 0.0
      %1357 = vmatpush2.xpose.msra.mxu0 0.0
      %1358 = vmatprep.mubr.f32.mxu0 0.0
      %1359 = vmatmul.mubr.f32.gmra.mxu0 %v1290
      %v1360 = vpop.f32.mrf.mxu0
      %v1361 = vadd.f32 0.0, %v1360
      %v1362 = vpop.f32.mrf.mxu0
      %1363 = vdwg.mxu0
      %v1364 = vmul.f32 %v822, 0.25
      %v1365 = vmul.f32 %v899, 0.25
      %v1366 = vmul.f32 %v976, 0.25
      %v1367 = vmul.f32 %v1053, 0.25
      %v1368 = vmul.f32 %v1130, 0.25
      %v1369 = vmul.f32 %v1207, 0.25
      %v1370 = vmul.f32 %v1284, 0.25
      %v1371 = vmul.f32 %v1361, 0.25
      %v1372 = vadd.f32 %v1364, %v739
      %v1373 = vadd.f32 %v1365, %v740
      %v1374 = vadd.f32 %v1366, %v741
      %v1375 = vadd.f32 %v1367, %v742
      %v1376 = vadd.f32 %v1368, %v743
      %v1377 = vadd.f32 %v1369, %v744
      %v1378 = vadd.f32 %v1370, %v745
      %v1379 = vadd.f32 %v1371, %v746
      %vm1380 = vcmask 64512
      %v1381 = vsel %vm1380, %v1372, -inf
      %1382 = vmax.xlane.f32.xlu0 %v1381
      %v1383 = vpop.xlane.xlu0 %1382
      %v1384 = vsel %vm1380, %v1373, -inf
      %1385 = vmax.xlane.f32.xlu0 %v1384
      %v1386 = vpop.xlane.xlu0 %1385
      %v1387 = vsel %vm1380, %v1374, -inf
      %1388 = vmax.xlane.f32.xlu0 %v1387
      %v1389 = vpop.xlane.xlu0 %1388
      %v1390 = vsel %vm1380, %v1375, -inf
      %1391 = vmax.xlane.f32.xlu0 %v1390
      %v1392 = vpop.xlane.xlu0 %1391
      %v1393 = vsel %vm1380, %v1376, -inf
      %1394 = vmax.xlane.f32.xlu0 %v1393
      %v1395 = vpop.xlane.xlu0 %1394
      %v1396 = vsel %vm1380, %v1377, -inf
      %1397 = vmax.xlane.f32.xlu0 %v1396
      %v1398 = vpop.xlane.xlu0 %1397
      %v1399 = vsel %vm1380, %v1378, -inf
      %1400 = vmax.xlane.f32.xlu0 %v1399
      %v1401 = vpop.xlane.xlu0 %1400
      %v1402 = vsel %vm1380, %v1379, -inf
      %1403 = vmax.xlane.f32.xlu0 %v1402
      %v1404 = vpop.xlane.xlu0 %1403
      %v1405 = vsub.f32 %v1372, %v1383
      %v1406 = vsub.f32 %v1373, %v1386
      %v1407 = vsub.f32 %v1374, %v1389
      %v1408 = vsub.f32 %v1375, %v1392
      %v1409 = vsub.f32 %v1376, %v1395
      %v1410 = vsub.f32 %v1377, %v1398
      %v1411 = vsub.f32 %v1378, %v1401
      %v1412 = vsub.f32 %v1379, %v1404
      %v1413 = vmul.f32 %v1405, 1.442695
      %v1414 = vpow.pop %v1413
      %v1415 = vmul.f32 %v1406, 1.442695
      %v1416 = vpow.pop %v1415
      %v1417 = vmul.f32 %v1407, 1.442695
      %v1418 = vpow.pop %v1417
      %v1419 = vmul.f32 %v1408, 1.442695
      %v1420 = vpow.pop %v1419
      %v1421 = vmul.f32 %v1409, 1.442695
      %v1422 = vpow.pop %v1421
      %v1423 = vmul.f32 %v1410, 1.442695
      %v1424 = vpow.pop %v1423
      %v1425 = vmul.f32 %v1411, 1.442695
      %v1426 = vpow.pop %v1425
      %v1427 = vmul.f32 %v1412, 1.442695
      %v1428 = vpow.pop %v1427
      %v1429 = vsel %vm1380, %v1414, 0.0
      %1430 = vadd.xlane.f32.xlu0 %v1429
      %v1431 = vpop.xlane.xlu0 %1430
      %v1432 = vsel %vm1380, %v1416, 0.0
      %1433 = vadd.xlane.f32.xlu0 %v1432
      %v1434 = vpop.xlane.xlu0 %1433
      %v1435 = vsel %vm1380, %v1418, 0.0
      %1436 = vadd.xlane.f32.xlu0 %v1435
      %v1437 = vpop.xlane.xlu0 %1436
      %v1438 = vsel %vm1380, %v1420, 0.0
      %1439 = vadd.xlane.f32.xlu0 %v1438
      %v1440 = vpop.xlane.xlu0 %1439
      %v1441 = vsel %vm1380, %v1422, 0.0
      %1442 = vadd.xlane.f32.xlu0 %v1441
      %v1443 = vpop.xlane.xlu0 %1442
      %v1444 = vsel %vm1380, %v1424, 0.0
      %1445 = vadd.xlane.f32.xlu0 %v1444
      %v1446 = vpop.xlane.xlu0 %1445
      %v1447 = vsel %vm1380, %v1426, 0.0
      %1448 = vadd.xlane.f32.xlu0 %v1447
      %v1449 = vpop.xlane.xlu0 %1448
      %v1450 = vsel %vm1380, %v1428, 0.0
      %1451 = vadd.xlane.f32.xlu0 %v1450
      %v1452 = vpop.xlane.xlu0 %1451
      %v1453 = vrcp.pop %v1431
      %v1454 = vrcp.pop %v1434
      %v1455 = vrcp.pop %v1437
      %v1456 = vrcp.pop %v1440
      %v1457 = vrcp.pop %v1443
      %v1458 = vrcp.pop %v1446
      %v1459 = vrcp.pop %v1449
      %v1460 = vrcp.pop %v1452
      %v1461 = vmul.f32 %v1414, %v1453
      %v1462 = vmul.f32 %v1416, %v1454
      %v1463 = vmul.f32 %v1418, %v1455
      %v1464 = vmul.f32 %v1420, %v1456
      %v1465 = vmul.f32 %v1422, %v1457
      %v1466 = vmul.f32 %v1424, %v1458
      %v1467 = vmul.f32 %v1426, %v1459
      %v1468 = vmul.f32 %v1428, %v1460
      %1469 = vrot.lane.b32.xlu0 %v538, 64
      %v1470 = vpop.permute.xlu0 %1469
      %v1473 = vsel %vm1380, %v1461, 0
      %1475 = vmatprep.subr.mxu0 0.0
      %1476 = vmatpush1.msra.mxu0 0.0
      %1477 = vmatprep.subr.mxu0 0.0
      %1478 = vmatpush1.msra.mxu0 0.0
      %1479 = vmatprep.subr.mxu0 0.0
      %1480 = vmatpush1.msra.mxu0 0.0
      %1481 = vmatprep.subr.mxu0 0.0
      %1482 = vmatpush1.msra.mxu0 0.0
      %1483 = vmatprep.subr.mxu0 0.0
      %1484 = vmatpush1.msra.mxu0 0.0
      %1485 = vmatprep.subr.mxu0 0.0
      %1486 = vmatpush1.msra.mxu0 0.0
      %1487 = vmatprep.subr.mxu0 0.0
      %1488 = vmatpush1.msra.mxu0 0.0
      %1489 = vmatprep.subr.mxu0 0.0
      %1490 = vmatpush1.msra.mxu0 0.0
      %1491 = vmatprep.subr.mxu0 0.0
      %1492 = vmatpush1.msra.mxu0 0.0
      %1493 = vmatprep.subr.mxu0 0.0
      %1494 = vmatpush1.msra.mxu0 0.0
      %1495 = vmatprep.subr.mxu0 0.0
      %1496 = vmatpush1.msra.mxu0 0.0
      %1497 = vmatprep.subr.mxu0 0.0
      %1498 = vmatpush1.msra.mxu0 0.0
      %1499 = vmatprep.subr.mxu0 0.0
      %1500 = vmatpush1.msra.mxu0 0.0
      %1501 = vmatprep.subr.mxu0 0.0
      %1502 = vmatpush1.msra.mxu0 0.0
      %1503 = vmatprep.subr.mxu0 0.0
      %1504 = vmatpush1.msra.mxu0 0.0
      %1505 = vmatprep.subr.mxu0 0.0
      %1506 = vmatpush1.msra.mxu0 %v1470
      %1507 = vmatprep.subr.mxu0 0.0
      %1508 = vmatpush2.msra.mxu0 0.0
      %1509 = vmatprep.subr.mxu0 0.0
      %1510 = vmatpush2.msra.mxu0 0.0
      %1511 = vmatprep.subr.mxu0 0.0
      %1512 = vmatpush2.msra.mxu0 0.0
      %1513 = vmatprep.subr.mxu0 0.0
      %1514 = vmatpush2.msra.mxu0 0.0
      %1515 = vmatprep.subr.mxu0 0.0
      %1516 = vmatpush2.msra.mxu0 0.0
      %1517 = vmatprep.subr.mxu0 0.0
      %1518 = vmatpush2.msra.mxu0 0.0
      %1519 = vmatprep.subr.mxu0 0.0
      %1520 = vmatpush2.msra.mxu0 0.0
      %1521 = vmatprep.subr.mxu0 0.0
      %1522 = vmatpush2.msra.mxu0 0.0
      %1523 = vmatprep.subr.mxu0 0.0
      %1524 = vmatpush2.msra.mxu0 0.0
      %1525 = vmatprep.subr.mxu0 0.0
      %1526 = vmatpush2.msra.mxu0 0.0
      %1527 = vmatprep.subr.mxu0 0.0
      %1528 = vmatpush2.msra.mxu0 0.0
      %1529 = vmatprep.subr.mxu0 0.0
      %1530 = vmatpush2.msra.mxu0 0.0
      %1531 = vmatprep.subr.mxu0 0.0
      %1532 = vmatpush2.msra.mxu0 0.0
      %1533 = vmatprep.subr.mxu0 0.0
      %1534 = vmatpush2.msra.mxu0 0.0
      %1535 = vmatprep.subr.mxu0 0.0
      %1536 = vmatpush2.msra.mxu0 0.0
      %1537 = vmatprep.subr.mxu0 0.0
      %1538 = vmatpush2.msra.mxu0 0.0
      %1539 = vmatprep.mubr.f32.mxu0 0.0
      %1540 = vmatmul.mubr.f32.gmra.mxu0 %v1473
      %v1541 = vpop.f32.mrf.mxu0
      %v1542 = vadd.f32 0.0, %v1541
      %v1543 = vpop.f32.mrf.mxu0
      %1544 = vdwg.mxu0
      %1545 = vrot.lane.b32.xlu0 %v543, 64
      %v1546 = vpop.permute.xlu0 %1545
      %v1549 = vsel %vm1380, %v1462, 0
      %1551 = vmatprep.subr.mxu0 0.0
      %1552 = vmatpush1.msra.mxu0 0.0
      %1553 = vmatprep.subr.mxu0 0.0
      %1554 = vmatpush1.msra.mxu0 0.0
      %1555 = vmatprep.subr.mxu0 0.0
      %1556 = vmatpush1.msra.mxu0 0.0
      %1557 = vmatprep.subr.mxu0 0.0
      %1558 = vmatpush1.msra.mxu0 0.0
      %1559 = vmatprep.subr.mxu0 0.0
      %1560 = vmatpush1.msra.mxu0 0.0
      %1561 = vmatprep.subr.mxu0 0.0
      %1562 = vmatpush1.msra.mxu0 0.0
      %1563 = vmatprep.subr.mxu0 0.0
      %1564 = vmatpush1.msra.mxu0 0.0
      %1565 = vmatprep.subr.mxu0 0.0
      %1566 = vmatpush1.msra.mxu0 0.0
      %1567 = vmatprep.subr.mxu0 0.0
      %1568 = vmatpush1.msra.mxu0 0.0
      %1569 = vmatprep.subr.mxu0 0.0
      %1570 = vmatpush1.msra.mxu0 0.0
      %1571 = vmatprep.subr.mxu0 0.0
      %1572 = vmatpush1.msra.mxu0 0.0
      %1573 = vmatprep.subr.mxu0 0.0
      %1574 = vmatpush1.msra.mxu0 0.0
      %1575 = vmatprep.subr.mxu0 0.0
      %1576 = vmatpush1.msra.mxu0 0.0
      %1577 = vmatprep.subr.mxu0 0.0
      %1578 = vmatpush1.msra.mxu0 0.0
      %1579 = vmatprep.subr.mxu0 0.0
      %1580 = vmatpush1.msra.mxu0 0.0
      %1581 = vmatprep.subr.mxu0 0.0
      %1582 = vmatpush1.msra.mxu0 %v1546
      %1583 = vmatprep.subr.mxu0 0.0
      %1584 = vmatpush2.msra.mxu0 0.0
      %1585 = vmatprep.subr.mxu0 0.0
      %1586 = vmatpush2.msra.mxu0 0.0
      %1587 = vmatprep.subr.mxu0 0.0
      %1588 = vmatpush2.msra.mxu0 0.0
      %1589 = vmatprep.subr.mxu0 0.0
      %1590 = vmatpush2.msra.mxu0 0.0
      %1591 = vmatprep.subr.mxu0 0.0
      %1592 = vmatpush2.msra.mxu0 0.0
      %1593 = vmatprep.subr.mxu0 0.0
      %1594 = vmatpush2.msra.mxu0 0.0
      %1595 = vmatprep.subr.mxu0 0.0
      %1596 = vmatpush2.msra.mxu0 0.0
      %1597 = vmatprep.subr.mxu0 0.0
      %1598 = vmatpush2.msra.mxu0 0.0
      %1599 = vmatprep.subr.mxu0 0.0
      %1600 = vmatpush2.msra.mxu0 0.0
      %1601 = vmatprep.subr.mxu0 0.0
      %1602 = vmatpush2.msra.mxu0 0.0
      %1603 = vmatprep.subr.mxu0 0.0
      %1604 = vmatpush2.msra.mxu0 0.0
      %1605 = vmatprep.subr.mxu0 0.0
      %1606 = vmatpush2.msra.mxu0 0.0
      %1607 = vmatprep.subr.mxu0 0.0
      %1608 = vmatpush2.msra.mxu0 0.0
      %1609 = vmatprep.subr.mxu0 0.0
      %1610 = vmatpush2.msra.mxu0 0.0
      %1611 = vmatprep.subr.mxu0 0.0
      %1612 = vmatpush2.msra.mxu0 0.0
      %1613 = vmatprep.subr.mxu0 0.0
      %1614 = vmatpush2.msra.mxu0 0.0
      %1615 = vmatprep.mubr.f32.mxu0 0.0
      %1616 = vmatmul.mubr.f32.gmra.mxu0 %v1549
      %v1617 = vpop.f32.mrf.mxu0
      %v1618 = vadd.f32 0.0, %v1617
      %v1619 = vpop.f32.mrf.mxu0
      %1620 = vdwg.mxu0
      %1621 = vrot.lane.b32.xlu0 %v548, 64
      %v1622 = vpop.permute.xlu0 %1621
      %v1625 = vsel %vm1380, %v1463, 0
      %1627 = vmatprep.subr.mxu0 0.0
      %1628 = vmatpush1.msra.mxu0 0.0
      %1629 = vmatprep.subr.mxu0 0.0
      %1630 = vmatpush1.msra.mxu0 0.0
      %1631 = vmatprep.subr.mxu0 0.0
      %1632 = vmatpush1.msra.mxu0 0.0
      %1633 = vmatprep.subr.mxu0 0.0
      %1634 = vmatpush1.msra.mxu0 0.0
      %1635 = vmatprep.subr.mxu0 0.0
      %1636 = vmatpush1.msra.mxu0 0.0
      %1637 = vmatprep.subr.mxu0 0.0
      %1638 = vmatpush1.msra.mxu0 0.0
      %1639 = vmatprep.subr.mxu0 0.0
      %1640 = vmatpush1.msra.mxu0 0.0
      %1641 = vmatprep.subr.mxu0 0.0
      %1642 = vmatpush1.msra.mxu0 0.0
      %1643 = vmatprep.subr.mxu0 0.0
      %1644 = vmatpush1.msra.mxu0 0.0
      %1645 = vmatprep.subr.mxu0 0.0
      %1646 = vmatpush1.msra.mxu0 0.0
      %1647 = vmatprep.subr.mxu0 0.0
      %1648 = vmatpush1.msra.mxu0 0.0
      %1649 = vmatprep.subr.mxu0 0.0
      %1650 = vmatpush1.msra.mxu0 0.0
      %1651 = vmatprep.subr.mxu0 0.0
      %1652 = vmatpush1.msra.mxu0 0.0
      %1653 = vmatprep.subr.mxu0 0.0
      %1654 = vmatpush1.msra.mxu0 0.0
      %1655 = vmatprep.subr.mxu0 0.0
      %1656 = vmatpush1.msra.mxu0 0.0
      %1657 = vmatprep.subr.mxu0 0.0
      %1658 = vmatpush1.msra.mxu0 %v1622
      %1659 = vmatprep.subr.mxu0 0.0
      %1660 = vmatpush2.msra.mxu0 0.0
      %1661 = vmatprep.subr.mxu0 0.0
      %1662 = vmatpush2.msra.mxu0 0.0
      %1663 = vmatprep.subr.mxu0 0.0
      %1664 = vmatpush2.msra.mxu0 0.0
      %1665 = vmatprep.subr.mxu0 0.0
      %1666 = vmatpush2.msra.mxu0 0.0
      %1667 = vmatprep.subr.mxu0 0.0
      %1668 = vmatpush2.msra.mxu0 0.0
      %1669 = vmatprep.subr.mxu0 0.0
      %1670 = vmatpush2.msra.mxu0 0.0
      %1671 = vmatprep.subr.mxu0 0.0
      %1672 = vmatpush2.msra.mxu0 0.0
      %1673 = vmatprep.subr.mxu0 0.0
      %1674 = vmatpush2.msra.mxu0 0.0
      %1675 = vmatprep.subr.mxu0 0.0
      %1676 = vmatpush2.msra.mxu0 0.0
      %1677 = vmatprep.subr.mxu0 0.0
      %1678 = vmatpush2.msra.mxu0 0.0
      %1679 = vmatprep.subr.mxu0 0.0
      %1680 = vmatpush2.msra.mxu0 0.0
      %1681 = vmatprep.subr.mxu0 0.0
      %1682 = vmatpush2.msra.mxu0 0.0
      %1683 = vmatprep.subr.mxu0 0.0
      %1684 = vmatpush2.msra.mxu0 0.0
      %1685 = vmatprep.subr.mxu0 0.0
      %1686 = vmatpush2.msra.mxu0 0.0
      %1687 = vmatprep.subr.mxu0 0.0
      %1688 = vmatpush2.msra.mxu0 0.0
      %1689 = vmatprep.subr.mxu0 0.0
      %1690 = vmatpush2.msra.mxu0 0.0
      %1691 = vmatprep.mubr.f32.mxu0 0.0
      %1692 = vmatmul.mubr.f32.gmra.mxu0 %v1625
      %v1693 = vpop.f32.mrf.mxu0
      %v1694 = vadd.f32 0.0, %v1693
      %v1695 = vpop.f32.mrf.mxu0
      %1696 = vdwg.mxu0
      %1697 = vrot.lane.b32.xlu0 %v553, 64
      %v1698 = vpop.permute.xlu0 %1697
      %v1701 = vsel %vm1380, %v1464, 0
      %1703 = vmatprep.subr.mxu0 0.0
      %1704 = vmatpush1.msra.mxu0 0.0
      %1705 = vmatprep.subr.mxu0 0.0
      %1706 = vmatpush1.msra.mxu0 0.0
      %1707 = vmatprep.subr.mxu0 0.0
      %1708 = vmatpush1.msra.mxu0 0.0
      %1709 = vmatprep.subr.mxu0 0.0
      %1710 = vmatpush1.msra.mxu0 0.0
      %1711 = vmatprep.subr.mxu0 0.0
      %1712 = vmatpush1.msra.mxu0 0.0
      %1713 = vmatprep.subr.mxu0 0.0
      %1714 = vmatpush1.msra.mxu0 0.0
      %1715 = vmatprep.subr.mxu0 0.0
      %1716 = vmatpush1.msra.mxu0 0.0
      %1717 = vmatprep.subr.mxu0 0.0
      %1718 = vmatpush1.msra.mxu0 0.0
      %1719 = vmatprep.subr.mxu0 0.0
      %1720 = vmatpush1.msra.mxu0 0.0
      %1721 = vmatprep.subr.mxu0 0.0
      %1722 = vmatpush1.msra.mxu0 0.0
      %1723 = vmatprep.subr.mxu0 0.0
      %1724 = vmatpush1.msra.mxu0 0.0
      %1725 = vmatprep.subr.mxu0 0.0
      %1726 = vmatpush1.msra.mxu0 0.0
      %1727 = vmatprep.subr.mxu0 0.0
      %1728 = vmatpush1.msra.mxu0 0.0
      %1729 = vmatprep.subr.mxu0 0.0
      %1730 = vmatpush1.msra.mxu0 0.0
      %1731 = vmatprep.subr.mxu0 0.0
      %1732 = vmatpush1.msra.mxu0 0.0
      %1733 = vmatprep.subr.mxu0 0.0
      %1734 = vmatpush1.msra.mxu0 %v1698
      %1735 = vmatprep.subr.mxu0 0.0
      %1736 = vmatpush2.msra.mxu0 0.0
      %1737 = vmatprep.subr.mxu0 0.0
      %1738 = vmatpush2.msra.mxu0 0.0
      %1739 = vmatprep.subr.mxu0 0.0
      %1740 = vmatpush2.msra.mxu0 0.0
      %1741 = vmatprep.subr.mxu0 0.0
      %1742 = vmatpush2.msra.mxu0 0.0
      %1743 = vmatprep.subr.mxu0 0.0
      %1744 = vmatpush2.msra.mxu0 0.0
      %1745 = vmatprep.subr.mxu0 0.0
      %1746 = vmatpush2.msra.mxu0 0.0
      %1747 = vmatprep.subr.mxu0 0.0
      %1748 = vmatpush2.msra.mxu0 0.0
      %1749 = vmatprep.subr.mxu0 0.0
      %1750 = vmatpush2.msra.mxu0 0.0
      %1751 = vmatprep.subr.mxu0 0.0
      %1752 = vmatpush2.msra.mxu0 0.0
      %1753 = vmatprep.subr.mxu0 0.0
      %1754 = vmatpush2.msra.mxu0 0.0
      %1755 = vmatprep.subr.mxu0 0.0
      %1756 = vmatpush2.msra.mxu0 0.0
      %1757 = vmatprep.subr.mxu0 0.0
      %1758 = vmatpush2.msra.mxu0 0.0
      %1759 = vmatprep.subr.mxu0 0.0
      %1760 = vmatpush2.msra.mxu0 0.0
      %1761 = vmatprep.subr.mxu0 0.0
      %1762 = vmatpush2.msra.mxu0 0.0
      %1763 = vmatprep.subr.mxu0 0.0
      %1764 = vmatpush2.msra.mxu0 0.0
      %1765 = vmatprep.subr.mxu0 0.0
      %1766 = vmatpush2.msra.mxu0 0.0
      %1767 = vmatprep.mubr.f32.mxu0 0.0
      %1768 = vmatmul.mubr.f32.gmra.mxu0 %v1701
      %v1769 = vpop.f32.mrf.mxu0
      %v1770 = vadd.f32 0.0, %v1769
      %v1771 = vpop.f32.mrf.mxu0
      %1772 = vdwg.mxu0
      %1773 = vrot.lane.b32.xlu0 %v558, 64
      %v1774 = vpop.permute.xlu0 %1773
      %v1777 = vsel %vm1380, %v1465, 0
      %1779 = vmatprep.subr.mxu0 0.0
      %1780 = vmatpush1.msra.mxu0 0.0
      %1781 = vmatprep.subr.mxu0 0.0
      %1782 = vmatpush1.msra.mxu0 0.0
      %1783 = vmatprep.subr.mxu0 0.0
      %1784 = vmatpush1.msra.mxu0 0.0
      %1785 = vmatprep.subr.mxu0 0.0
      %1786 = vmatpush1.msra.mxu0 0.0
      %1787 = vmatprep.subr.mxu0 0.0
      %1788 = vmatpush1.msra.mxu0 0.0
      %1789 = vmatprep.subr.mxu0 0.0
      %1790 = vmatpush1.msra.mxu0 0.0
      %1791 = vmatprep.subr.mxu0 0.0
      %1792 = vmatpush1.msra.mxu0 0.0
      %1793 = vmatprep.subr.mxu0 0.0
      %1794 = vmatpush1.msra.mxu0 0.0
      %1795 = vmatprep.subr.mxu0 0.0
      %1796 = vmatpush1.msra.mxu0 0.0
      %1797 = vmatprep.subr.mxu0 0.0
      %1798 = vmatpush1.msra.mxu0 0.0
      %1799 = vmatprep.subr.mxu0 0.0
      %1800 = vmatpush1.msra.mxu0 0.0
      %1801 = vmatprep.subr.mxu0 0.0
      %1802 = vmatpush1.msra.mxu0 0.0
      %1803 = vmatprep.subr.mxu0 0.0
      %1804 = vmatpush1.msra.mxu0 0.0
      %1805 = vmatprep.subr.mxu0 0.0
      %1806 = vmatpush1.msra.mxu0 0.0
      %1807 = vmatprep.subr.mxu0 0.0
      %1808 = vmatpush1.msra.mxu0 0.0
      %1809 = vmatprep.subr.mxu0 0.0
      %1810 = vmatpush1.msra.mxu0 %v1774
      %1811 = vmatprep.subr.mxu0 0.0
      %1812 = vmatpush2.msra.mxu0 0.0
      %1813 = vmatprep.subr.mxu0 0.0
      %1814 = vmatpush2.msra.mxu0 0.0
      %1815 = vmatprep.subr.mxu0 0.0
      %1816 = vmatpush2.msra.mxu0 0.0
      %1817 = vmatprep.subr.mxu0 0.0
      %1818 = vmatpush2.msra.mxu0 0.0
      %1819 = vmatprep.subr.mxu0 0.0
      %1820 = vmatpush2.msra.mxu0 0.0
      %1821 = vmatprep.subr.mxu0 0.0
      %1822 = vmatpush2.msra.mxu0 0.0
      %1823 = vmatprep.subr.mxu0 0.0
      %1824 = vmatpush2.msra.mxu0 0.0
      %1825 = vmatprep.subr.mxu0 0.0
      %1826 = vmatpush2.msra.mxu0 0.0
      %1827 = vmatprep.subr.mxu0 0.0
      %1828 = vmatpush2.msra.mxu0 0.0
      %1829 = vmatprep.subr.mxu0 0.0
      %1830 = vmatpush2.msra.mxu0 0.0
      %1831 = vmatprep.subr.mxu0 0.0
      %1832 = vmatpush2.msra.mxu0 0.0
      %1833 = vmatprep.subr.mxu0 0.0
      %1834 = vmatpush2.msra.mxu0 0.0
      %1835 = vmatprep.subr.mxu0 0.0
      %1836 = vmatpush2.msra.mxu0 0.0
      %1837 = vmatprep.subr.mxu0 0.0
      %1838 = vmatpush2.msra.mxu0 0.0
      %1839 = vmatprep.subr.mxu0 0.0
      %1840 = vmatpush2.msra.mxu0 0.0
      %1841 = vmatprep.subr.mxu0 0.0
      %1842 = vmatpush2.msra.mxu0 0.0
      %1843 = vmatprep.mubr.f32.mxu0 0.0
      %1844 = vmatmul.mubr.f32.gmra.mxu0 %v1777
      %v1845 = vpop.f32.mrf.mxu0
      %v1846 = vadd.f32 0.0, %v1845
      %v1847 = vpop.f32.mrf.mxu0
      %1848 = vdwg.mxu0
      %1849 = vrot.lane.b32.xlu0 %v563, 64
      %v1850 = vpop.permute.xlu0 %1849
      %v1853 = vsel %vm1380, %v1466, 0
      %1855 = vmatprep.subr.mxu0 0.0
      %1856 = vmatpush1.msra.mxu0 0.0
      %1857 = vmatprep.subr.mxu0 0.0
      %1858 = vmatpush1.msra.mxu0 0.0
      %1859 = vmatprep.subr.mxu0 0.0
      %1860 = vmatpush1.msra.mxu0 0.0
      %1861 = vmatprep.subr.mxu0 0.0
      %1862 = vmatpush1.msra.mxu0 0.0
      %1863 = vmatprep.subr.mxu0 0.0
      %1864 = vmatpush1.msra.mxu0 0.0
      %1865 = vmatprep.subr.mxu0 0.0
      %1866 = vmatpush1.msra.mxu0 0.0
      %1867 = vmatprep.subr.mxu0 0.0
      %1868 = vmatpush1.msra.mxu0 0.0
      %1869 = vmatprep.subr.mxu0 0.0
      %1870 = vmatpush1.msra.mxu0 0.0
      %1871 = vmatprep.subr.mxu0 0.0
      %1872 = vmatpush1.msra.mxu0 0.0
      %1873 = vmatprep.subr.mxu0 0.0
      %1874 = vmatpush1.msra.mxu0 0.0
      %1875 = vmatprep.subr.mxu0 0.0
      %1876 = vmatpush1.msra.mxu0 0.0
      %1877 = vmatprep.subr.mxu0 0.0
      %1878 = vmatpush1.msra.mxu0 0.0
      %1879 = vmatprep.subr.mxu0 0.0
      %1880 = vmatpush1.msra.mxu0 0.0
      %1881 = vmatprep.subr.mxu0 0.0
      %1882 = vmatpush1.msra.mxu0 0.0
      %1883 = vmatprep.subr.mxu0 0.0
      %1884 = vmatpush1.msra.mxu0 0.0
      %1885 = vmatprep.subr.mxu0 0.0
      %1886 = vmatpush1.msra.mxu0 %v1850
      %1887 = vmatprep.subr.mxu0 0.0
      %1888 = vmatpush2.msra.mxu0 0.0
      %1889 = vmatprep.subr.mxu0 0.0
      %1890 = vmatpush2.msra.mxu0 0.0
      %1891 = vmatprep.subr.mxu0 0.0
      %1892 = vmatpush2.msra.mxu0 0.0
      %1893 = vmatprep.subr.mxu0 0.0
      %1894 = vmatpush2.msra.mxu0 0.0
      %1895 = vmatprep.subr.mxu0 0.0
      %1896 = vmatpush2.msra.mxu0 0.0
      %1897 = vmatprep.subr.mxu0 0.0
      %1898 = vmatpush2.msra.mxu0 0.0
      %1899 = vmatprep.subr.mxu0 0.0
      %1900 = vmatpush2.msra.mxu0 0.0
      %1901 = vmatprep.subr.mxu0 0.0
      %1902 = vmatpush2.msra.mxu0 0.0
      %1903 = vmatprep.subr.mxu0 0.0
      %1904 = vmatpush2.msra.mxu0 0.0
      %1905 = vmatprep.subr.mxu0 0.0
      %1906 = vmatpush2.msra.mxu0 0.0
      %1907 = vmatprep.subr.mxu0 0.0
      %1908 = vmatpush2.msra.mxu0 0.0
      %1909 = vmatprep.subr.mxu0 0.0
      %1910 = vmatpush2.msra.mxu0 0.0
      %1911 = vmatprep.subr.mxu0 0.0
      %1912 = vmatpush2.msra.mxu0 0.0
      %1913 = vmatprep.subr.mxu0 0.0
      %1914 = vmatpush2.msra.mxu0 0.0
      %1915 = vmatprep.subr.mxu0 0.0
      %1916 = vmatpush2.msra.mxu0 0.0
      %1917 = vmatprep.subr.mxu0 0.0
      %1918 = vmatpush2.msra.mxu0 0.0
      %1919 = vmatprep.mubr.f32.mxu0 0.0
      %1920 = vmatmul.mubr.f32.gmra.mxu0 %v1853
      %v1921 = vpop.f32.mrf.mxu0
      %v1922 = vadd.f32 0.0, %v1921
      %v1923 = vpop.f32.mrf.mxu0
      %1924 = vdwg.mxu0
      %1925 = vrot.lane.b32.xlu0 %v568, 64
      %v1926 = vpop.permute.xlu0 %1925
      %v1929 = vsel %vm1380, %v1467, 0
      %1931 = vmatprep.subr.mxu0 0.0
      %1932 = vmatpush1.msra.mxu0 0.0
      %1933 = vmatprep.subr.mxu0 0.0
      %1934 = vmatpush1.msra.mxu0 0.0
      %1935 = vmatprep.subr.mxu0 0.0
      %1936 = vmatpush1.msra.mxu0 0.0
      %1937 = vmatprep.subr.mxu0 0.0
      %1938 = vmatpush1.msra.mxu0 0.0
      %1939 = vmatprep.subr.mxu0 0.0
      %1940 = vmatpush1.msra.mxu0 0.0
      %1941 = vmatprep.subr.mxu0 0.0
      %1942 = vmatpush1.msra.mxu0 0.0
      %1943 = vmatprep.subr.mxu0 0.0
      %1944 = vmatpush1.msra.mxu0 0.0
      %1945 = vmatprep.subr.mxu0 0.0
      %1946 = vmatpush1.msra.mxu0 0.0
      %1947 = vmatprep.subr.mxu0 0.0
      %1948 = vmatpush1.msra.mxu0 0.0
      %1949 = vmatprep.subr.mxu0 0.0
      %1950 = vmatpush1.msra.mxu0 0.0
      %1951 = vmatprep.subr.mxu0 0.0
      %1952 = vmatpush1.msra.mxu0 0.0
      %1953 = vmatprep.subr.mxu0 0.0
      %1954 = vmatpush1.msra.mxu0 0.0
      %1955 = vmatprep.subr.mxu0 0.0
      %1956 = vmatpush1.msra.mxu0 0.0
      %1957 = vmatprep.subr.mxu0 0.0
      %1958 = vmatpush1.msra.mxu0 0.0
      %1959 = vmatprep.subr.mxu0 0.0
      %1960 = vmatpush1.msra.mxu0 0.0
      %1961 = vmatprep.subr.mxu0 0.0
      %1962 = vmatpush1.msra.mxu0 %v1926
      %1963 = vmatprep.subr.mxu0 0.0
      %1964 = vmatpush2.msra.mxu0 0.0
      %1965 = vmatprep.subr.mxu0 0.0
      %1966 = vmatpush2.msra.mxu0 0.0
      %1967 = vmatprep.subr.mxu0 0.0
      %1968 = vmatpush2.msra.mxu0 0.0
      %1969 = vmatprep.subr.mxu0 0.0
      %1970 = vmatpush2.msra.mxu0 0.0
      %1971 = vmatprep.subr.mxu0 0.0
      %1972 = vmatpush2.msra.mxu0 0.0
      %1973 = vmatprep.subr.mxu0 0.0
      %1974 = vmatpush2.msra.mxu0 0.0
      %1975 = vmatprep.subr.mxu0 0.0
      %1976 = vmatpush2.msra.mxu0 0.0
      %1977 = vmatprep.subr.mxu0 0.0
      %1978 = vmatpush2.msra.mxu0 0.0
      %1979 = vmatprep.subr.mxu0 0.0
      %1980 = vmatpush2.msra.mxu0 0.0
      %1981 = vmatprep.subr.mxu0 0.0
      %1982 = vmatpush2.msra.mxu0 0.0
      %1983 = vmatprep.subr.mxu0 0.0
      %1984 = vmatpush2.msra.mxu0 0.0
      %1985 = vmatprep.subr.mxu0 0.0
      %1986 = vmatpush2.msra.mxu0 0.0
      %1987 = vmatprep.subr.mxu0 0.0
      %1988 = vmatpush2.msra.mxu0 0.0
      %1989 = vmatprep.subr.mxu0 0.0
      %1990 = vmatpush2.msra.mxu0 0.0
      %1991 = vmatprep.subr.mxu0 0.0
      %1992 = vmatpush2.msra.mxu0 0.0
      %1993 = vmatprep.subr.mxu0 0.0
      %1994 = vmatpush2.msra.mxu0 0.0
      %1995 = vmatprep.mubr.f32.mxu0 0.0
      %1996 = vmatmul.mubr.f32.gmra.mxu0 %v1929
      %v1997 = vpop.f32.mrf.mxu0
      %v1998 = vadd.f32 0.0, %v1997
      %v1999 = vpop.f32.mrf.mxu0
      %2000 = vdwg.mxu0
      %2001 = vrot.lane.b32.xlu0 %v573, 64
      %v2002 = vpop.permute.xlu0 %2001
      %v2005 = vsel %vm1380, %v1468, 0
      %2007 = vmatprep.subr.mxu0 0.0
      %2008 = vmatpush1.msra.mxu0 0.0
      %2009 = vmatprep.subr.mxu0 0.0
      %2010 = vmatpush1.msra.mxu0 0.0
      %2011 = vmatprep.subr.mxu0 0.0
      %2012 = vmatpush1.msra.mxu0 0.0
      %2013 = vmatprep.subr.mxu0 0.0
      %2014 = vmatpush1.msra.mxu0 0.0
      %2015 = vmatprep.subr.mxu0 0.0
      %2016 = vmatpush1.msra.mxu0 0.0
      %2017 = vmatprep.subr.mxu0 0.0
      %2018 = vmatpush1.msra.mxu0 0.0
      %2019 = vmatprep.subr.mxu0 0.0
      %2020 = vmatpush1.msra.mxu0 0.0
      %2021 = vmatprep.subr.mxu0 0.0
      %2022 = vmatpush1.msra.mxu0 0.0
      %2023 = vmatprep.subr.mxu0 0.0
      %2024 = vmatpush1.msra.mxu0 0.0
      %2025 = vmatprep.subr.mxu0 0.0
      %2026 = vmatpush1.msra.mxu0 0.0
      %2027 = vmatprep.subr.mxu0 0.0
      %2028 = vmatpush1.msra.mxu0 0.0
      %2029 = vmatprep.subr.mxu0 0.0
      %2030 = vmatpush1.msra.mxu0 0.0
      %2031 = vmatprep.subr.mxu0 0.0
      %2032 = vmatpush1.msra.mxu0 0.0
      %2033 = vmatprep.subr.mxu0 0.0
      %2034 = vmatpush1.msra.mxu0 0.0
      %2035 = vmatprep.subr.mxu0 0.0
      %2036 = vmatpush1.msra.mxu0 0.0
      %2037 = vmatprep.subr.mxu0 0.0
      %2038 = vmatpush1.msra.mxu0 %v2002
      %2039 = vmatprep.subr.mxu0 0.0
      %2040 = vmatpush2.msra.mxu0 0.0
      %2041 = vmatprep.subr.mxu0 0.0
      %2042 = vmatpush2.msra.mxu0 0.0
      %2043 = vmatprep.subr.mxu0 0.0
      %2044 = vmatpush2.msra.mxu0 0.0
      %2045 = vmatprep.subr.mxu0 0.0
      %2046 = vmatpush2.msra.mxu0 0.0
      %2047 = vmatprep.subr.mxu0 0.0
      %2048 = vmatpush2.msra.mxu0 0.0
      %2049 = vmatprep.subr.mxu0 0.0
      %2050 = vmatpush2.msra.mxu0 0.0
      %2051 = vmatprep.subr.mxu0 0.0
      %2052 = vmatpush2.msra.mxu0 0.0
      %2053 = vmatprep.subr.mxu0 0.0
      %2054 = vmatpush2.msra.mxu0 0.0
      %2055 = vmatprep.subr.mxu0 0.0
      %2056 = vmatpush2.msra.mxu0 0.0
      %2057 = vmatprep.subr.mxu0 0.0
      %2058 = vmatpush2.msra.mxu0 0.0
      %2059 = vmatprep.subr.mxu0 0.0
      %2060 = vmatpush2.msra.mxu0 0.0
      %2061 = vmatprep.subr.mxu0 0.0
      %2062 = vmatpush2.msra.mxu0 0.0
      %2063 = vmatprep.subr.mxu0 0.0
      %2064 = vmatpush2.msra.mxu0 0.0
      %2065 = vmatprep.subr.mxu0 0.0
      %2066 = vmatpush2.msra.mxu0 0.0
      %2067 = vmatprep.subr.mxu0 0.0
      %2068 = vmatpush2.msra.mxu0 0.0
      %2069 = vmatprep.subr.mxu0 0.0
      %2070 = vmatpush2.msra.mxu0 0.0
      %2071 = vmatprep.mubr.f32.mxu0 0.0
      %2072 = vmatmul.mubr.f32.gmra.mxu0 %v2005
      %v2073 = vpop.f32.mrf.mxu0
      %v2074 = vadd.f32 0.0, %v2073
      %v2075 = vpop.f32.mrf.mxu0
      %2076 = vdwg.mxu0
      %v2077 = vld [vmem:[%s5] sm:$0xff]
      %v2078 = vld [vmem:[%s5 + $0x8] sm:$0xff]
      %2079 = vrot.lane.b32.xlu0 %v538, 112
      %v2080 = vpop.permute.xlu0 %2079
      %2081 = vrot.lane.b32.xlu0 %v538, 80
      %v2082 = vpop.permute.xlu0 %2081
      %v2083 = vsel %vm750, %v2080, 0
      %v2085 = vsel %vm750, %v2082, 0
      %2087 = vmatprep.subr.mxu0 0.0
      %2088 = vmatpush1.xpose.msra.mxu0 0.0
      %2089 = vmatprep.subr.mxu0 0.0
      %2090 = vmatpush1.xpose.msra.mxu0 0.0
      %2091 = vmatprep.subr.mxu0 0.0
      %2092 = vmatpush1.xpose.msra.mxu0 0.0
      %2093 = vmatprep.subr.mxu0 0.0
      %2094 = vmatpush1.xpose.msra.mxu0 0.0
      %2095 = vmatprep.subr.mxu0 0.0
      %2096 = vmatpush1.xpose.msra.mxu0 0.0
      %2097 = vmatprep.subr.mxu0 0.0
      %2098 = vmatpush1.xpose.msra.mxu0 0.0
      %2099 = vmatprep.subr.mxu0 0.0
      %2100 = vmatpush1.xpose.msra.mxu0 0.0
      %2101 = vmatprep.subr.mxu0 0.0
      %2102 = vmatpush1.xpose.msra.mxu0 0.0
      %2103 = vmatprep.subr.mxu0 0.0
      %2104 = vmatpush1.xpose.msra.mxu0 0.0
      %2105 = vmatprep.subr.mxu0 0.0
      %2106 = vmatpush1.xpose.msra.mxu0 0.0
      %2107 = vmatprep.subr.mxu0 0.0
      %2108 = vmatpush1.xpose.msra.mxu0 0.0
      %2109 = vmatprep.subr.mxu0 0.0
      %2110 = vmatpush1.xpose.msra.mxu0 0.0
      %2111 = vmatprep.subr.mxu0 0.0
      %2112 = vmatpush1.xpose.msra.mxu0 0.0
      %2113 = vmatprep.subr.mxu0 0.0
      %2114 = vmatpush1.xpose.msra.mxu0 0.0
      %2115 = vmatprep.subr.mxu0 0.0
      %2116 = vmatpush1.xpose.msra.mxu0 0.0
      %2117 = vmatprep.subr.mxu0 0.0
      %2118 = vmatpush1.xpose.msra.mxu0 %v2085
      %2119 = vmatprep.subr.mxu0 0.0
      %2120 = vmatpush2.xpose.msra.mxu0 0.0
      %2121 = vmatprep.subr.mxu0 0.0
      %2122 = vmatpush2.xpose.msra.mxu0 0.0
      %2123 = vmatprep.subr.mxu0 0.0
      %2124 = vmatpush2.xpose.msra.mxu0 0.0
      %2125 = vmatprep.subr.mxu0 0.0
      %2126 = vmatpush2.xpose.msra.mxu0 0.0
      %2127 = vmatprep.subr.mxu0 0.0
      %2128 = vmatpush2.xpose.msra.mxu0 0.0
      %2129 = vmatprep.subr.mxu0 0.0
      %2130 = vmatpush2.xpose.msra.mxu0 0.0
      %2131 = vmatprep.subr.mxu0 0.0
      %2132 = vmatpush2.xpose.msra.mxu0 0.0
      %2133 = vmatprep.subr.mxu0 0.0
      %2134 = vmatpush2.xpose.msra.mxu0 0.0
      %2135 = vmatprep.subr.mxu0 0.0
      %2136 = vmatpush2.xpose.msra.mxu0 0.0
      %2137 = vmatprep.subr.mxu0 0.0
      %2138 = vmatpush2.xpose.msra.mxu0 0.0
      %2139 = vmatprep.subr.mxu0 0.0
      %2140 = vmatpush2.xpose.msra.mxu0 0.0
      %2141 = vmatprep.subr.mxu0 0.0
      %2142 = vmatpush2.xpose.msra.mxu0 0.0
      %2143 = vmatprep.subr.mxu0 0.0
      %2144 = vmatpush2.xpose.msra.mxu0 0.0
      %2145 = vmatprep.subr.mxu0 0.0
      %2146 = vmatpush2.xpose.msra.mxu0 0.0
      %2147 = vmatprep.subr.mxu0 0.0
      %2148 = vmatpush2.xpose.msra.mxu0 0.0
      %2149 = vmatprep.subr.mxu0 0.0
      %2150 = vmatpush2.xpose.msra.mxu0 0.0
      %2151 = vmatprep.mubr.f32.mxu0 0.0
      %2152 = vmatmul.mubr.f32.gmra.mxu0 %v2083
      %v2153 = vpop.f32.mrf.mxu0
      %v2154 = vadd.f32 0.0, %v2153
      %v2155 = vpop.f32.mrf.mxu0
      %2156 = vdwg.mxu0
      %2157 = vrot.lane.b32.xlu0 %v543, 112
      %v2158 = vpop.permute.xlu0 %2157
      %2159 = vrot.lane.b32.xlu0 %v543, 80
      %v2160 = vpop.permute.xlu0 %2159
      %v2161 = vsel %vm750, %v2158, 0
      %v2163 = vsel %vm750, %v2160, 0
      %2165 = vmatprep.subr.mxu0 0.0
      %2166 = vmatpush1.xpose.msra.mxu0 0.0
      %2167 = vmatprep.subr.mxu0 0.0
      %2168 = vmatpush1.xpose.msra.mxu0 0.0
      %2169 = vmatprep.subr.mxu0 0.0
      %2170 = vmatpush1.xpose.msra.mxu0 0.0
      %2171 = vmatprep.subr.mxu0 0.0
      %2172 = vmatpush1.xpose.msra.mxu0 0.0
      %2173 = vmatprep.subr.mxu0 0.0
      %2174 = vmatpush1.xpose.msra.mxu0 0.0
      %2175 = vmatprep.subr.mxu0 0.0
      %2176 = vmatpush1.xpose.msra.mxu0 0.0
      %2177 = vmatprep.subr.mxu0 0.0
      %2178 = vmatpush1.xpose.msra.mxu0 0.0
      %2179 = vmatprep.subr.mxu0 0.0
      %2180 = vmatpush1.xpose.msra.mxu0 0.0
      %2181 = vmatprep.subr.mxu0 0.0
      %2182 = vmatpush1.xpose.msra.mxu0 0.0
      %2183 = vmatprep.subr.mxu0 0.0
      %2184 = vmatpush1.xpose.msra.mxu0 0.0
      %2185 = vmatprep.subr.mxu0 0.0
      %2186 = vmatpush1.xpose.msra.mxu0 0.0
      %2187 = vmatprep.subr.mxu0 0.0
      %2188 = vmatpush1.xpose.msra.mxu0 0.0
      %2189 = vmatprep.subr.mxu0 0.0
      %2190 = vmatpush1.xpose.msra.mxu0 0.0
      %2191 = vmatprep.subr.mxu0 0.0
      %2192 = vmatpush1.xpose.msra.mxu0 0.0
      %2193 = vmatprep.subr.mxu0 0.0
      %2194 = vmatpush1.xpose.msra.mxu0 0.0
      %2195 = vmatprep.subr.mxu0 0.0
      %2196 = vmatpush1.xpose.msra.mxu0 %v2163
      %2197 = vmatprep.subr.mxu0 0.0
      %2198 = vmatpush2.xpose.msra.mxu0 0.0
      %2199 = vmatprep.subr.mxu0 0.0
      %2200 = vmatpush2.xpose.msra.mxu0 0.0
      %2201 = vmatprep.subr.mxu0 0.0
      %2202 = vmatpush2.xpose.msra.mxu0 0.0
      %2203 = vmatprep.subr.mxu0 0.0
      %2204 = vmatpush2.xpose.msra.mxu0 0.0
      %2205 = vmatprep.subr.mxu0 0.0
      %2206 = vmatpush2.xpose.msra.mxu0 0.0
      %2207 = vmatprep.subr.mxu0 0.0
      %2208 = vmatpush2.xpose.msra.mxu0 0.0
      %2209 = vmatprep.subr.mxu0 0.0
      %2210 = vmatpush2.xpose.msra.mxu0 0.0
      %2211 = vmatprep.subr.mxu0 0.0
      %2212 = vmatpush2.xpose.msra.mxu0 0.0
      %2213 = vmatprep.subr.mxu0 0.0
      %2214 = vmatpush2.xpose.msra.mxu0 0.0
      %2215 = vmatprep.subr.mxu0 0.0
      %2216 = vmatpush2.xpose.msra.mxu0 0.0
      %2217 = vmatprep.subr.mxu0 0.0
      %2218 = vmatpush2.xpose.msra.mxu0 0.0
      %2219 = vmatprep.subr.mxu0 0.0
      %2220 = vmatpush2.xpose.msra.mxu0 0.0
      %2221 = vmatprep.subr.mxu0 0.0
      %2222 = vmatpush2.xpose.msra.mxu0 0.0
      %2223 = vmatprep.subr.mxu0 0.0
      %2224 = vmatpush2.xpose.msra.mxu0 0.0
      %2225 = vmatprep.subr.mxu0 0.0
      %2226 = vmatpush2.xpose.msra.mxu0 0.0
      %2227 = vmatprep.subr.mxu0 0.0
      %2228 = vmatpush2.xpose.msra.mxu0 0.0
      %2229 = vmatprep.mubr.f32.mxu0 0.0
      %2230 = vmatmul.mubr.f32.gmra.mxu0 %v2161
      %v2231 = vpop.f32.mrf.mxu0
      %v2232 = vadd.f32 0.0, %v2231
      %v2233 = vpop.f32.mrf.mxu0
      %2234 = vdwg.mxu0
      %2235 = vrot.lane.b32.xlu0 %v548, 112
      %v2236 = vpop.permute.xlu0 %2235
      %2237 = vrot.lane.b32.xlu0 %v548, 80
      %v2238 = vpop.permute.xlu0 %2237
      %v2239 = vsel %vm750, %v2236, 0
      %v2241 = vsel %vm750, %v2238, 0
      %2243 = vmatprep.subr.mxu0 0.0
      %2244 = vmatpush1.xpose.msra.mxu0 0.0
      %2245 = vmatprep.subr.mxu0 0.0
      %2246 = vmatpush1.xpose.msra.mxu0 0.0
      %2247 = vmatprep.subr.mxu0 0.0
      %2248 = vmatpush1.xpose.msra.mxu0 0.0
      %2249 = vmatprep.subr.mxu0 0.0
      %2250 = vmatpush1.xpose.msra.mxu0 0.0
      %2251 = vmatprep.subr.mxu0 0.0
      %2252 = vmatpush1.xpose.msra.mxu0 0.0
      %2253 = vmatprep.subr.mxu0 0.0
      %2254 = vmatpush1.xpose.msra.mxu0 0.0
      %2255 = vmatprep.subr.mxu0 0.0
      %2256 = vmatpush1.xpose.msra.mxu0 0.0
      %2257 = vmatprep.subr.mxu0 0.0
      %2258 = vmatpush1.xpose.msra.mxu0 0.0
      %2259 = vmatprep.subr.mxu0 0.0
      %2260 = vmatpush1.xpose.msra.mxu0 0.0
      %2261 = vmatprep.subr.mxu0 0.0
      %2262 = vmatpush1.xpose.msra.mxu0 0.0
      %2263 = vmatprep.subr.mxu0 0.0
      %2264 = vmatpush1.xpose.msra.mxu0 0.0
      %2265 = vmatprep.subr.mxu0 0.0
      %2266 = vmatpush1.xpose.msra.mxu0 0.0
      %2267 = vmatprep.subr.mxu0 0.0
      %2268 = vmatpush1.xpose.msra.mxu0 0.0
      %2269 = vmatprep.subr.mxu0 0.0
      %2270 = vmatpush1.xpose.msra.mxu0 0.0
      %2271 = vmatprep.subr.mxu0 0.0
      %2272 = vmatpush1.xpose.msra.mxu0 0.0
      %2273 = vmatprep.subr.mxu0 0.0
      %2274 = vmatpush1.xpose.msra.mxu0 %v2241
      %2275 = vmatprep.subr.mxu0 0.0
      %2276 = vmatpush2.xpose.msra.mxu0 0.0
      %2277 = vmatprep.subr.mxu0 0.0
      %2278 = vmatpush2.xpose.msra.mxu0 0.0
      %2279 = vmatprep.subr.mxu0 0.0
      %2280 = vmatpush2.xpose.msra.mxu0 0.0
      %2281 = vmatprep.subr.mxu0 0.0
      %2282 = vmatpush2.xpose.msra.mxu0 0.0
      %2283 = vmatprep.subr.mxu0 0.0
      %2284 = vmatpush2.xpose.msra.mxu0 0.0
      %2285 = vmatprep.subr.mxu0 0.0
      %2286 = vmatpush2.xpose.msra.mxu0 0.0
      %2287 = vmatprep.subr.mxu0 0.0
      %2288 = vmatpush2.xpose.msra.mxu0 0.0
      %2289 = vmatprep.subr.mxu0 0.0
      %2290 = vmatpush2.xpose.msra.mxu0 0.0
      %2291 = vmatprep.subr.mxu0 0.0
      %2292 = vmatpush2.xpose.msra.mxu0 0.0
      %2293 = vmatprep.subr.mxu0 0.0
      %2294 = vmatpush2.xpose.msra.mxu0 0.0
      %2295 = vmatprep.subr.mxu0 0.0
      %2296 = vmatpush2.xpose.msra.mxu0 0.0
      %2297 = vmatprep.subr.mxu0 0.0
      %2298 = vmatpush2.xpose.msra.mxu0 0.0
      %2299 = vmatprep.subr.mxu0 0.0
      %2300 = vmatpush2.xpose.msra.mxu0 0.0
      %2301 = vmatprep.subr.mxu0 0.0
      %2302 = vmatpush2.xpose.msra.mxu0 0.0
      %2303 = vmatprep.subr.mxu0 0.0
      %2304 = vmatpush2.xpose.msra.mxu0 0.0
      %2305 = vmatprep.subr.mxu0 0.0
      %2306 = vmatpush2.xpose.msra.mxu0 0.0
      %2307 = vmatprep.mubr.f32.mxu0 0.0
      %2308 = vmatmul.mubr.f32.gmra.mxu0 %v2239
      %v2309 = vpop.f32.mrf.mxu0
      %v2310 = vadd.f32 0.0, %v2309
      %v2311 = vpop.f32.mrf.mxu0
      %2312 = vdwg.mxu0
      %2313 = vrot.lane.b32.xlu0 %v553, 112
      %v2314 = vpop.permute.xlu0 %2313
      %2315 = vrot.lane.b32.xlu0 %v553, 80
      %v2316 = vpop.permute.xlu0 %2315
      %v2317 = vsel %vm750, %v2314, 0
      %v2319 = vsel %vm750, %v2316, 0
      %2321 = vmatprep.subr.mxu0 0.0
      %2322 = vmatpush1.xpose.msra.mxu0 0.0
      %2323 = vmatprep.subr.mxu0 0.0
      %2324 = vmatpush1.xpose.msra.mxu0 0.0
      %2325 = vmatprep.subr.mxu0 0.0
      %2326 = vmatpush1.xpose.msra.mxu0 0.0
      %2327 = vmatprep.subr.mxu0 0.0
      %2328 = vmatpush1.xpose.msra.mxu0 0.0
      %2329 = vmatprep.subr.mxu0 0.0
      %2330 = vmatpush1.xpose.msra.mxu0 0.0
      %2331 = vmatprep.subr.mxu0 0.0
      %2332 = vmatpush1.xpose.msra.mxu0 0.0
      %2333 = vmatprep.subr.mxu0 0.0
      %2334 = vmatpush1.xpose.msra.mxu0 0.0
      %2335 = vmatprep.subr.mxu0 0.0
      %2336 = vmatpush1.xpose.msra.mxu0 0.0
      %2337 = vmatprep.subr.mxu0 0.0
      %2338 = vmatpush1.xpose.msra.mxu0 0.0
      %2339 = vmatprep.subr.mxu0 0.0
      %2340 = vmatpush1.xpose.msra.mxu0 0.0
      %2341 = vmatprep.subr.mxu0 0.0
      %2342 = vmatpush1.xpose.msra.mxu0 0.0
      %2343 = vmatprep.subr.mxu0 0.0
      %2344 = vmatpush1.xpose.msra.mxu0 0.0
      %2345 = vmatprep.subr.mxu0 0.0
      %2346 = vmatpush1.xpose.msra.mxu0 0.0
      %2347 = vmatprep.subr.mxu0 0.0
      %2348 = vmatpush1.xpose.msra.mxu0 0.0
      %2349 = vmatprep.subr.mxu0 0.0
      %2350 = vmatpush1.xpose.msra.mxu0 0.0
      %2351 = vmatprep.subr.mxu0 0.0
      %2352 = vmatpush1.xpose.msra.mxu0 %v2319
      %2353 = vmatprep.subr.mxu0 0.0
      %2354 = vmatpush2.xpose.msra.mxu0 0.0
      %2355 = vmatprep.subr.mxu0 0.0
      %2356 = vmatpush2.xpose.msra.mxu0 0.0
      %2357 = vmatprep.subr.mxu0 0.0
      %2358 = vmatpush2.xpose.msra.mxu0 0.0
      %2359 = vmatprep.subr.mxu0 0.0
      %2360 = vmatpush2.xpose.msra.mxu0 0.0
      %2361 = vmatprep.subr.mxu0 0.0
      %2362 = vmatpush2.xpose.msra.mxu0 0.0
      %2363 = vmatprep.subr.mxu0 0.0
      %2364 = vmatpush2.xpose.msra.mxu0 0.0
      %2365 = vmatprep.subr.mxu0 0.0
      %2366 = vmatpush2.xpose.msra.mxu0 0.0
      %2367 = vmatprep.subr.mxu0 0.0
      %2368 = vmatpush2.xpose.msra.mxu0 0.0
      %2369 = vmatprep.subr.mxu0 0.0
      %2370 = vmatpush2.xpose.msra.mxu0 0.0
      %2371 = vmatprep.subr.mxu0 0.0
      %2372 = vmatpush2.xpose.msra.mxu0 0.0
      %2373 = vmatprep.subr.mxu0 0.0
      %2374 = vmatpush2.xpose.msra.mxu0 0.0
      %2375 = vmatprep.subr.mxu0 0.0
      %2376 = vmatpush2.xpose.msra.mxu0 0.0
      %2377 = vmatprep.subr.mxu0 0.0
      %2378 = vmatpush2.xpose.msra.mxu0 0.0
      %2379 = vmatprep.subr.mxu0 0.0
      %2380 = vmatpush2.xpose.msra.mxu0 0.0
      %2381 = vmatprep.subr.mxu0 0.0
      %2382 = vmatpush2.xpose.msra.mxu0 0.0
      %2383 = vmatprep.subr.mxu0 0.0
      %2384 = vmatpush2.xpose.msra.mxu0 0.0
      %2385 = vmatprep.mubr.f32.mxu0 0.0
      %2386 = vmatmul.mubr.f32.gmra.mxu0 %v2317
      %v2387 = vpop.f32.mrf.mxu0
      %v2388 = vadd.f32 0.0, %v2387
      %v2389 = vpop.f32.mrf.mxu0
      %2390 = vdwg.mxu0
      %2391 = vrot.lane.b32.xlu0 %v558, 112
      %v2392 = vpop.permute.xlu0 %2391
      %2393 = vrot.lane.b32.xlu0 %v558, 80
      %v2394 = vpop.permute.xlu0 %2393
      %v2395 = vsel %vm750, %v2392, 0
      %v2397 = vsel %vm750, %v2394, 0
      %2399 = vmatprep.subr.mxu0 0.0
      %2400 = vmatpush1.xpose.msra.mxu0 0.0
      %2401 = vmatprep.subr.mxu0 0.0
      %2402 = vmatpush1.xpose.msra.mxu0 0.0
      %2403 = vmatprep.subr.mxu0 0.0
      %2404 = vmatpush1.xpose.msra.mxu0 0.0
      %2405 = vmatprep.subr.mxu0 0.0
      %2406 = vmatpush1.xpose.msra.mxu0 0.0
      %2407 = vmatprep.subr.mxu0 0.0
      %2408 = vmatpush1.xpose.msra.mxu0 0.0
      %2409 = vmatprep.subr.mxu0 0.0
      %2410 = vmatpush1.xpose.msra.mxu0 0.0
      %2411 = vmatprep.subr.mxu0 0.0
      %2412 = vmatpush1.xpose.msra.mxu0 0.0
      %2413 = vmatprep.subr.mxu0 0.0
      %2414 = vmatpush1.xpose.msra.mxu0 0.0
      %2415 = vmatprep.subr.mxu0 0.0
      %2416 = vmatpush1.xpose.msra.mxu0 0.0
      %2417 = vmatprep.subr.mxu0 0.0
      %2418 = vmatpush1.xpose.msra.mxu0 0.0
      %2419 = vmatprep.subr.mxu0 0.0
      %2420 = vmatpush1.xpose.msra.mxu0 0.0
      %2421 = vmatprep.subr.mxu0 0.0
      %2422 = vmatpush1.xpose.msra.mxu0 0.0
      %2423 = vmatprep.subr.mxu0 0.0
      %2424 = vmatpush1.xpose.msra.mxu0 0.0
      %2425 = vmatprep.subr.mxu0 0.0
      %2426 = vmatpush1.xpose.msra.mxu0 0.0
      %2427 = vmatprep.subr.mxu0 0.0
      %2428 = vmatpush1.xpose.msra.mxu0 0.0
      %2429 = vmatprep.subr.mxu0 0.0
      %2430 = vmatpush1.xpose.msra.mxu0 %v2397
      %2431 = vmatprep.subr.mxu0 0.0
      %2432 = vmatpush2.xpose.msra.mxu0 0.0
      %2433 = vmatprep.subr.mxu0 0.0
      %2434 = vmatpush2.xpose.msra.mxu0 0.0
      %2435 = vmatprep.subr.mxu0 0.0
      %2436 = vmatpush2.xpose.msra.mxu0 0.0
      %2437 = vmatprep.subr.mxu0 0.0
      %2438 = vmatpush2.xpose.msra.mxu0 0.0
      %2439 = vmatprep.subr.mxu0 0.0
      %2440 = vmatpush2.xpose.msra.mxu0 0.0
      %2441 = vmatprep.subr.mxu0 0.0
      %2442 = vmatpush2.xpose.msra.mxu0 0.0
      %2443 = vmatprep.subr.mxu0 0.0
      %2444 = vmatpush2.xpose.msra.mxu0 0.0
      %2445 = vmatprep.subr.mxu0 0.0
      %2446 = vmatpush2.xpose.msra.mxu0 0.0
      %2447 = vmatprep.subr.mxu0 0.0
      %2448 = vmatpush2.xpose.msra.mxu0 0.0
      %2449 = vmatprep.subr.mxu0 0.0
      %2450 = vmatpush2.xpose.msra.mxu0 0.0
      %2451 = vmatprep.subr.mxu0 0.0
      %2452 = vmatpush2.xpose.msra.mxu0 0.0
      %2453 = vmatprep.subr.mxu0 0.0
      %2454 = vmatpush2.xpose.msra.mxu0 0.0
      %2455 = vmatprep.subr.mxu0 0.0
      %2456 = vmatpush2.xpose.msra.mxu0 0.0
      %2457 = vmatprep.subr.mxu0 0.0
      %2458 = vmatpush2.xpose.msra.mxu0 0.0
      %2459 = vmatprep.subr.mxu0 0.0
      %2460 = vmatpush2.xpose.msra.mxu0 0.0
      %2461 = vmatprep.subr.mxu0 0.0
      %2462 = vmatpush2.xpose.msra.mxu0 0.0
      %2463 = vmatprep.mubr.f32.mxu0 0.0
      %2464 = vmatmul.mubr.f32.gmra.mxu0 %v2395
      %v2465 = vpop.f32.mrf.mxu0
      %v2466 = vadd.f32 0.0, %v2465
      %v2467 = vpop.f32.mrf.mxu0
      %2468 = vdwg.mxu0
      %2469 = vrot.lane.b32.xlu0 %v563, 112
      %v2470 = vpop.permute.xlu0 %2469
      %2471 = vrot.lane.b32.xlu0 %v563, 80
      %v2472 = vpop.permute.xlu0 %2471
      %v2473 = vsel %vm750, %v2470, 0
      %v2475 = vsel %vm750, %v2472, 0
      %2477 = vmatprep.subr.mxu0 0.0
      %2478 = vmatpush1.xpose.msra.mxu0 0.0
      %2479 = vmatprep.subr.mxu0 0.0
      %2480 = vmatpush1.xpose.msra.mxu0 0.0
      %2481 = vmatprep.subr.mxu0 0.0
      %2482 = vmatpush1.xpose.msra.mxu0 0.0
      %2483 = vmatprep.subr.mxu0 0.0
      %2484 = vmatpush1.xpose.msra.mxu0 0.0
      %2485 = vmatprep.subr.mxu0 0.0
      %2486 = vmatpush1.xpose.msra.mxu0 0.0
      %2487 = vmatprep.subr.mxu0 0.0
      %2488 = vmatpush1.xpose.msra.mxu0 0.0
      %2489 = vmatprep.subr.mxu0 0.0
      %2490 = vmatpush1.xpose.msra.mxu0 0.0
      %2491 = vmatprep.subr.mxu0 0.0
      %2492 = vmatpush1.xpose.msra.mxu0 0.0
      %2493 = vmatprep.subr.mxu0 0.0
      %2494 = vmatpush1.xpose.msra.mxu0 0.0
      %2495 = vmatprep.subr.mxu0 0.0
      %2496 = vmatpush1.xpose.msra.mxu0 0.0
      %2497 = vmatprep.subr.mxu0 0.0
      %2498 = vmatpush1.xpose.msra.mxu0 0.0
      %2499 = vmatprep.subr.mxu0 0.0
      %2500 = vmatpush1.xpose.msra.mxu0 0.0
      %2501 = vmatprep.subr.mxu0 0.0
      %2502 = vmatpush1.xpose.msra.mxu0 0.0
      %2503 = vmatprep.subr.mxu0 0.0
      %2504 = vmatpush1.xpose.msra.mxu0 0.0
      %2505 = vmatprep.subr.mxu0 0.0
      %2506 = vmatpush1.xpose.msra.mxu0 0.0
      %2507 = vmatprep.subr.mxu0 0.0
      %2508 = vmatpush1.xpose.msra.mxu0 %v2475
      %2509 = vmatprep.subr.mxu0 0.0
      %2510 = vmatpush2.xpose.msra.mxu0 0.0
      %2511 = vmatprep.subr.mxu0 0.0
      %2512 = vmatpush2.xpose.msra.mxu0 0.0
      %2513 = vmatprep.subr.mxu0 0.0
      %2514 = vmatpush2.xpose.msra.mxu0 0.0
      %2515 = vmatprep.subr.mxu0 0.0
      %2516 = vmatpush2.xpose.msra.mxu0 0.0
      %2517 = vmatprep.subr.mxu0 0.0
      %2518 = vmatpush2.xpose.msra.mxu0 0.0
      %2519 = vmatprep.subr.mxu0 0.0
      %2520 = vmatpush2.xpose.msra.mxu0 0.0
      %2521 = vmatprep.subr.mxu0 0.0
      %2522 = vmatpush2.xpose.msra.mxu0 0.0
      %2523 = vmatprep.subr.mxu0 0.0
      %2524 = vmatpush2.xpose.msra.mxu0 0.0
      %2525 = vmatprep.subr.mxu0 0.0
      %2526 = vmatpush2.xpose.msra.mxu0 0.0
      %2527 = vmatprep.subr.mxu0 0.0
      %2528 = vmatpush2.xpose.msra.mxu0 0.0
      %2529 = vmatprep.subr.mxu0 0.0
      %2530 = vmatpush2.xpose.msra.mxu0 0.0
      %2531 = vmatprep.subr.mxu0 0.0
      %2532 = vmatpush2.xpose.msra.mxu0 0.0
      %2533 = vmatprep.subr.mxu0 0.0
      %2534 = vmatpush2.xpose.msra.mxu0 0.0
      %2535 = vmatprep.subr.mxu0 0.0
      %2536 = vmatpush2.xpose.msra.mxu0 0.0
      %2537 = vmatprep.subr.mxu0 0.0
      %2538 = vmatpush2.xpose.msra.mxu0 0.0
      %2539 = vmatprep.subr.mxu0 0.0
      %2540 = vmatpush2.xpose.msra.mxu0 0.0
      %2541 = vmatprep.mubr.f32.mxu0 0.0
      %2542 = vmatmul.mubr.f32.gmra.mxu0 %v2473
      %v2543 = vpop.f32.mrf.mxu0
      %v2544 = vadd.f32 0.0, %v2543
      %v2545 = vpop.f32.mrf.mxu0
      %2546 = vdwg.mxu0
      %2547 = vrot.lane.b32.xlu0 %v568, 112
      %v2548 = vpop.permute.xlu0 %2547
      %2549 = vrot.lane.b32.xlu0 %v568, 80
      %v2550 = vpop.permute.xlu0 %2549
      %v2551 = vsel %vm750, %v2548, 0
      %v2553 = vsel %vm750, %v2550, 0
      %2555 = vmatprep.subr.mxu0 0.0
      %2556 = vmatpush1.xpose.msra.mxu0 0.0
      %2557 = vmatprep.subr.mxu0 0.0
      %2558 = vmatpush1.xpose.msra.mxu0 0.0
      %2559 = vmatprep.subr.mxu0 0.0
      %2560 = vmatpush1.xpose.msra.mxu0 0.0
      %2561 = vmatprep.subr.mxu0 0.0
      %2562 = vmatpush1.xpose.msra.mxu0 0.0
      %2563 = vmatprep.subr.mxu0 0.0
      %2564 = vmatpush1.xpose.msra.mxu0 0.0
      %2565 = vmatprep.subr.mxu0 0.0
      %2566 = vmatpush1.xpose.msra.mxu0 0.0
      %2567 = vmatprep.subr.mxu0 0.0
      %2568 = vmatpush1.xpose.msra.mxu0 0.0
      %2569 = vmatprep.subr.mxu0 0.0
      %2570 = vmatpush1.xpose.msra.mxu0 0.0
      %2571 = vmatprep.subr.mxu0 0.0
      %2572 = vmatpush1.xpose.msra.mxu0 0.0
      %2573 = vmatprep.subr.mxu0 0.0
      %2574 = vmatpush1.xpose.msra.mxu0 0.0
      %2575 = vmatprep.subr.mxu0 0.0
      %2576 = vmatpush1.xpose.msra.mxu0 0.0
      %2577 = vmatprep.subr.mxu0 0.0
      %2578 = vmatpush1.xpose.msra.mxu0 0.0
      %2579 = vmatprep.subr.mxu0 0.0
      %2580 = vmatpush1.xpose.msra.mxu0 0.0
      %2581 = vmatprep.subr.mxu0 0.0
      %2582 = vmatpush1.xpose.msra.mxu0 0.0
      %2583 = vmatprep.subr.mxu0 0.0
      %2584 = vmatpush1.xpose.msra.mxu0 0.0
      %2585 = vmatprep.subr.mxu0 0.0
      %2586 = vmatpush1.xpose.msra.mxu0 %v2553
      %2587 = vmatprep.subr.mxu0 0.0
      %2588 = vmatpush2.xpose.msra.mxu0 0.0
      %2589 = vmatprep.subr.mxu0 0.0
      %2590 = vmatpush2.xpose.msra.mxu0 0.0
      %2591 = vmatprep.subr.mxu0 0.0
      %2592 = vmatpush2.xpose.msra.mxu0 0.0
      %2593 = vmatprep.subr.mxu0 0.0
      %2594 = vmatpush2.xpose.msra.mxu0 0.0
      %2595 = vmatprep.subr.mxu0 0.0
      %2596 = vmatpush2.xpose.msra.mxu0 0.0
      %2597 = vmatprep.subr.mxu0 0.0
      %2598 = vmatpush2.xpose.msra.mxu0 0.0
      %2599 = vmatprep.subr.mxu0 0.0
      %2600 = vmatpush2.xpose.msra.mxu0 0.0
      %2601 = vmatprep.subr.mxu0 0.0
      %2602 = vmatpush2.xpose.msra.mxu0 0.0
      %2603 = vmatprep.subr.mxu0 0.0
      %2604 = vmatpush2.xpose.msra.mxu0 0.0
      %2605 = vmatprep.subr.mxu0 0.0
      %2606 = vmatpush2.xpose.msra.mxu0 0.0
      %2607 = vmatprep.subr.mxu0 0.0
      %2608 = vmatpush2.xpose.msra.mxu0 0.0
      %2609 = vmatprep.subr.mxu0 0.0
      %2610 = vmatpush2.xpose.msra.mxu0 0.0
      %2611 = vmatprep.subr.mxu0 0.0
      %2612 = vmatpush2.xpose.msra.mxu0 0.0
      %2613 = vmatprep.subr.mxu0 0.0
      %2614 = vmatpush2.xpose.msra.mxu0 0.0
      %2615 = vmatprep.subr.mxu0 0.0
      %2616 = vmatpush2.xpose.msra.mxu0 0.0
      %2617 = vmatprep.subr.mxu0 0.0
      %2618 = vmatpush2.xpose.msra.mxu0 0.0
      %2619 = vmatprep.mubr.f32.mxu0 0.0
      %2620 = vmatmul.mubr.f32.gmra.mxu0 %v2551
      %v2621 = vpop.f32.mrf.mxu0
      %v2622 = vadd.f32 0.0, %v2621
      %v2623 = vpop.f32.mrf.mxu0
      %2624 = vdwg.mxu0
      %2625 = vrot.lane.b32.xlu0 %v573, 112
      %v2626 = vpop.permute.xlu0 %2625
      %2627 = vrot.lane.b32.xlu0 %v573, 80
      %v2628 = vpop.permute.xlu0 %2627
      %v2629 = vsel %vm750, %v2626, 0
      %v2631 = vsel %vm750, %v2628, 0
      %2633 = vmatprep.subr.mxu0 0.0
      %2634 = vmatpush1.xpose.msra.mxu0 0.0
      %2635 = vmatprep.subr.mxu0 0.0
      %2636 = vmatpush1.xpose.msra.mxu0 0.0
      %2637 = vmatprep.subr.mxu0 0.0
      %2638 = vmatpush1.xpose.msra.mxu0 0.0
      %2639 = vmatprep.subr.mxu0 0.0
      %2640 = vmatpush1.xpose.msra.mxu0 0.0
      %2641 = vmatprep.subr.mxu0 0.0
      %2642 = vmatpush1.xpose.msra.mxu0 0.0
      %2643 = vmatprep.subr.mxu0 0.0
      %2644 = vmatpush1.xpose.msra.mxu0 0.0
      %2645 = vmatprep.subr.mxu0 0.0
      %2646 = vmatpush1.xpose.msra.mxu0 0.0
      %2647 = vmatprep.subr.mxu0 0.0
      %2648 = vmatpush1.xpose.msra.mxu0 0.0
      %2649 = vmatprep.subr.mxu0 0.0
      %2650 = vmatpush1.xpose.msra.mxu0 0.0
      %2651 = vmatprep.subr.mxu0 0.0
      %2652 = vmatpush1.xpose.msra.mxu0 0.0
      %2653 = vmatprep.subr.mxu0 0.0
      %2654 = vmatpush1.xpose.msra.mxu0 0.0
      %2655 = vmatprep.subr.mxu0 0.0
      %2656 = vmatpush1.xpose.msra.mxu0 0.0
      %2657 = vmatprep.subr.mxu0 0.0
      %2658 = vmatpush1.xpose.msra.mxu0 0.0
      %2659 = vmatprep.subr.mxu0 0.0
      %2660 = vmatpush1.xpose.msra.mxu0 0.0
      %2661 = vmatprep.subr.mxu0 0.0
      %2662 = vmatpush1.xpose.msra.mxu0 0.0
      %2663 = vmatprep.subr.mxu0 0.0
      %2664 = vmatpush1.xpose.msra.mxu0 %v2631
      %2665 = vmatprep.subr.mxu0 0.0
      %2666 = vmatpush2.xpose.msra.mxu0 0.0
      %2667 = vmatprep.subr.mxu0 0.0
      %2668 = vmatpush2.xpose.msra.mxu0 0.0
      %2669 = vmatprep.subr.mxu0 0.0
      %2670 = vmatpush2.xpose.msra.mxu0 0.0
      %2671 = vmatprep.subr.mxu0 0.0
      %2672 = vmatpush2.xpose.msra.mxu0 0.0
      %2673 = vmatprep.subr.mxu0 0.0
      %2674 = vmatpush2.xpose.msra.mxu0 0.0
      %2675 = vmatprep.subr.mxu0 0.0
      %2676 = vmatpush2.xpose.msra.mxu0 0.0
      %2677 = vmatprep.subr.mxu0 0.0
      %2678 = vmatpush2.xpose.msra.mxu0 0.0
      %2679 = vmatprep.subr.mxu0 0.0
      %2680 = vmatpush2.xpose.msra.mxu0 0.0
      %2681 = vmatprep.subr.mxu0 0.0
      %2682 = vmatpush2.xpose.msra.mxu0 0.0
      %2683 = vmatprep.subr.mxu0 0.0
      %2684 = vmatpush2.xpose.msra.mxu0 0.0
      %2685 = vmatprep.subr.mxu0 0.0
      %2686 = vmatpush2.xpose.msra.mxu0 0.0
      %2687 = vmatprep.subr.mxu0 0.0
      %2688 = vmatpush2.xpose.msra.mxu0 0.0
      %2689 = vmatprep.subr.mxu0 0.0
      %2690 = vmatpush2.xpose.msra.mxu0 0.0
      %2691 = vmatprep.subr.mxu0 0.0
      %2692 = vmatpush2.xpose.msra.mxu0 0.0
      %2693 = vmatprep.subr.mxu0 0.0
      %2694 = vmatpush2.xpose.msra.mxu0 0.0
      %2695 = vmatprep.subr.mxu0 0.0
      %2696 = vmatpush2.xpose.msra.mxu0 0.0
      %2697 = vmatprep.mubr.f32.mxu0 0.0
      %2698 = vmatmul.mubr.f32.gmra.mxu0 %v2629
      %v2699 = vpop.f32.mrf.mxu0
      %v2700 = vadd.f32 0.0, %v2699
      %v2701 = vpop.f32.mrf.mxu0
      %2702 = vdwg.mxu0
      %v2703 = vmul.f32 %v2154, 0.25
      %v2704 = vmul.f32 %v2232, 0.25
      %v2705 = vmul.f32 %v2310, 0.25
      %v2706 = vmul.f32 %v2388, 0.25
      %v2707 = vmul.f32 %v2466, 0.25
      %v2708 = vmul.f32 %v2544, 0.25
      %v2709 = vmul.f32 %v2622, 0.25
      %v2710 = vmul.f32 %v2700, 0.25
      %v2711 = vadd.f32 %v2703, %v739
      %v2712 = vadd.f32 %v2704, %v740
      %v2713 = vadd.f32 %v2705, %v741
      %v2714 = vadd.f32 %v2706, %v742
      %v2715 = vadd.f32 %v2707, %v743
      %v2716 = vadd.f32 %v2708, %v744
      %v2717 = vadd.f32 %v2709, %v745
      %v2718 = vadd.f32 %v2710, %v746
      %v2719 = vsel %vm1380, %v2711, -inf
      %2720 = vmax.xlane.f32.xlu0 %v2719
      %v2721 = vpop.xlane.xlu0 %2720
      %v2722 = vsel %vm1380, %v2712, -inf
      %2723 = vmax.xlane.f32.xlu0 %v2722
      %v2724 = vpop.xlane.xlu0 %2723
      %v2725 = vsel %vm1380, %v2713, -inf
      %2726 = vmax.xlane.f32.xlu0 %v2725
      %v2727 = vpop.xlane.xlu0 %2726
      %v2728 = vsel %vm1380, %v2714, -inf
      %2729 = vmax.xlane.f32.xlu0 %v2728
      %v2730 = vpop.xlane.xlu0 %2729
      %v2731 = vsel %vm1380, %v2715, -inf
      %2732 = vmax.xlane.f32.xlu0 %v2731
      %v2733 = vpop.xlane.xlu0 %2732
      %v2734 = vsel %vm1380, %v2716, -inf
      %2735 = vmax.xlane.f32.xlu0 %v2734
      %v2736 = vpop.xlane.xlu0 %2735
      %v2737 = vsel %vm1380, %v2717, -inf
      %2738 = vmax.xlane.f32.xlu0 %v2737
      %v2739 = vpop.xlane.xlu0 %2738
      %v2740 = vsel %vm1380, %v2718, -inf
      %2741 = vmax.xlane.f32.xlu0 %v2740
      %v2742 = vpop.xlane.xlu0 %2741
      %v2743 = vsub.f32 %v2711, %v2721
      %v2744 = vsub.f32 %v2712, %v2724
      %v2745 = vsub.f32 %v2713, %v2727
      %v2746 = vsub.f32 %v2714, %v2730
      %v2747 = vsub.f32 %v2715, %v2733
      %v2748 = vsub.f32 %v2716, %v2736
      %v2749 = vsub.f32 %v2717, %v2739
      %v2750 = vsub.f32 %v2718, %v2742
      %v2751 = vmul.f32 %v2743, 1.442695
      %v2752 = vpow.pop %v2751
      %v2753 = vmul.f32 %v2744, 1.442695
      %v2754 = vpow.pop %v2753
      %v2755 = vmul.f32 %v2745, 1.442695
      %v2756 = vpow.pop %v2755
      %v2757 = vmul.f32 %v2746, 1.442695
      %v2758 = vpow.pop %v2757
      %v2759 = vmul.f32 %v2747, 1.442695
      %v2760 = vpow.pop %v2759
      %v2761 = vmul.f32 %v2748, 1.442695
      %v2762 = vpow.pop %v2761
      %v2763 = vmul.f32 %v2749, 1.442695
      %v2764 = vpow.pop %v2763
      %v2765 = vmul.f32 %v2750, 1.442695
      %v2766 = vpow.pop %v2765
      %v2767 = vsel %vm1380, %v2752, 0.0
      %2768 = vadd.xlane.f32.xlu0 %v2767
      %v2769 = vpop.xlane.xlu0 %2768
      %v2770 = vsel %vm1380, %v2754, 0.0
      %2771 = vadd.xlane.f32.xlu0 %v2770
      %v2772 = vpop.xlane.xlu0 %2771
      %v2773 = vsel %vm1380, %v2756, 0.0
      %2774 = vadd.xlane.f32.xlu0 %v2773
      %v2775 = vpop.xlane.xlu0 %2774
      %v2776 = vsel %vm1380, %v2758, 0.0
      %2777 = vadd.xlane.f32.xlu0 %v2776
      %v2778 = vpop.xlane.xlu0 %2777
      %v2779 = vsel %vm1380, %v2760, 0.0
      %2780 = vadd.xlane.f32.xlu0 %v2779
      %v2781 = vpop.xlane.xlu0 %2780
      %v2782 = vsel %vm1380, %v2762, 0.0
      %2783 = vadd.xlane.f32.xlu0 %v2782
      %v2784 = vpop.xlane.xlu0 %2783
      %v2785 = vsel %vm1380, %v2764, 0.0
      %2786 = vadd.xlane.f32.xlu0 %v2785
      %v2787 = vpop.xlane.xlu0 %2786
      %v2788 = vsel %vm1380, %v2766, 0.0
      %2789 = vadd.xlane.f32.xlu0 %v2788
      %v2790 = vpop.xlane.xlu0 %2789
      %v2791 = vrcp.pop %v2769
      %v2792 = vrcp.pop %v2772
      %v2793 = vrcp.pop %v2775
      %v2794 = vrcp.pop %v2778
      %v2795 = vrcp.pop %v2781
      %v2796 = vrcp.pop %v2784
      %v2797 = vrcp.pop %v2787
      %v2798 = vrcp.pop %v2790
      %v2799 = vmul.f32 %v2752, %v2791
      %v2800 = vmul.f32 %v2754, %v2792
      %v2801 = vmul.f32 %v2756, %v2793
      %v2802 = vmul.f32 %v2758, %v2794
      %v2803 = vmul.f32 %v2760, %v2795
      %v2804 = vmul.f32 %v2762, %v2796
      %v2805 = vmul.f32 %v2764, %v2797
      %v2806 = vmul.f32 %v2766, %v2798
      %2807 = vrot.lane.b32.xlu0 %v538, 48
      %v2808 = vpop.permute.xlu0 %2807
      %v2811 = vsel %vm1380, %v2799, 0
      %2813 = vmatprep.subr.mxu0 0.0
      %2814 = vmatpush1.msra.mxu0 0.0
      %2815 = vmatprep.subr.mxu0 0.0
      %2816 = vmatpush1.msra.mxu0 0.0
      %2817 = vmatprep.subr.mxu0 0.0
      %2818 = vmatpush1.msra.mxu0 0.0
      %2819 = vmatprep.subr.mxu0 0.0
      %2820 = vmatpush1.msra.mxu0 0.0
      %2821 = vmatprep.subr.mxu0 0.0
      %2822 = vmatpush1.msra.mxu0 0.0
      %2823 = vmatprep.subr.mxu0 0.0
      %2824 = vmatpush1.msra.mxu0 0.0
      %2825 = vmatprep.subr.mxu0 0.0
      %2826 = vmatpush1.msra.mxu0 0.0
      %2827 = vmatprep.subr.mxu0 0.0
      %2828 = vmatpush1.msra.mxu0 0.0
      %2829 = vmatprep.subr.mxu0 0.0
      %2830 = vmatpush1.msra.mxu0 0.0
      %2831 = vmatprep.subr.mxu0 0.0
      %2832 = vmatpush1.msra.mxu0 0.0
      %2833 = vmatprep.subr.mxu0 0.0
      %2834 = vmatpush1.msra.mxu0 0.0
      %2835 = vmatprep.subr.mxu0 0.0
      %2836 = vmatpush1.msra.mxu0 0.0
      %2837 = vmatprep.subr.mxu0 0.0
      %2838 = vmatpush1.msra.mxu0 0.0
      %2839 = vmatprep.subr.mxu0 0.0
      %2840 = vmatpush1.msra.mxu0 0.0
      %2841 = vmatprep.subr.mxu0 0.0
      %2842 = vmatpush1.msra.mxu0 0.0
      %2843 = vmatprep.subr.mxu0 0.0
      %2844 = vmatpush1.msra.mxu0 %v2808
      %2845 = vmatprep.subr.mxu0 0.0
      %2846 = vmatpush2.msra.mxu0 0.0
      %2847 = vmatprep.subr.mxu0 0.0
      %2848 = vmatpush2.msra.mxu0 0.0
      %2849 = vmatprep.subr.mxu0 0.0
      %2850 = vmatpush2.msra.mxu0 0.0
      %2851 = vmatprep.subr.mxu0 0.0
      %2852 = vmatpush2.msra.mxu0 0.0
      %2853 = vmatprep.subr.mxu0 0.0
      %2854 = vmatpush2.msra.mxu0 0.0
      %2855 = vmatprep.subr.mxu0 0.0
      %2856 = vmatpush2.msra.mxu0 0.0
      %2857 = vmatprep.subr.mxu0 0.0
      %2858 = vmatpush2.msra.mxu0 0.0
      %2859 = vmatprep.subr.mxu0 0.0
      %2860 = vmatpush2.msra.mxu0 0.0
      %2861 = vmatprep.subr.mxu0 0.0
      %2862 = vmatpush2.msra.mxu0 0.0
      %2863 = vmatprep.subr.mxu0 0.0
      %2864 = vmatpush2.msra.mxu0 0.0
      %2865 = vmatprep.subr.mxu0 0.0
      %2866 = vmatpush2.msra.mxu0 0.0
      %2867 = vmatprep.subr.mxu0 0.0
      %2868 = vmatpush2.msra.mxu0 0.0
      %2869 = vmatprep.subr.mxu0 0.0
      %2870 = vmatpush2.msra.mxu0 0.0
      %2871 = vmatprep.subr.mxu0 0.0
      %2872 = vmatpush2.msra.mxu0 0.0
      %2873 = vmatprep.subr.mxu0 0.0
      %2874 = vmatpush2.msra.mxu0 0.0
      %2875 = vmatprep.subr.mxu0 0.0
      %2876 = vmatpush2.msra.mxu0 0.0
      %2877 = vmatprep.mubr.f32.mxu0 0.0
      %2878 = vmatmul.mubr.f32.gmra.mxu0 %v2811
      %v2879 = vpop.f32.mrf.mxu0
      %v2880 = vadd.f32 0.0, %v2879
      %v2881 = vpop.f32.mrf.mxu0
      %2882 = vdwg.mxu0
      %2883 = vrot.lane.b32.xlu0 %v543, 48
      %v2884 = vpop.permute.xlu0 %2883
      %v2887 = vsel %vm1380, %v2800, 0
      %2889 = vmatprep.subr.mxu0 0.0
      %2890 = vmatpush1.msra.mxu0 0.0
      %2891 = vmatprep.subr.mxu0 0.0
      %2892 = vmatpush1.msra.mxu0 0.0
      %2893 = vmatprep.subr.mxu0 0.0
      %2894 = vmatpush1.msra.mxu0 0.0
      %2895 = vmatprep.subr.mxu0 0.0
      %2896 = vmatpush1.msra.mxu0 0.0
      %2897 = vmatprep.subr.mxu0 0.0
      %2898 = vmatpush1.msra.mxu0 0.0
      %2899 = vmatprep.subr.mxu0 0.0
      %2900 = vmatpush1.msra.mxu0 0.0
      %2901 = vmatprep.subr.mxu0 0.0
      %2902 = vmatpush1.msra.mxu0 0.0
      %2903 = vmatprep.subr.mxu0 0.0
      %2904 = vmatpush1.msra.mxu0 0.0
      %2905 = vmatprep.subr.mxu0 0.0
      %2906 = vmatpush1.msra.mxu0 0.0
      %2907 = vmatprep.subr.mxu0 0.0
      %2908 = vmatpush1.msra.mxu0 0.0
      %2909 = vmatprep.subr.mxu0 0.0
      %2910 = vmatpush1.msra.mxu0 0.0
      %2911 = vmatprep.subr.mxu0 0.0
      %2912 = vmatpush1.msra.mxu0 0.0
      %2913 = vmatprep.subr.mxu0 0.0
      %2914 = vmatpush1.msra.mxu0 0.0
      %2915 = vmatprep.subr.mxu0 0.0
      %2916 = vmatpush1.msra.mxu0 0.0
      %2917 = vmatprep.subr.mxu0 0.0
      %2918 = vmatpush1.msra.mxu0 0.0
      %2919 = vmatprep.subr.mxu0 0.0
      %2920 = vmatpush1.msra.mxu0 %v2884
      %2921 = vmatprep.subr.mxu0 0.0
      %2922 = vmatpush2.msra.mxu0 0.0
      %2923 = vmatprep.subr.mxu0 0.0
      %2924 = vmatpush2.msra.mxu0 0.0
      %2925 = vmatprep.subr.mxu0 0.0
      %2926 = vmatpush2.msra.mxu0 0.0
      %2927 = vmatprep.subr.mxu0 0.0
      %2928 = vmatpush2.msra.mxu0 0.0
      %2929 = vmatprep.subr.mxu0 0.0
      %2930 = vmatpush2.msra.mxu0 0.0
      %2931 = vmatprep.subr.mxu0 0.0
      %2932 = vmatpush2.msra.mxu0 0.0
      %2933 = vmatprep.subr.mxu0 0.0
      %2934 = vmatpush2.msra.mxu0 0.0
      %2935 = vmatprep.subr.mxu0 0.0
      %2936 = vmatpush2.msra.mxu0 0.0
      %2937 = vmatprep.subr.mxu0 0.0
      %2938 = vmatpush2.msra.mxu0 0.0
      %2939 = vmatprep.subr.mxu0 0.0
      %2940 = vmatpush2.msra.mxu0 0.0
      %2941 = vmatprep.subr.mxu0 0.0
      %2942 = vmatpush2.msra.mxu0 0.0
      %2943 = vmatprep.subr.mxu0 0.0
      %2944 = vmatpush2.msra.mxu0 0.0
      %2945 = vmatprep.subr.mxu0 0.0
      %2946 = vmatpush2.msra.mxu0 0.0
      %2947 = vmatprep.subr.mxu0 0.0
      %2948 = vmatpush2.msra.mxu0 0.0
      %2949 = vmatprep.subr.mxu0 0.0
      %2950 = vmatpush2.msra.mxu0 0.0
      %2951 = vmatprep.subr.mxu0 0.0
      %2952 = vmatpush2.msra.mxu0 0.0
      %2953 = vmatprep.mubr.f32.mxu0 0.0
      %2954 = vmatmul.mubr.f32.gmra.mxu0 %v2887
      %v2955 = vpop.f32.mrf.mxu0
      %v2956 = vadd.f32 0.0, %v2955
      %v2957 = vpop.f32.mrf.mxu0
      %2958 = vdwg.mxu0
      %2959 = vrot.lane.b32.xlu0 %v548, 48
      %v2960 = vpop.permute.xlu0 %2959
      %v2963 = vsel %vm1380, %v2801, 0
      %2965 = vmatprep.subr.mxu0 0.0
      %2966 = vmatpush1.msra.mxu0 0.0
      %2967 = vmatprep.subr.mxu0 0.0
      %2968 = vmatpush1.msra.mxu0 0.0
      %2969 = vmatprep.subr.mxu0 0.0
      %2970 = vmatpush1.msra.mxu0 0.0
      %2971 = vmatprep.subr.mxu0 0.0
      %2972 = vmatpush1.msra.mxu0 0.0
      %2973 = vmatprep.subr.mxu0 0.0
      %2974 = vmatpush1.msra.mxu0 0.0
      %2975 = vmatprep.subr.mxu0 0.0
      %2976 = vmatpush1.msra.mxu0 0.0
      %2977 = vmatprep.subr.mxu0 0.0
      %2978 = vmatpush1.msra.mxu0 0.0
      %2979 = vmatprep.subr.mxu0 0.0
      %2980 = vmatpush1.msra.mxu0 0.0
      %2981 = vmatprep.subr.mxu0 0.0
      %2982 = vmatpush1.msra.mxu0 0.0
      %2983 = vmatprep.subr.mxu0 0.0
      %2984 = vmatpush1.msra.mxu0 0.0
      %2985 = vmatprep.subr.mxu0 0.0
      %2986 = vmatpush1.msra.mxu0 0.0
      %2987 = vmatprep.subr.mxu0 0.0
      %2988 = vmatpush1.msra.mxu0 0.0
      %2989 = vmatprep.subr.mxu0 0.0
      %2990 = vmatpush1.msra.mxu0 0.0
      %2991 = vmatprep.subr.mxu0 0.0
      %2992 = vmatpush1.msra.mxu0 0.0
      %2993 = vmatprep.subr.mxu0 0.0
      %2994 = vmatpush1.msra.mxu0 0.0
      %2995 = vmatprep.subr.mxu0 0.0
      %2996 = vmatpush1.msra.mxu0 %v2960
      %2997 = vmatprep.subr.mxu0 0.0
      %2998 = vmatpush2.msra.mxu0 0.0
      %2999 = vmatprep.subr.mxu0 0.0
      %3000 = vmatpush2.msra.mxu0 0.0
      %3001 = vmatprep.subr.mxu0 0.0
      %3002 = vmatpush2.msra.mxu0 0.0
      %3003 = vmatprep.subr.mxu0 0.0
      %3004 = vmatpush2.msra.mxu0 0.0
      %3005 = vmatprep.subr.mxu0 0.0
      %3006 = vmatpush2.msra.mxu0 0.0
      %3007 = vmatprep.subr.mxu0 0.0
      %3008 = vmatpush2.msra.mxu0 0.0
      %3009 = vmatprep.subr.mxu0 0.0
      %3010 = vmatpush2.msra.mxu0 0.0
      %3011 = vmatprep.subr.mxu0 0.0
      %3012 = vmatpush2.msra.mxu0 0.0
      %3013 = vmatprep.subr.mxu0 0.0
      %3014 = vmatpush2.msra.mxu0 0.0
      %3015 = vmatprep.subr.mxu0 0.0
      %3016 = vmatpush2.msra.mxu0 0.0
      %3017 = vmatprep.subr.mxu0 0.0
      %3018 = vmatpush2.msra.mxu0 0.0
      %3019 = vmatprep.subr.mxu0 0.0
      %3020 = vmatpush2.msra.mxu0 0.0
      %3021 = vmatprep.subr.mxu0 0.0
      %3022 = vmatpush2.msra.mxu0 0.0
      %3023 = vmatprep.subr.mxu0 0.0
      %3024 = vmatpush2.msra.mxu0 0.0
      %3025 = vmatprep.subr.mxu0 0.0
      %3026 = vmatpush2.msra.mxu0 0.0
      %3027 = vmatprep.subr.mxu0 0.0
      %3028 = vmatpush2.msra.mxu0 0.0
      %3029 = vmatprep.mubr.f32.mxu0 0.0
      %3030 = vmatmul.mubr.f32.gmra.mxu0 %v2963
      %v3031 = vpop.f32.mrf.mxu0
      %v3032 = vadd.f32 0.0, %v3031
      %v3033 = vpop.f32.mrf.mxu0
      %3034 = vdwg.mxu0
      %3035 = vrot.lane.b32.xlu0 %v553, 48
      %v3036 = vpop.permute.xlu0 %3035
      %v3039 = vsel %vm1380, %v2802, 0
      %3041 = vmatprep.subr.mxu0 0.0
      %3042 = vmatpush1.msra.mxu0 0.0
      %3043 = vmatprep.subr.mxu0 0.0
      %3044 = vmatpush1.msra.mxu0 0.0
      %3045 = vmatprep.subr.mxu0 0.0
      %3046 = vmatpush1.msra.mxu0 0.0
      %3047 = vmatprep.subr.mxu0 0.0
      %3048 = vmatpush1.msra.mxu0 0.0
      %3049 = vmatprep.subr.mxu0 0.0
      %3050 = vmatpush1.msra.mxu0 0.0
      %3051 = vmatprep.subr.mxu0 0.0
      %3052 = vmatpush1.msra.mxu0 0.0
      %3053 = vmatprep.subr.mxu0 0.0
      %3054 = vmatpush1.msra.mxu0 0.0
      %3055 = vmatprep.subr.mxu0 0.0
      %3056 = vmatpush1.msra.mxu0 0.0
      %3057 = vmatprep.subr.mxu0 0.0
      %3058 = vmatpush1.msra.mxu0 0.0
      %3059 = vmatprep.subr.mxu0 0.0
      %3060 = vmatpush1.msra.mxu0 0.0
      %3061 = vmatprep.subr.mxu0 0.0
      %3062 = vmatpush1.msra.mxu0 0.0
      %3063 = vmatprep.subr.mxu0 0.0
      %3064 = vmatpush1.msra.mxu0 0.0
      %3065 = vmatprep.subr.mxu0 0.0
      %3066 = vmatpush1.msra.mxu0 0.0
      %3067 = vmatprep.subr.mxu0 0.0
      %3068 = vmatpush1.msra.mxu0 0.0
      %3069 = vmatprep.subr.mxu0 0.0
      %3070 = vmatpush1.msra.mxu0 0.0
      %3071 = vmatprep.subr.mxu0 0.0
      %3072 = vmatpush1.msra.mxu0 %v3036
      %3073 = vmatprep.subr.mxu0 0.0
      %3074 = vmatpush2.msra.mxu0 0.0
      %3075 = vmatprep.subr.mxu0 0.0
      %3076 = vmatpush2.msra.mxu0 0.0
      %3077 = vmatprep.subr.mxu0 0.0
      %3078 = vmatpush2.msra.mxu0 0.0
      %3079 = vmatprep.subr.mxu0 0.0
      %3080 = vmatpush2.msra.mxu0 0.0
      %3081 = vmatprep.subr.mxu0 0.0
      %3082 = vmatpush2.msra.mxu0 0.0
      %3083 = vmatprep.subr.mxu0 0.0
      %3084 = vmatpush2.msra.mxu0 0.0
      %3085 = vmatprep.subr.mxu0 0.0
      %3086 = vmatpush2.msra.mxu0 0.0
      %3087 = vmatprep.subr.mxu0 0.0
      %3088 = vmatpush2.msra.mxu0 0.0
      %3089 = vmatprep.subr.mxu0 0.0
      %3090 = vmatpush2.msra.mxu0 0.0
      %3091 = vmatprep.subr.mxu0 0.0
      %3092 = vmatpush2.msra.mxu0 0.0
      %3093 = vmatprep.subr.mxu0 0.0
      %3094 = vmatpush2.msra.mxu0 0.0
      %3095 = vmatprep.subr.mxu0 0.0
      %3096 = vmatpush2.msra.mxu0 0.0
      %3097 = vmatprep.subr.mxu0 0.0
      %3098 = vmatpush2.msra.mxu0 0.0
      %3099 = vmatprep.subr.mxu0 0.0
      %3100 = vmatpush2.msra.mxu0 0.0
      %3101 = vmatprep.subr.mxu0 0.0
      %3102 = vmatpush2.msra.mxu0 0.0
      %3103 = vmatprep.subr.mxu0 0.0
      %3104 = vmatpush2.msra.mxu0 0.0
      %3105 = vmatprep.mubr.f32.mxu0 0.0
      %3106 = vmatmul.mubr.f32.gmra.mxu0 %v3039
      %v3107 = vpop.f32.mrf.mxu0
      %v3108 = vadd.f32 0.0, %v3107
      %v3109 = vpop.f32.mrf.mxu0
      %3110 = vdwg.mxu0
      %3111 = vrot.lane.b32.xlu0 %v558, 48
      %v3112 = vpop.permute.xlu0 %3111
      %v3115 = vsel %vm1380, %v2803, 0
      %3117 = vmatprep.subr.mxu0 0.0
      %3118 = vmatpush1.msra.mxu0 0.0
      %3119 = vmatprep.subr.mxu0 0.0
      %3120 = vmatpush1.msra.mxu0 0.0
      %3121 = vmatprep.subr.mxu0 0.0
      %3122 = vmatpush1.msra.mxu0 0.0
      %3123 = vmatprep.subr.mxu0 0.0
      %3124 = vmatpush1.msra.mxu0 0.0
      %3125 = vmatprep.subr.mxu0 0.0
      %3126 = vmatpush1.msra.mxu0 0.0
      %3127 = vmatprep.subr.mxu0 0.0
      %3128 = vmatpush1.msra.mxu0 0.0
      %3129 = vmatprep.subr.mxu0 0.0
      %3130 = vmatpush1.msra.mxu0 0.0
      %3131 = vmatprep.subr.mxu0 0.0
      %3132 = vmatpush1.msra.mxu0 0.0
      %3133 = vmatprep.subr.mxu0 0.0
      %3134 = vmatpush1.msra.mxu0 0.0
      %3135 = vmatprep.subr.mxu0 0.0
      %3136 = vmatpush1.msra.mxu0 0.0
      %3137 = vmatprep.subr.mxu0 0.0
      %3138 = vmatpush1.msra.mxu0 0.0
      %3139 = vmatprep.subr.mxu0 0.0
      %3140 = vmatpush1.msra.mxu0 0.0
      %3141 = vmatprep.subr.mxu0 0.0
      %3142 = vmatpush1.msra.mxu0 0.0
      %3143 = vmatprep.subr.mxu0 0.0
      %3144 = vmatpush1.msra.mxu0 0.0
      %3145 = vmatprep.subr.mxu0 0.0
      %3146 = vmatpush1.msra.mxu0 0.0
      %3147 = vmatprep.subr.mxu0 0.0
      %3148 = vmatpush1.msra.mxu0 %v3112
      %3149 = vmatprep.subr.mxu0 0.0
      %3150 = vmatpush2.msra.mxu0 0.0
      %3151 = vmatprep.subr.mxu0 0.0
      %3152 = vmatpush2.msra.mxu0 0.0
      %3153 = vmatprep.subr.mxu0 0.0
      %3154 = vmatpush2.msra.mxu0 0.0
      %3155 = vmatprep.subr.mxu0 0.0
      %3156 = vmatpush2.msra.mxu0 0.0
      %3157 = vmatprep.subr.mxu0 0.0
      %3158 = vmatpush2.msra.mxu0 0.0
      %3159 = vmatprep.subr.mxu0 0.0
      %3160 = vmatpush2.msra.mxu0 0.0
      %3161 = vmatprep.subr.mxu0 0.0
      %3162 = vmatpush2.msra.mxu0 0.0
      %3163 = vmatprep.subr.mxu0 0.0
      %3164 = vmatpush2.msra.mxu0 0.0
      %3165 = vmatprep.subr.mxu0 0.0
      %3166 = vmatpush2.msra.mxu0 0.0
      %3167 = vmatprep.subr.mxu0 0.0
      %3168 = vmatpush2.msra.mxu0 0.0
      %3169 = vmatprep.subr.mxu0 0.0
      %3170 = vmatpush2.msra.mxu0 0.0
      %3171 = vmatprep.subr.mxu0 0.0
      %3172 = vmatpush2.msra.mxu0 0.0
      %3173 = vmatprep.subr.mxu0 0.0
      %3174 = vmatpush2.msra.mxu0 0.0
      %3175 = vmatprep.subr.mxu0 0.0
      %3176 = vmatpush2.msra.mxu0 0.0
      %3177 = vmatprep.subr.mxu0 0.0
      %3178 = vmatpush2.msra.mxu0 0.0
      %3179 = vmatprep.subr.mxu0 0.0
      %3180 = vmatpush2.msra.mxu0 0.0
      %3181 = vmatprep.mubr.f32.mxu0 0.0
      %3182 = vmatmul.mubr.f32.gmra.mxu0 %v3115
      %v3183 = vpop.f32.mrf.mxu0
      %v3184 = vadd.f32 0.0, %v3183
      %v3185 = vpop.f32.mrf.mxu0
      %3186 = vdwg.mxu0
      %3187 = vrot.lane.b32.xlu0 %v563, 48
      %v3188 = vpop.permute.xlu0 %3187
      %v3191 = vsel %vm1380, %v2804, 0
      %3193 = vmatprep.subr.mxu0 0.0
      %3194 = vmatpush1.msra.mxu0 0.0
      %3195 = vmatprep.subr.mxu0 0.0
      %3196 = vmatpush1.msra.mxu0 0.0
      %3197 = vmatprep.subr.mxu0 0.0
      %3198 = vmatpush1.msra.mxu0 0.0
      %3199 = vmatprep.subr.mxu0 0.0
      %3200 = vmatpush1.msra.mxu0 0.0
      %3201 = vmatprep.subr.mxu0 0.0
      %3202 = vmatpush1.msra.mxu0 0.0
      %3203 = vmatprep.subr.mxu0 0.0
      %3204 = vmatpush1.msra.mxu0 0.0
      %3205 = vmatprep.subr.mxu0 0.0
      %3206 = vmatpush1.msra.mxu0 0.0
      %3207 = vmatprep.subr.mxu0 0.0
      %3208 = vmatpush1.msra.mxu0 0.0
      %3209 = vmatprep.subr.mxu0 0.0
      %3210 = vmatpush1.msra.mxu0 0.0
      %3211 = vmatprep.subr.mxu0 0.0
      %3212 = vmatpush1.msra.mxu0 0.0
      %3213 = vmatprep.subr.mxu0 0.0
      %3214 = vmatpush1.msra.mxu0 0.0
      %3215 = vmatprep.subr.mxu0 0.0
      %3216 = vmatpush1.msra.mxu0 0.0
      %3217 = vmatprep.subr.mxu0 0.0
      %3218 = vmatpush1.msra.mxu0 0.0
      %3219 = vmatprep.subr.mxu0 0.0
      %3220 = vmatpush1.msra.mxu0 0.0
      %3221 = vmatprep.subr.mxu0 0.0
      %3222 = vmatpush1.msra.mxu0 0.0
      %3223 = vmatprep.subr.mxu0 0.0
      %3224 = vmatpush1.msra.mxu0 %v3188
      %3225 = vmatprep.subr.mxu0 0.0
      %3226 = vmatpush2.msra.mxu0 0.0
      %3227 = vmatprep.subr.mxu0 0.0
      %3228 = vmatpush2.msra.mxu0 0.0
      %3229 = vmatprep.subr.mxu0 0.0
      %3230 = vmatpush2.msra.mxu0 0.0
      %3231 = vmatprep.subr.mxu0 0.0
      %3232 = vmatpush2.msra.mxu0 0.0
      %3233 = vmatprep.subr.mxu0 0.0
      %3234 = vmatpush2.msra.mxu0 0.0
      %3235 = vmatprep.subr.mxu0 0.0
      %3236 = vmatpush2.msra.mxu0 0.0
      %3237 = vmatprep.subr.mxu0 0.0
      %3238 = vmatpush2.msra.mxu0 0.0
      %3239 = vmatprep.subr.mxu0 0.0
      %3240 = vmatpush2.msra.mxu0 0.0
      %3241 = vmatprep.subr.mxu0 0.0
      %3242 = vmatpush2.msra.mxu0 0.0
      %3243 = vmatprep.subr.mxu0 0.0
      %3244 = vmatpush2.msra.mxu0 0.0
      %3245 = vmatprep.subr.mxu0 0.0
      %3246 = vmatpush2.msra.mxu0 0.0
      %3247 = vmatprep.subr.mxu0 0.0
      %3248 = vmatpush2.msra.mxu0 0.0
      %3249 = vmatprep.subr.mxu0 0.0
      %3250 = vmatpush2.msra.mxu0 0.0
      %3251 = vmatprep.subr.mxu0 0.0
      %3252 = vmatpush2.msra.mxu0 0.0
      %3253 = vmatprep.subr.mxu0 0.0
      %3254 = vmatpush2.msra.mxu0 0.0
      %3255 = vmatprep.subr.mxu0 0.0
      %3256 = vmatpush2.msra.mxu0 0.0
      %3257 = vmatprep.mubr.f32.mxu0 0.0
      %3258 = vmatmul.mubr.f32.gmra.mxu0 %v3191
      %v3259 = vpop.f32.mrf.mxu0
      %v3260 = vadd.f32 0.0, %v3259
      %v3261 = vpop.f32.mrf.mxu0
      %3262 = vdwg.mxu0
      %3263 = vrot.lane.b32.xlu0 %v568, 48
      %v3264 = vpop.permute.xlu0 %3263
      %v3267 = vsel %vm1380, %v2805, 0
      %3269 = vmatprep.subr.mxu0 0.0
      %3270 = vmatpush1.msra.mxu0 0.0
      %3271 = vmatprep.subr.mxu0 0.0
      %3272 = vmatpush1.msra.mxu0 0.0
      %3273 = vmatprep.subr.mxu0 0.0
      %3274 = vmatpush1.msra.mxu0 0.0
      %3275 = vmatprep.subr.mxu0 0.0
      %3276 = vmatpush1.msra.mxu0 0.0
      %3277 = vmatprep.subr.mxu0 0.0
      %3278 = vmatpush1.msra.mxu0 0.0
      %3279 = vmatprep.subr.mxu0 0.0
      %3280 = vmatpush1.msra.mxu0 0.0
      %3281 = vmatprep.subr.mxu0 0.0
      %3282 = vmatpush1.msra.mxu0 0.0
      %3283 = vmatprep.subr.mxu0 0.0
      %3284 = vmatpush1.msra.mxu0 0.0
      %3285 = vmatprep.subr.mxu0 0.0
      %3286 = vmatpush1.msra.mxu0 0.0
      %3287 = vmatprep.subr.mxu0 0.0
      %3288 = vmatpush1.msra.mxu0 0.0
      %3289 = vmatprep.subr.mxu0 0.0
      %3290 = vmatpush1.msra.mxu0 0.0
      %3291 = vmatprep.subr.mxu0 0.0
      %3292 = vmatpush1.msra.mxu0 0.0
      %3293 = vmatprep.subr.mxu0 0.0
      %3294 = vmatpush1.msra.mxu0 0.0
      %3295 = vmatprep.subr.mxu0 0.0
      %3296 = vmatpush1.msra.mxu0 0.0
      %3297 = vmatprep.subr.mxu0 0.0
      %3298 = vmatpush1.msra.mxu0 0.0
      %3299 = vmatprep.subr.mxu0 0.0
      %3300 = vmatpush1.msra.mxu0 %v3264
      %3301 = vmatprep.subr.mxu0 0.0
      %3302 = vmatpush2.msra.mxu0 0.0
      %3303 = vmatprep.subr.mxu0 0.0
      %3304 = vmatpush2.msra.mxu0 0.0
      %3305 = vmatprep.subr.mxu0 0.0
      %3306 = vmatpush2.msra.mxu0 0.0
      %3307 = vmatprep.subr.mxu0 0.0
      %3308 = vmatpush2.msra.mxu0 0.0
      %3309 = vmatprep.subr.mxu0 0.0
      %3310 = vmatpush2.msra.mxu0 0.0
      %3311 = vmatprep.subr.mxu0 0.0
      %3312 = vmatpush2.msra.mxu0 0.0
      %3313 = vmatprep.subr.mxu0 0.0
      %3314 = vmatpush2.msra.mxu0 0.0
      %3315 = vmatprep.subr.mxu0 0.0
      %3316 = vmatpush2.msra.mxu0 0.0
      %3317 = vmatprep.subr.mxu0 0.0
      %3318 = vmatpush2.msra.mxu0 0.0
      %3319 = vmatprep.subr.mxu0 0.0
      %3320 = vmatpush2.msra.mxu0 0.0
      %3321 = vmatprep.subr.mxu0 0.0
      %3322 = vmatpush2.msra.mxu0 0.0
      %3323 = vmatprep.subr.mxu0 0.0
      %3324 = vmatpush2.msra.mxu0 0.0
      %3325 = vmatprep.subr.mxu0 0.0
      %3326 = vmatpush2.msra.mxu0 0.0
      %3327 = vmatprep.subr.mxu0 0.0
      %3328 = vmatpush2.msra.mxu0 0.0
      %3329 = vmatprep.subr.mxu0 0.0
      %3330 = vmatpush2.msra.mxu0 0.0
      %3331 = vmatprep.subr.mxu0 0.0
      %3332 = vmatpush2.msra.mxu0 0.0
      %3333 = vmatprep.mubr.f32.mxu0 0.0
      %3334 = vmatmul.mubr.f32.gmra.mxu0 %v3267
      %v3335 = vpop.f32.mrf.mxu0
      %v3336 = vadd.f32 0.0, %v3335
      %v3337 = vpop.f32.mrf.mxu0
      %3338 = vdwg.mxu0
      %3339 = vrot.lane.b32.xlu0 %v573, 48
      %v3340 = vpop.permute.xlu0 %3339
      %v3343 = vsel %vm1380, %v2806, 0
      %3345 = vmatprep.subr.mxu0 0.0
      %3346 = vmatpush1.msra.mxu0 0.0
      %3347 = vmatprep.subr.mxu0 0.0
      %3348 = vmatpush1.msra.mxu0 0.0
      %3349 = vmatprep.subr.mxu0 0.0
      %3350 = vmatpush1.msra.mxu0 0.0
      %3351 = vmatprep.subr.mxu0 0.0
      %3352 = vmatpush1.msra.mxu0 0.0
      %3353 = vmatprep.subr.mxu0 0.0
      %3354 = vmatpush1.msra.mxu0 0.0
      %3355 = vmatprep.subr.mxu0 0.0
      %3356 = vmatpush1.msra.mxu0 0.0
      %3357 = vmatprep.subr.mxu0 0.0
      %3358 = vmatpush1.msra.mxu0 0.0
      %3359 = vmatprep.subr.mxu0 0.0
      %3360 = vmatpush1.msra.mxu0 0.0
      %3361 = vmatprep.subr.mxu0 0.0
      %3362 = vmatpush1.msra.mxu0 0.0
      %3363 = vmatprep.subr.mxu0 0.0
      %3364 = vmatpush1.msra.mxu0 0.0
      %3365 = vmatprep.subr.mxu0 0.0
      %3366 = vmatpush1.msra.mxu0 0.0
      %3367 = vmatprep.subr.mxu0 0.0
      %3368 = vmatpush1.msra.mxu0 0.0
      %3369 = vmatprep.subr.mxu0 0.0
      %3370 = vmatpush1.msra.mxu0 0.0
      %3371 = vmatprep.subr.mxu0 0.0
      %3372 = vmatpush1.msra.mxu0 0.0
      %3373 = vmatprep.subr.mxu0 0.0
      %3374 = vmatpush1.msra.mxu0 0.0
      %3375 = vmatprep.subr.mxu0 0.0
      %3376 = vmatpush1.msra.mxu0 %v3340
      %3377 = vmatprep.subr.mxu0 0.0
      %3378 = vmatpush2.msra.mxu0 0.0
      %3379 = vmatprep.subr.mxu0 0.0
      %3380 = vmatpush2.msra.mxu0 0.0
      %3381 = vmatprep.subr.mxu0 0.0
      %3382 = vmatpush2.msra.mxu0 0.0
      %3383 = vmatprep.subr.mxu0 0.0
      %3384 = vmatpush2.msra.mxu0 0.0
      %3385 = vmatprep.subr.mxu0 0.0
      %3386 = vmatpush2.msra.mxu0 0.0
      %3387 = vmatprep.subr.mxu0 0.0
      %3388 = vmatpush2.msra.mxu0 0.0
      %3389 = vmatprep.subr.mxu0 0.0
      %3390 = vmatpush2.msra.mxu0 0.0
      %3391 = vmatprep.subr.mxu0 0.0
      %3392 = vmatpush2.msra.mxu0 0.0
      %3393 = vmatprep.subr.mxu0 0.0
      %3394 = vmatpush2.msra.mxu0 0.0
      %3395 = vmatprep.subr.mxu0 0.0
      %3396 = vmatpush2.msra.mxu0 0.0
      %3397 = vmatprep.subr.mxu0 0.0
      %3398 = vmatpush2.msra.mxu0 0.0
      %3399 = vmatprep.subr.mxu0 0.0
      %3400 = vmatpush2.msra.mxu0 0.0
      %3401 = vmatprep.subr.mxu0 0.0
      %3402 = vmatpush2.msra.mxu0 0.0
      %3403 = vmatprep.subr.mxu0 0.0
      %3404 = vmatpush2.msra.mxu0 0.0
      %3405 = vmatprep.subr.mxu0 0.0
      %3406 = vmatpush2.msra.mxu0 0.0
      %3407 = vmatprep.subr.mxu0 0.0
      %3408 = vmatpush2.msra.mxu0 0.0
      %3409 = vmatprep.mubr.f32.mxu0 0.0
      %3410 = vmatmul.mubr.f32.gmra.mxu0 %v3343
      %v3411 = vpop.f32.mrf.mxu0
      %v3412 = vadd.f32 0.0, %v3411
      %v3413 = vpop.f32.mrf.mxu0
      %3414 = vdwg.mxu0
      %v3415 = vld [vmem:[%s5 + $0x10] sm:$0xff]
      %v3416 = vld [vmem:[%s5 + $0x18] sm:$0xff]
      %v3418 = vsel %vm750, %v2880, 0
      %v3421 = vsel %vm750, %v2956, 0
      %v3424 = vsel %vm750, %v3032, 0
      %v3427 = vsel %vm750, %v3108, 0
      %v3430 = vsel %vm750, %v3184, 0
      %v3433 = vsel %vm750, %v3260, 0
      %v3436 = vsel %vm750, %v3336, 0
      %v3439 = vsel %vm750, %v3412, 0
      %3441 = vmatprep.subr.mxu0 0.0
      %3442 = vmatpush1.msra.mxu0 0.0
      %3443 = vmatprep.subr.mxu0 0.0
      %3444 = vmatpush1.msra.mxu0 0.0
      %3445 = vmatprep.subr.mxu0 0.0
      %3446 = vmatpush1.msra.mxu0 0.0
      %3447 = vmatprep.subr.mxu0 0.0
      %3448 = vmatpush1.msra.mxu0 0.0
      %3449 = vmatprep.subr.mxu0 0.0
      %3450 = vmatpush1.msra.mxu0 0.0
      %3451 = vmatprep.subr.mxu0 0.0
      %3452 = vmatpush1.msra.mxu0 0.0
      %3453 = vmatprep.subr.mxu0 0.0
      %3454 = vmatpush1.msra.mxu0 0.0
      %3455 = vmatprep.subr.mxu0 0.0
      %3456 = vmatpush1.msra.mxu0 0.0
      %3457 = vmatprep.subr.mxu0 0.0
      %3458 = vmatpush1.msra.mxu0 0.0
      %3459 = vmatprep.subr.mxu0 0.0
      %3460 = vmatpush1.msra.mxu0 0.0
      %3461 = vmatprep.subr.mxu0 0.0
      %3462 = vmatpush1.msra.mxu0 0.0
      %3463 = vmatprep.subr.mxu0 0.0
      %3464 = vmatpush1.msra.mxu0 0.0
      %3465 = vmatprep.subr.mxu0 0.0
      %3466 = vmatpush1.msra.mxu0 0.0
      %3467 = vmatprep.subr.mxu0 0.0
      %3468 = vmatpush1.msra.mxu0 0.0
      %3469 = vmatprep.subr.mxu0 0.0
      %3470 = vmatpush1.msra.mxu0 %v3416
      %3471 = vmatprep.subr.mxu0 0.0
      %3472 = vmatpush1.msra.mxu0 %v3415
      %3473 = vmatprep.subr.mxu0 0.0
      %3474 = vmatpush2.msra.mxu0 0.0
      %3475 = vmatprep.subr.mxu0 0.0
      %3476 = vmatpush2.msra.mxu0 0.0
      %3477 = vmatprep.subr.mxu0 0.0
      %3478 = vmatpush2.msra.mxu0 0.0
      %3479 = vmatprep.subr.mxu0 0.0
      %3480 = vmatpush2.msra.mxu0 0.0
      %3481 = vmatprep.subr.mxu0 0.0
      %3482 = vmatpush2.msra.mxu0 0.0
      %3483 = vmatprep.subr.mxu0 0.0
      %3484 = vmatpush2.msra.mxu0 0.0
      %3485 = vmatprep.subr.mxu0 0.0
      %3486 = vmatpush2.msra.mxu0 0.0
      %3487 = vmatprep.subr.mxu0 0.0
      %3488 = vmatpush2.msra.mxu0 0.0
      %3489 = vmatprep.subr.mxu0 0.0
      %3490 = vmatpush2.msra.mxu0 0.0
      %3491 = vmatprep.subr.mxu0 0.0
      %3492 = vmatpush2.msra.mxu0 0.0
      %3493 = vmatprep.subr.mxu0 0.0
      %3494 = vmatpush2.msra.mxu0 0.0
      %3495 = vmatprep.subr.mxu0 0.0
      %3496 = vmatpush2.msra.mxu0 0.0
      %3497 = vmatprep.subr.mxu0 0.0
      %3498 = vmatpush2.msra.mxu0 0.0
      %3499 = vmatprep.subr.mxu0 0.0
      %3500 = vmatpush2.msra.mxu0 0.0
      %3501 = vmatprep.subr.mxu0 0.0
      %3502 = vmatpush2.msra.mxu0 0.0
      %3503 = vmatprep.subr.mxu0 0.0
      %3504 = vmatpush2.msra.mxu0 0.0
      %3505 = vmatprep.mubr.f32.mxu0 0.0
      %3506 = vmatmul.mubr.f32.gmra.mxu0 %v3418
      %v3507 = vpop.f32.mrf.mxu0
      %v3508 = vadd.f32 0.0, %v3507
      %v3509 = vpop.f32.mrf.mxu0
      %3510 = vmatprep.mubr.f32.mxu0 0.0
      %3511 = vmatmul.mubr.f32.gmra.mxu0 %v3421
      %v3512 = vpop.f32.mrf.mxu0
      %v3513 = vadd.f32 0.0, %v3512
      %v3514 = vpop.f32.mrf.mxu0
      %3515 = vmatprep.mubr.f32.mxu0 0.0
      %3516 = vmatmul.mubr.f32.gmra.mxu0 %v3424
      %v3517 = vpop.f32.mrf.mxu0
      %v3518 = vadd.f32 0.0, %v3517
      %v3519 = vpop.f32.mrf.mxu0
      %3520 = vmatprep.mubr.f32.mxu0 0.0
      %3521 = vmatmul.mubr.f32.gmra.mxu0 %v3427
      %v3522 = vpop.f32.mrf.mxu0
      %v3523 = vadd.f32 0.0, %v3522
      %v3524 = vpop.f32.mrf.mxu0
      %3525 = vmatprep.mubr.f32.mxu0 0.0
      %3526 = vmatmul.mubr.f32.gmra.mxu0 %v3430
      %v3527 = vpop.f32.mrf.mxu0
      %v3528 = vadd.f32 0.0, %v3527
      %v3529 = vpop.f32.mrf.mxu0
      %3530 = vmatprep.mubr.f32.mxu0 0.0
      %3531 = vmatmul.mubr.f32.gmra.mxu0 %v3433
      %v3532 = vpop.f32.mrf.mxu0
      %v3533 = vadd.f32 0.0, %v3532
      %v3534 = vpop.f32.mrf.mxu0
      %3535 = vmatprep.mubr.f32.mxu0 0.0
      %3536 = vmatmul.mubr.f32.gmra.mxu0 %v3436
      %v3537 = vpop.f32.mrf.mxu0
      %v3538 = vadd.f32 0.0, %v3537
      %v3539 = vpop.f32.mrf.mxu0
      %3540 = vmatprep.mubr.f32.mxu0 0.0
      %3541 = vmatmul.mubr.f32.gmra.mxu0 %v3439
      %v3542 = vpop.f32.mrf.mxu0
      %v3543 = vadd.f32 0.0, %v3542
      %v3544 = vpop.f32.mrf.mxu0
      %3545 = vdwg.mxu0
      %v3547 = vsel %vm750, %v1542, 0
      %v3550 = vsel %vm750, %v1618, 0
      %v3553 = vsel %vm750, %v1694, 0
      %v3556 = vsel %vm750, %v1770, 0
      %v3559 = vsel %vm750, %v1846, 0
      %v3562 = vsel %vm750, %v1922, 0
      %v3565 = vsel %vm750, %v1998, 0
      %v3568 = vsel %vm750, %v2074, 0
      %3570 = vmatprep.subr.mxu0 0.0
      %3571 = vmatpush1.msra.mxu0 0.0
      %3572 = vmatprep.subr.mxu0 0.0
      %3573 = vmatpush1.msra.mxu0 0.0
      %3574 = vmatprep.subr.mxu0 0.0
      %3575 = vmatpush1.msra.mxu0 0.0
      %3576 = vmatprep.subr.mxu0 0.0
      %3577 = vmatpush1.msra.mxu0 0.0
      %3578 = vmatprep.subr.mxu0 0.0
      %3579 = vmatpush1.msra.mxu0 0.0
      %3580 = vmatprep.subr.mxu0 0.0
      %3581 = vmatpush1.msra.mxu0 0.0
      %3582 = vmatprep.subr.mxu0 0.0
      %3583 = vmatpush1.msra.mxu0 0.0
      %3584 = vmatprep.subr.mxu0 0.0
      %3585 = vmatpush1.msra.mxu0 0.0
      %3586 = vmatprep.subr.mxu0 0.0
      %3587 = vmatpush1.msra.mxu0 0.0
      %3588 = vmatprep.subr.mxu0 0.0
      %3589 = vmatpush1.msra.mxu0 0.0
      %3590 = vmatprep.subr.mxu0 0.0
      %3591 = vmatpush1.msra.mxu0 0.0
      %3592 = vmatprep.subr.mxu0 0.0
      %3593 = vmatpush1.msra.mxu0 0.0
      %3594 = vmatprep.subr.mxu0 0.0
      %3595 = vmatpush1.msra.mxu0 0.0
      %3596 = vmatprep.subr.mxu0 0.0
      %3597 = vmatpush1.msra.mxu0 0.0
      %3598 = vmatprep.subr.mxu0 0.0
      %3599 = vmatpush1.msra.mxu0 %v2078
      %3600 = vmatprep.subr.mxu0 0.0
      %3601 = vmatpush1.msra.mxu0 %v2077
      %3602 = vmatprep.subr.mxu0 0.0
      %3603 = vmatpush2.msra.mxu0 0.0
      %3604 = vmatprep.subr.mxu0 0.0
      %3605 = vmatpush2.msra.mxu0 0.0
      %3606 = vmatprep.subr.mxu0 0.0
      %3607 = vmatpush2.msra.mxu0 0.0
      %3608 = vmatprep.subr.mxu0 0.0
      %3609 = vmatpush2.msra.mxu0 0.0
      %3610 = vmatprep.subr.mxu0 0.0
      %3611 = vmatpush2.msra.mxu0 0.0
      %3612 = vmatprep.subr.mxu0 0.0
      %3613 = vmatpush2.msra.mxu0 0.0
      %3614 = vmatprep.subr.mxu0 0.0
      %3615 = vmatpush2.msra.mxu0 0.0
      %3616 = vmatprep.subr.mxu0 0.0
      %3617 = vmatpush2.msra.mxu0 0.0
      %3618 = vmatprep.subr.mxu0 0.0
      %3619 = vmatpush2.msra.mxu0 0.0
      %3620 = vmatprep.subr.mxu0 0.0
      %3621 = vmatpush2.msra.mxu0 0.0
      %3622 = vmatprep.subr.mxu0 0.0
      %3623 = vmatpush2.msra.mxu0 0.0
      %3624 = vmatprep.subr.mxu0 0.0
      %3625 = vmatpush2.msra.mxu0 0.0
      %3626 = vmatprep.subr.mxu0 0.0
      %3627 = vmatpush2.msra.mxu0 0.0
      %3628 = vmatprep.subr.mxu0 0.0
      %3629 = vmatpush2.msra.mxu0 0.0
      %3630 = vmatprep.subr.mxu0 0.0
      %3631 = vmatpush2.msra.mxu0 0.0
      %3632 = vmatprep.subr.mxu0 0.0
      %3633 = vmatpush2.msra.mxu0 0.0
      %3634 = vmatprep.mubr.f32.mxu0 0.0
      %3635 = vmatmul.mubr.f32.gmra.mxu0 %v3547
      %v3636 = vpop.f32.mrf.mxu0
      %v3637 = vadd.f32 %v3508, %v3636
      %v3638 = vpop.f32.mrf.mxu0
      %3639 = vmatprep.mubr.f32.mxu0 0.0
      %3640 = vmatmul.mubr.f32.gmra.mxu0 %v3550
      %v3641 = vpop.f32.mrf.mxu0
      %v3642 = vadd.f32 %v3513, %v3641
      %v3643 = vpop.f32.mrf.mxu0
      %3644 = vmatprep.mubr.f32.mxu0 0.0
      %3645 = vmatmul.mubr.f32.gmra.mxu0 %v3553
      %v3646 = vpop.f32.mrf.mxu0
      %v3647 = vadd.f32 %v3518, %v3646
      %v3648 = vpop.f32.mrf.mxu0
      %3649 = vmatprep.mubr.f32.mxu0 0.0
      %3650 = vmatmul.mubr.f32.gmra.mxu0 %v3556
      %v3651 = vpop.f32.mrf.mxu0
      %v3652 = vadd.f32 %v3523, %v3651
      %v3653 = vpop.f32.mrf.mxu0
      %3654 = vmatprep.mubr.f32.mxu0 0.0
      %3655 = vmatmul.mubr.f32.gmra.mxu0 %v3559
      %v3656 = vpop.f32.mrf.mxu0
      %v3657 = vadd.f32 %v3528, %v3656
      %v3658 = vpop.f32.mrf.mxu0
      %3659 = vmatprep.mubr.f32.mxu0 0.0
      %3660 = vmatmul.mubr.f32.gmra.mxu0 %v3562
      %v3661 = vpop.f32.mrf.mxu0
      %v3662 = vadd.f32 %v3533, %v3661
      %v3663 = vpop.f32.mrf.mxu0
      %3664 = vmatprep.mubr.f32.mxu0 0.0
      %3665 = vmatmul.mubr.f32.gmra.mxu0 %v3565
      %v3666 = vpop.f32.mrf.mxu0
      %v3667 = vadd.f32 %v3538, %v3666
      %v3668 = vpop.f32.mrf.mxu0
      %3669 = vmatprep.mubr.f32.mxu0 0.0
      %3670 = vmatmul.mubr.f32.gmra.mxu0 %v3568
      %v3671 = vpop.f32.mrf.mxu0
      %v3672 = vadd.f32 %v3543, %v3671
      %v3673 = vpop.f32.mrf.mxu0
      %3674 = vdwg.mxu0
      %v3675 = vld [vmem:[%s6] sm:$0x1]
      %v3677 = vlaneseq
      %v3678 = vshrl.u32 %v3677, 7
      %v3679 = vsub.s32 0, %v3678
      %v3680 = vrot.slane %v3675, %v3679
      %v3682 = vadd.f32 %v3637, %v3680
      %v3683 = vadd.f32 %v3642, %v3680
      %v3684 = vadd.f32 %v3647, %v3680
      %v3685 = vadd.f32 %v3652, %v3680
      %v3686 = vadd.f32 %v3657, %v3680
      %v3687 = vadd.f32 %v3662, %v3680
      %v3688 = vadd.f32 %v3667, %v3680
      %v3689 = vadd.f32 %v3672, %v3680
      %3690 = vst.msk [vmem:[%s297] sm:$0xff] %vm307, %v3682
      %3691 = vst.msk [vmem:[%s297 + $0x8] sm:$0xff] %vm307, %v3683
      %3692 = vst.msk [vmem:[%s297 + $0x10] sm:$0xff] %vm307, %v3684
      %3693 = vst.msk [vmem:[%s297 + $0x18] sm:$0xff] %vm307, %v3685
      %3694 = vst.msk [vmem:[%s297 + $0x20] sm:$0xff] %vm307, %v3686
      %3695 = vst.msk [vmem:[%s297 + $0x28] sm:$0xff] %vm307, %v3687
      %3696 = vst.msk [vmem:[%s297 + $0x30] sm:$0xff] %vm307, %v3688
      %3697 = vst.msk [vmem:[%s297 + $0x38] sm:$0xff] %vm307, %v3689
      %s3698 = smul.u32 8, %s18
      %p3699 = scmp.lt.s32.totalorder %s3698, 15
      %s3700 = scalar_select %p3699, %s3698, 15
      %s3701 = smul.addr %s3700, 8
      %s3702 = scalar_lea.vmem %s7, %s3701
      // Predicated region
      $region49: #{tpu_custom_call.1} parent=47 // pred_check
        %p3703 = pneg %p193
      $region50: #{tpu_custom_call.1} parent=47 // pred_check_branch
        %3705 = sbr.rel (%p3703) target = $region52
      $region51: #{tpu_custom_call.1} parent=47 // pred_region
        %s3706 = smul.u32 8, %s18
      $region52: #{tpu_custom_call.1} parent=47 // pred_fallthru
        _
    $region48: #{tpu_custom_call.1} parent=5 // pred_fallthru
      _
    %p3707 = scmp.le.s32.totalorder 2, %s13
    // Predicated region
    $region53: #{tpu_custom_call.1} parent=5 // pred_check
      %p3708 = pneg %p3707
    $region54: #{tpu_custom_call.1} parent=5 // pred_check_branch
      %3710 = sbr.rel (%p3708) target = $region56
    $region55: #{tpu_custom_call.1} parent=5 // pred_region
      %s3711 = ssub.s32 %s13, 2
      // Predicated region
      $region57: #{tpu_custom_call.1} parent=55 // pred_check
        %p3712 = pneg %p199
      $region58: #{tpu_custom_call.1} parent=55 // pred_check_branch
        %3714 = sbr.rel (%p3712) target = $region60
      $region59: #{tpu_custom_call.1} parent=55 // pred_region
        %s3715 = smul.u32 8, %s19
        %p3716 = scmp.lt.s32.totalorder %s3715, 15
        %s3717 = scalar_select %p3716, %s3715, 15
        %s3718 = smul.addr %s3717, 8
        %s3719 = scalar_lea.vmem %s7, %s3718
      $region60: #{tpu_custom_call.1} parent=55 // pred_fallthru
        _
    $region56: #{tpu_custom_call.1} parent=5 // pred_fallthru
      _
  $region6: #{tpu_custom_call.1} parent=0 // loop_footer
    %s17 = sadd.s32 1, %s13
  $region7: #{tpu_custom_call.1} parent=0 // loop_footer_branch
    %12 = sbr.rel target = $region3
  $region8: #{tpu_custom_call.1} parent=0 // loop_exit
    _

</llo_original>
